<compile_context>
chip_gen: v7x
topology: tpu7x:2x2x1
jax: 0.10.0
libtpu: 0.0.40
codegen_flags: <defaults>
</compile_context>

<pallas_src>
import functools

import numpy as np
import jax
import jax.numpy as jnp
from jax import lax
from jax.experimental import pallas as pl
from jax.experimental.pallas import tpu as pltpu


TILE_B = 8  # images processed per grid step


# ---------------------------------------------------------------------------
# Fused kernel: whole network for one batch tile.
# Row / lane layouts inside the kernel:
#   conv1 act a1 : rows = (n, y)  y in [0,24),  lanes = x*6  + c   (144 lanes)
#   pooled   m1  : rows = (n, y') y' in [0,12), lanes = (2x')*6 + c  (odd-x lanes dead)
#   conv2 act a2 : rows = (n, y2) y2 in [0,8),  lanes = x2*12 + c   (96 lanes)
#   fc acts      : rows = n, lanes = 128 / 64 / 128 (zero padded)
# ---------------------------------------------------------------------------
def _fused_net_kernel(x_ref,
                      t1_ref, b1_ref, r1_ref, pe1_ref, po1_ref,
                      sk2_ref, t2_ref, b2_ref, r2_ref,
                      se2_ref, f1_ref, fb1_ref,
                      f2_ref, fb2_ref, f3_ref, fb3_ref,
                      o_ref):
    f32 = jnp.float32
    tb = x_ref.shape[0]
    x = x_ref[...]                                           # (TB, 28, 28)

    # ---- conv1 (1->6, 5x5, valid) + ReLU: sum of 5 Toeplitz matmuls over ky ----
    acc1 = None
    for ky in range(5):
        xk = x[:, ky:ky + 24, :].reshape(tb * 24, 28)        # rows (n, y), lanes w_in
        term = jnp.dot(xk, t1_ref[ky], preferred_element_type=f32)   # (TB*24, 144)
        acc1 = term if acc1 is None else acc1 + term
    a1 = jnp.maximum(acc1 + b1_ref[...], 0.0)                # (TB*24, 144)

    # ---- maxpool 2x2 #1: x via lane-shift permutation matmul, y via row selectors
    a1 = jnp.maximum(a1, jnp.dot(a1, r1_ref[...], preferred_element_type=f32))
    m1 = jnp.maximum(jnp.dot(pe1_ref[...], a1, preferred_element_type=f32),
                     jnp.dot(po1_ref[...], a1, preferred_element_type=f32))
    # m1: (TB*12, 144); valid data on even-x lane groups only (dead lanes get zero
    # weight rows in t2 below).

    # ---- conv2 (6->12, 5x5, valid) + ReLU -------------------------------------
    acc2 = None
    for ky in range(5):
        rows = jnp.dot(sk2_ref[ky], m1, preferred_element_type=f32)      # (TB*8, 144)
        term = jnp.dot(rows, t2_ref[ky], preferred_element_type=f32)     # (TB*8, 96)
        acc2 = term if acc2 is None else acc2 + term
    a2 = jnp.maximum(acc2 + b2_ref[...], 0.0)                # (TB*8, 96)

    # ---- maxpool 2x2 #2 (x half via lane shift) -------------------------------
    a2 = jnp.maximum(a2, jnp.dot(a2, r2_ref[...], preferred_element_type=f32))

    # ---- maxpool #2 (y half) + flatten + fc1, folded together -----------------
    h = None
    for yp in range(4):
        ra = jnp.dot(se2_ref[2 * yp], a2, preferred_element_type=f32)      # (TB, 96)
        rb = jnp.dot(se2_ref[2 * yp + 1], a2, preferred_element_type=f32)  # (TB, 96)
        term = jnp.dot(jnp.maximum(ra, rb), f1_ref[yp],
                       preferred_element_type=f32)                         # (TB, 128)
        h = term if h is None else h + term
    h = jnp.maximum(h + fb1_ref[...], 0.0)                   # (TB, 128)

    # ---- fc2 + ReLU, out (lane-dense 128-wide store) ---------------------------
    h = jnp.maximum(jnp.dot(h, f2_ref[...], preferred_element_type=f32)
                    + fb2_ref[...], 0.0)                     # (TB, 64)
    o_ref[...] = jnp.dot(h, f3_ref[...], preferred_element_type=f32) + fb3_ref[...]


# ---------------------------------------------------------------------------
# Structural (weight-independent) 0/1 matrices: lane shifts, row selectors.
# ---------------------------------------------------------------------------
@functools.lru_cache(maxsize=None)
def _selection_constants(tb):
    # lane-shift permutations:  (a @ r1)[:, i] = a[:, i + 6]   (pool1 x direction)
    r1 = np.zeros((144, 144), np.float32)
    r1[np.arange(6, 144), np.arange(0, 138)] = 1.0
    #                        (a @ r2)[:, i] = a[:, i + 12]  (pool2 x direction)
    r2 = np.zeros((96, 96), np.float32)
    r2[np.arange(12, 96), np.arange(0, 84)] = 1.0

    # pool1 even/odd row selectors: out row (n, y') <- in rows (n, 2y') / (n, 2y'+1)
    rr = np.arange(tb * 12)
    nn, y1 = rr // 12, rr % 12
    pe1 = np.zeros((tb * 12, tb * 24), np.float32)
    po1 = np.zeros((tb * 12, tb * 24), np.float32)
    pe1[rr, nn * 24 + 2 * y1] = 1.0
    po1[rr, nn * 24 + 2 * y1 + 1] = 1.0

    # conv2 vertical-window selectors: out row (n, y2) <- pooled row (n, y2 + ky)
    sk2 = np.zeros((5, tb * 8, tb * 12), np.float32)
    r8 = np.arange(tb * 8)
    n8, y2 = r8 // 8, r8 % 8
    for ky in range(5):
        sk2[ky, r8, n8 * 12 + y2 + ky] = 1.0

    # pool2 row selectors: picks row (n, r) of each image, r in [0, 8)
    se2 = np.zeros((8, tb, tb * 8), np.float32)
    for r in range(8):
        se2[r, np.arange(tb), np.arange(tb) * 8 + r] = 1.0

    return (jnp.asarray(r1), jnp.asarray(r2), jnp.asarray(pe1), jnp.asarray(po1),
            jnp.asarray(sk2), jnp.asarray(se2))


# ---------------------------------------------------------------------------
# Weight preprocessing: PyTorch-layout params -> MXU-friendly kernel operands.
# (Exact rearrangements only: gathers / masks / pads, no arithmetic.)
# ---------------------------------------------------------------------------
def _prepare_operands(params, tb):
    f32 = jnp.float32
    w1 = params["conv1_w"].astype(f32)                 # (6, 1, 5, 5)
    b1 = params["conv1_b"].astype(f32)                 # (6,)
    w2 = params["conv2_w"].astype(f32)                 # (12, 6, 5, 5)
    b2 = params["conv2_b"].astype(f32)                 # (12,)

    # conv1 width-Toeplitz: t1[ky, w_in, x*6 + c] = w1[c, 0, ky, w_in - x]
    w1s = w1[:, 0]                                     # (c, ky, kx)
    w_idx = jnp.arange(28)[:, None]
    x_idx = jnp.arange(24)[None, :]
    kxm = w_idx - x_idx                                # (28, 24)
    valid1 = (kxm >= 0) & (kxm < 5)
    g1 = w1s[:, :, jnp.clip(kxm, 0, 4)]                # (c, ky, w, x)
    t1 = jnp.where(valid1[None, None], g1, 0.0)
    t1 = t1.transpose(1, 2, 3, 0).reshape(5, 28, 144)  # (ky, w_in, x*6+c)
    b1row = jnp.tile(b1, 24).reshape(1, 144)

    # conv2 width-Toeplitz over the *uncompacted* pooled lanes:
    #   t2[ky, x1*6 + ci, x2*12 + co] = w2[co, ci, ky, x1//2 - x2]   (x1 even only)
    w_idx = jnp.arange(24)[:, None]                    # x1 (uncompacted lane group)
    z_idx = jnp.arange(8)[None, :]                     # x2
    kxm = w_idx // 2 - z_idx                           # (24, 8)
    valid2 = (w_idx % 2 == 0) & (kxm >= 0) & (kxm < 5)
    g2 = w2[:, :, :, jnp.clip(kxm, 0, 4)]              # (co, ci, ky, x1, x2)
    t2 = jnp.where(valid2[None, None, None], g2, 0.0)
    t2 = t2.transpose(2, 3, 1, 4, 0).reshape(5, 144, 96)
    b2row = jnp.tile(b2, 8).reshape(1, 96)

    # fc1 folded over (yp, even-x2) with PyTorch (c, h, w) flatten order, out -> 128
    fc1w_p = jnp.zeros((192, 128), f32).at[:, :120].set(params["fc1_w"].astype(f32))
    co = jnp.arange(12)[:, None]
    xp = jnp.arange(4)[None, :]
    lanes = (2 * xp * 12 + co).reshape(-1)             # lane = (2*xp)*12 + co
    f1 = jnp.zeros((4, 96, 128), f32)
    for yp in range(4):
        src = (co * 16 + yp * 4 + xp).reshape(-1)      # PyTorch flat index c*16+h*4+w
        f1 = f1.at[yp, lanes, :].set(fc1w_p[src, :])
    fb1 = jnp.zeros((1, 128), f32).at[0, :120].set(params["fc1_b"].astype(f32))

    # fc2 / out, zero-padded to lane-dense shapes
    f2 = jnp.zeros((128, 64), f32).at[:120, :60].set(params["fc2_w"].astype(f32))
    fb2 = jnp.zeros((1, 64), f32).at[0, :60].set(params["fc2_b"].astype(f32))
    f3 = jnp.zeros((64, 128), f32).at[:60, :10].set(params["out_w"].astype(f32))
    fb3 = jnp.zeros((1, 128), f32).at[0, :10].set(params["out_b"].astype(f32))

    r1m, r2m, pe1, po1, sk2, se2 = _selection_constants(tb)
    return (t1, b1row, r1m, pe1, po1, sk2, t2, b2row, r2m, se2,
            f1, fb1, f2, fb2, f3, fb3)


def _const_spec(a):
    zeros = (0,) * a.ndim
    return pl.BlockSpec(a.shape, lambda i, z=zeros: z)


# ---------------------------------------------------------------------------
# Forward pass: one fused pallas_call, grid over batch tiles.
# ---------------------------------------------------------------------------
def network_forward(params, t):
    """t: (N, 1, 28, 28) float32 NCHW -> logits (N, 10)."""
    n = t.shape[0]
    x = t.reshape(n, 28, 28).astype(jnp.float32)
    n_pad = ((n + TILE_B - 1) // TILE_B) * TILE_B
    if n_pad != n:
        x = jnp.pad(x, ((0, n_pad - n), (0, 0), (0, 0)))

    ops = _prepare_operands(params, TILE_B)

    in_specs = [pl.BlockSpec((TILE_B, 28, 28), lambda i: (i, 0, 0))]
    in_specs += [_const_spec(a) for a in ops]

    out = pl.pallas_call(
        _fused_net_kernel,
        out_shape=jax.ShapeDtypeStruct((n_pad, 128), jnp.float32),
        grid=(n_pad // TILE_B,),
        in_specs=in_specs,
        out_specs=pl.BlockSpec((TILE_B, 128), lambda i: (i, 0)),
        compiler_params=pltpu.CompilerParams(
            dimension_semantics=("parallel",),
            vmem_limit_bytes=32 * 1024 * 1024,
        ),
    )(x, *ops)
    return out[:n, :10]


# ---------------------------------------------------------------------------
# Parameters (PyTorch-style layouts) and pure-JAX reference.
# ---------------------------------------------------------------------------
def init_params(key):
    ks = jax.random.split(key, 10)

    def u(k, shape, fan_in):
        bound = 1.0 / jnp.sqrt(fan_in)
        return jax.random.uniform(k, shape, jnp.float32, -bound, bound)

    return {
        "conv1_w": u(ks[0], (6, 1, 5, 5), 1 * 5 * 5),
        "conv1_b": u(ks[1], (6,), 1 * 5 * 5),
        "conv2_w": u(ks[2], (12, 6, 5, 5), 6 * 5 * 5),
        "conv2_b": u(ks[3], (12,), 6 * 5 * 5),
        # Linear weights stored as (in_features, out_features)
        "fc1_w": u(ks[4], (12 * 4 * 4, 120), 12 * 4 * 4),
        "fc1_b": u(ks[5], (120,), 12 * 4 * 4),
        "fc2_w": u(ks[6], (120, 60), 120),
        "fc2_b": u(ks[7], (60,), 120),
        "out_w": u(ks[8], (60, 10), 60),
        "out_b": u(ks[9], (10,), 60),
    }


def network_forward_ref(params, t):
    dn = ("NCHW", "OIHW", "NCHW")

    def conv(x, w, b):
        y = lax.conv_general_dilated(x, w, (1, 1), "VALID", dimension_numbers=dn,
                                     precision=lax.Precision.HIGHEST)
        return y + b[None, :, None, None]

    def pool(x):
        return lax.reduce_window(x, -jnp.inf, lax.max,
                                 (1, 1, 2, 2), (1, 1, 2, 2), "VALID")

    t = pool(jnp.maximum(conv(t, params["conv1_w"], params["conv1_b"]), 0.0))
    t = pool(jnp.maximum(conv(t, params["conv2_w"], params["conv2_b"]), 0.0))
    t = t.reshape(t.shape[0], -1)
    hp = lax.Precision.HIGHEST
    t = jnp.maximum(jnp.dot(t, params["fc1_w"], precision=hp) + params["fc1_b"], 0.0)
    t = jnp.maximum(jnp.dot(t, params["fc2_w"], precision=hp) + params["fc2_b"], 0.0)
    return jnp.dot(t, params["out_w"], precision=hp) + params["out_b"]


# ---------------------------------------------------------------------------

if __name__ == "__main__":
    key = jax.random.PRNGKey(0)
    pkey, xkey = jax.random.split(key)
    params = init_params(pkey)

    # Architecture implies a 1-channel 28x28 input (-> 12*4*4 after conv/pool).
    x = jax.random.normal(xkey, (2, 1, 28, 28), dtype=jnp.float32)

    out = jax.block_until_ready(network_forward(params, x))
    ref = jax.block_until_ready(network_forward_ref(params, x))

    assert out.shape == (2, 10), out.shape
    assert jnp.allclose(out, ref, rtol=1e-3, atol=1e-3), (
        "mismatch vs reference", float(jnp.max(jnp.abs(out - ref))))

    print("KERNEL_OK")
</pallas_src>

<mosaic_0001>
module attributes {stable_mosaic.version = 11 : i64} {
  func.func @_fused_net_kernel(%arg0: i32, %arg1: memref<8x28x28xf32, #tpu.memory_space<vmem>>, %arg2: memref<5x28x144xf32, #tpu.memory_space<vmem>>, %arg3: memref<1x144xf32, #tpu.memory_space<vmem>>, %arg4: memref<144x144xf32, #tpu.memory_space<vmem>>, %arg5: memref<96x192xf32, #tpu.memory_space<vmem>>, %arg6: memref<96x192xf32, #tpu.memory_space<vmem>>, %arg7: memref<5x64x96xf32, #tpu.memory_space<vmem>>, %arg8: memref<5x144x96xf32, #tpu.memory_space<vmem>>, %arg9: memref<1x96xf32, #tpu.memory_space<vmem>>, %arg10: memref<96x96xf32, #tpu.memory_space<vmem>>, %arg11: memref<8x8x64xf32, #tpu.memory_space<vmem>>, %arg12: memref<4x96x128xf32, #tpu.memory_space<vmem>>, %arg13: memref<1x128xf32, #tpu.memory_space<vmem>>, %arg14: memref<128x64xf32, #tpu.memory_space<vmem>>, %arg15: memref<1x64xf32, #tpu.memory_space<vmem>>, %arg16: memref<64x128xf32, #tpu.memory_space<vmem>>, %arg17: memref<1x128xf32, #tpu.memory_space<vmem>>, %arg18: memref<8x128xf32, #tpu.memory_space<vmem>>) attributes {dimension_semantics = [#tpu.dimension_semantics<parallel>], iteration_bounds = array<i64: 1>, scalar_prefetch = 0 : i64, scratch_operands = 0 : i64, tpu.core_type = #tpu.core_type<tc>, window_params = [{transform_indices = @transform_0, window_bounds = array<i64: 8, 28, 28>}, {pipeline_mode = #tpu.pipeline_mode<synchronous>, transform_indices = @transform_1, window_bounds = array<i64: 5, 28, 144>}, {pipeline_mode = #tpu.pipeline_mode<synchronous>, transform_indices = @transform_2, window_bounds = array<i64: 1, 144>}, {pipeline_mode = #tpu.pipeline_mode<synchronous>, transform_indices = @transform_3, window_bounds = array<i64: 144, 144>}, {pipeline_mode = #tpu.pipeline_mode<synchronous>, transform_indices = @transform_4, window_bounds = array<i64: 96, 192>}, {pipeline_mode = #tpu.pipeline_mode<synchronous>, transform_indices = @transform_5, window_bounds = array<i64: 96, 192>}, {pipeline_mode = #tpu.pipeline_mode<synchronous>, transform_indices = @transform_6, window_bounds = array<i64: 5, 64, 96>}, {pipeline_mode = #tpu.pipeline_mode<synchronous>, transform_indices = @transform_7, window_bounds = array<i64: 5, 144, 96>}, {pipeline_mode = #tpu.pipeline_mode<synchronous>, transform_indices = @transform_8, window_bounds = array<i64: 1, 96>}, {pipeline_mode = #tpu.pipeline_mode<synchronous>, transform_indices = @transform_9, window_bounds = array<i64: 96, 96>}, {pipeline_mode = #tpu.pipeline_mode<synchronous>, transform_indices = @transform_10, window_bounds = array<i64: 8, 8, 64>}, {pipeline_mode = #tpu.pipeline_mode<synchronous>, transform_indices = @transform_11, window_bounds = array<i64: 4, 96, 128>}, {pipeline_mode = #tpu.pipeline_mode<synchronous>, transform_indices = @transform_12, window_bounds = array<i64: 1, 128>}, {pipeline_mode = #tpu.pipeline_mode<synchronous>, transform_indices = @transform_13, window_bounds = array<i64: 128, 64>}, {pipeline_mode = #tpu.pipeline_mode<synchronous>, transform_indices = @transform_14, window_bounds = array<i64: 1, 64>}, {pipeline_mode = #tpu.pipeline_mode<synchronous>, transform_indices = @transform_15, window_bounds = array<i64: 64, 128>}, {pipeline_mode = #tpu.pipeline_mode<synchronous>, transform_indices = @transform_16, window_bounds = array<i64: 1, 128>}, {transform_indices = @transform_17, window_bounds = array<i64: 8, 128>}]} {
    %c0 = arith.constant 0 : index
    %c0_0 = arith.constant 0 : index
    %c0_1 = arith.constant 0 : index
    %0 = vector.load %arg1[%c0, %c0_0, %c0_1] : memref<8x28x28xf32, #tpu.memory_space<vmem>>, vector<8x28x28xf32>
    %1 = vector.extract_strided_slice %0 {offsets = [0, 0, 0], sizes = [8, 24, 28], strides = [1, 1, 1]} : vector<8x28x28xf32> to vector<8x24x28xf32>
    %2 = vector.shape_cast %1 : vector<8x24x28xf32> to vector<192x28xf32>
    %c0_2 = arith.constant 0 : index
    %c0_3 = arith.constant 0 : index
    %c0_4 = arith.constant 0 : index
    %3 = vector.load %arg2[%c0_2, %c0_3, %c0_4] : memref<5x28x144xf32, #tpu.memory_space<vmem>>, vector<1x28x144xf32>
    %4 = vector.shape_cast %3 : vector<1x28x144xf32> to vector<28x144xf32>
    %cst = arith.constant dense<0.000000e+00> : vector<192x144xf32>
    %5 = tpu.matmul %2, %4, %cst {dimension_numbers = #tpu.dot_dimension_numbers<[1], [0], [0], [1], [0, 0, 1, 1], [], []>} : vector<192x28xf32>, vector<28x144xf32>, vector<192x144xf32> -> vector<192x144xf32>
    %6 = vector.extract_strided_slice %0 {offsets = [0, 1, 0], sizes = [8, 24, 28], strides = [1, 1, 1]} : vector<8x28x28xf32> to vector<8x24x28xf32>
    %7 = vector.shape_cast %6 : vector<8x24x28xf32> to vector<192x28xf32>
    %c1 = arith.constant 1 : index
    %c0_5 = arith.constant 0 : index
    %c0_6 = arith.constant 0 : index
    %8 = vector.load %arg2[%c1, %c0_5, %c0_6] : memref<5x28x144xf32, #tpu.memory_space<vmem>>, vector<1x28x144xf32>
    %9 = vector.shape_cast %8 : vector<1x28x144xf32> to vector<28x144xf32>
    %cst_7 = arith.constant dense<0.000000e+00> : vector<192x144xf32>
    %10 = tpu.matmul %7, %9, %cst_7 {dimension_numbers = #tpu.dot_dimension_numbers<[1], [0], [0], [1], [0, 0, 1, 1], [], []>} : vector<192x28xf32>, vector<28x144xf32>, vector<192x144xf32> -> vector<192x144xf32>
    %11 = arith.addf %5, %10 : vector<192x144xf32>
    %12 = vector.extract_strided_slice %0 {offsets = [0, 2, 0], sizes = [8, 24, 28], strides = [1, 1, 1]} : vector<8x28x28xf32> to vector<8x24x28xf32>
    %13 = vector.shape_cast %12 : vector<8x24x28xf32> to vector<192x28xf32>
    %c2 = arith.constant 2 : index
    %c0_8 = arith.constant 0 : index
    %c0_9 = arith.constant 0 : index
    %14 = vector.load %arg2[%c2, %c0_8, %c0_9] : memref<5x28x144xf32, #tpu.memory_space<vmem>>, vector<1x28x144xf32>
    %15 = vector.shape_cast %14 : vector<1x28x144xf32> to vector<28x144xf32>
    %cst_10 = arith.constant dense<0.000000e+00> : vector<192x144xf32>
    %16 = tpu.matmul %13, %15, %cst_10 {dimension_numbers = #tpu.dot_dimension_numbers<[1], [0], [0], [1], [0, 0, 1, 1], [], []>} : vector<192x28xf32>, vector<28x144xf32>, vector<192x144xf32> -> vector<192x144xf32>
    %17 = arith.addf %11, %16 : vector<192x144xf32>
    %18 = vector.extract_strided_slice %0 {offsets = [0, 3, 0], sizes = [8, 24, 28], strides = [1, 1, 1]} : vector<8x28x28xf32> to vector<8x24x28xf32>
    %19 = vector.shape_cast %18 : vector<8x24x28xf32> to vector<192x28xf32>
    %c3 = arith.constant 3 : index
    %c0_11 = arith.constant 0 : index
    %c0_12 = arith.constant 0 : index
    %20 = vector.load %arg2[%c3, %c0_11, %c0_12] : memref<5x28x144xf32, #tpu.memory_space<vmem>>, vector<1x28x144xf32>
    %21 = vector.shape_cast %20 : vector<1x28x144xf32> to vector<28x144xf32>
    %cst_13 = arith.constant dense<0.000000e+00> : vector<192x144xf32>
    %22 = tpu.matmul %19, %21, %cst_13 {dimension_numbers = #tpu.dot_dimension_numbers<[1], [0], [0], [1], [0, 0, 1, 1], [], []>} : vector<192x28xf32>, vector<28x144xf32>, vector<192x144xf32> -> vector<192x144xf32>
    %23 = arith.addf %17, %22 : vector<192x144xf32>
    %24 = vector.extract_strided_slice %0 {offsets = [0, 4, 0], sizes = [8, 24, 28], strides = [1, 1, 1]} : vector<8x28x28xf32> to vector<8x24x28xf32>
    %25 = vector.shape_cast %24 : vector<8x24x28xf32> to vector<192x28xf32>
    %c4 = arith.constant 4 : index
    %c0_14 = arith.constant 0 : index
    %c0_15 = arith.constant 0 : index
    %26 = vector.load %arg2[%c4, %c0_14, %c0_15] : memref<5x28x144xf32, #tpu.memory_space<vmem>>, vector<1x28x144xf32>
    %27 = vector.shape_cast %26 : vector<1x28x144xf32> to vector<28x144xf32>
    %cst_16 = arith.constant dense<0.000000e+00> : vector<192x144xf32>
    %28 = tpu.matmul %25, %27, %cst_16 {dimension_numbers = #tpu.dot_dimension_numbers<[1], [0], [0], [1], [0, 0, 1, 1], [], []>} : vector<192x28xf32>, vector<28x144xf32>, vector<192x144xf32> -> vector<192x144xf32>
    %29 = arith.addf %23, %28 : vector<192x144xf32>
    %c0_17 = arith.constant 0 : index
    %c0_18 = arith.constant 0 : index
    %30 = vector.load %arg3[%c0_17, %c0_18] : memref<1x144xf32, #tpu.memory_space<vmem>>, vector<1x144xf32>
    %31 = vector.broadcast %30 : vector<1x144xf32> to vector<192x144xf32>
    %32 = arith.addf %29, %31 : vector<192x144xf32>
    %cst_19 = arith.constant 0.000000e+00 : f32
    %33 = vector.broadcast %cst_19 : f32 to vector<192x144xf32>
    %34 = arith.maximumf %32, %33 : vector<192x144xf32>
    %c0_20 = arith.constant 0 : index
    %c0_21 = arith.constant 0 : index
    %35 = vector.load %arg4[%c0_20, %c0_21] : memref<144x144xf32, #tpu.memory_space<vmem>>, vector<144x144xf32>
    %cst_22 = arith.constant dense<0.000000e+00> : vector<192x144xf32>
    %36 = tpu.matmul %34, %35, %cst_22 {dimension_numbers = #tpu.dot_dimension_numbers<[1], [0], [0], [1], [0, 0, 1, 1], [], []>} : vector<192x144xf32>, vector<144x144xf32>, vector<192x144xf32> -> vector<192x144xf32>
    %37 = arith.maximumf %34, %36 : vector<192x144xf32>
    %c0_23 = arith.constant 0 : index
    %c0_24 = arith.constant 0 : index
    %38 = vector.load %arg5[%c0_23, %c0_24] : memref<96x192xf32, #tpu.memory_space<vmem>>, vector<96x192xf32>
    %cst_25 = arith.constant dense<0.000000e+00> : vector<96x144xf32>
    %39 = tpu.matmul %38, %37, %cst_25 {dimension_numbers = #tpu.dot_dimension_numbers<[1], [0], [0], [1], [0, 0, 1, 1], [], []>} : vector<96x192xf32>, vector<192x144xf32>, vector<96x144xf32> -> vector<96x144xf32>
    %c0_26 = arith.constant 0 : index
    %c0_27 = arith.constant 0 : index
    %40 = vector.load %arg6[%c0_26, %c0_27] : memref<96x192xf32, #tpu.memory_space<vmem>>, vector<96x192xf32>
    %cst_28 = arith.constant dense<0.000000e+00> : vector<96x144xf32>
    %41 = tpu.matmul %40, %37, %cst_28 {dimension_numbers = #tpu.dot_dimension_numbers<[1], [0], [0], [1], [0, 0, 1, 1], [], []>} : vector<96x192xf32>, vector<192x144xf32>, vector<96x144xf32> -> vector<96x144xf32>
    %42 = arith.maximumf %39, %41 : vector<96x144xf32>
    %c0_29 = arith.constant 0 : index
    %c0_30 = arith.constant 0 : index
    %c0_31 = arith.constant 0 : index
    %43 = vector.load %arg7[%c0_29, %c0_30, %c0_31] : memref<5x64x96xf32, #tpu.memory_space<vmem>>, vector<1x64x96xf32>
    %44 = vector.shape_cast %43 : vector<1x64x96xf32> to vector<64x96xf32>
    %cst_32 = arith.constant dense<0.000000e+00> : vector<64x144xf32>
    %45 = tpu.matmul %44, %42, %cst_32 {dimension_numbers = #tpu.dot_dimension_numbers<[1], [0], [0], [1], [0, 0, 1, 1], [], []>} : vector<64x96xf32>, vector<96x144xf32>, vector<64x144xf32> -> vector<64x144xf32>
    %c0_33 = arith.constant 0 : index
    %c0_34 = arith.constant 0 : index
    %c0_35 = arith.constant 0 : index
    %46 = vector.load %arg8[%c0_33, %c0_34, %c0_35] : memref<5x144x96xf32, #tpu.memory_space<vmem>>, vector<1x144x96xf32>
    %47 = vector.shape_cast %46 : vector<1x144x96xf32> to vector<144x96xf32>
    %cst_36 = arith.constant dense<0.000000e+00> : vector<64x96xf32>
    %48 = tpu.matmul %45, %47, %cst_36 {dimension_numbers = #tpu.dot_dimension_numbers<[1], [0], [0], [1], [0, 0, 1, 1], [], []>} : vector<64x144xf32>, vector<144x96xf32>, vector<64x96xf32> -> vector<64x96xf32>
    %c1_37 = arith.constant 1 : index
    %c0_38 = arith.constant 0 : index
    %c0_39 = arith.constant 0 : index
    %49 = vector.load %arg7[%c1_37, %c0_38, %c0_39] : memref<5x64x96xf32, #tpu.memory_space<vmem>>, vector<1x64x96xf32>
    %50 = vector.shape_cast %49 : vector<1x64x96xf32> to vector<64x96xf32>
    %cst_40 = arith.constant dense<0.000000e+00> : vector<64x144xf32>
    %51 = tpu.matmul %50, %42, %cst_40 {dimension_numbers = #tpu.dot_dimension_numbers<[1], [0], [0], [1], [0, 0, 1, 1], [], []>} : vector<64x96xf32>, vector<96x144xf32>, vector<64x144xf32> -> vector<64x144xf32>
    %c1_41 = arith.constant 1 : index
    %c0_42 = arith.constant 0 : index
    %c0_43 = arith.constant 0 : index
    %52 = vector.load %arg8[%c1_41, %c0_42, %c0_43] : memref<5x144x96xf32, #tpu.memory_space<vmem>>, vector<1x144x96xf32>
    %53 = vector.shape_cast %52 : vector<1x144x96xf32> to vector<144x96xf32>
    %cst_44 = arith.constant dense<0.000000e+00> : vector<64x96xf32>
    %54 = tpu.matmul %51, %53, %cst_44 {dimension_numbers = #tpu.dot_dimension_numbers<[1], [0], [0], [1], [0, 0, 1, 1], [], []>} : vector<64x144xf32>, vector<144x96xf32>, vector<64x96xf32> -> vector<64x96xf32>
    %55 = arith.addf %48, %54 : vector<64x96xf32>
    %c2_45 = arith.constant 2 : index
    %c0_46 = arith.constant 0 : index
    %c0_47 = arith.constant 0 : index
    %56 = vector.load %arg7[%c2_45, %c0_46, %c0_47] : memref<5x64x96xf32, #tpu.memory_space<vmem>>, vector<1x64x96xf32>
    %57 = vector.shape_cast %56 : vector<1x64x96xf32> to vector<64x96xf32>
    %cst_48 = arith.constant dense<0.000000e+00> : vector<64x144xf32>
    %58 = tpu.matmul %57, %42, %cst_48 {dimension_numbers = #tpu.dot_dimension_numbers<[1], [0], [0], [1], [0, 0, 1, 1], [], []>} : vector<64x96xf32>, vector<96x144xf32>, vector<64x144xf32> -> vector<64x144xf32>
    %c2_49 = arith.constant 2 : index
    %c0_50 = arith.constant 0 : index
    %c0_51 = arith.constant 0 : index
    %59 = vector.load %arg8[%c2_49, %c0_50, %c0_51] : memref<5x144x96xf32, #tpu.memory_space<vmem>>, vector<1x144x96xf32>
    %60 = vector.shape_cast %59 : vector<1x144x96xf32> to vector<144x96xf32>
    %cst_52 = arith.constant dense<0.000000e+00> : vector<64x96xf32>
    %61 = tpu.matmul %58, %60, %cst_52 {dimension_numbers = #tpu.dot_dimension_numbers<[1], [0], [0], [1], [0, 0, 1, 1], [], []>} : vector<64x144xf32>, vector<144x96xf32>, vector<64x96xf32> -> vector<64x96xf32>
    %62 = arith.addf %55, %61 : vector<64x96xf32>
    %c3_53 = arith.constant 3 : index
    %c0_54 = arith.constant 0 : index
    %c0_55 = arith.constant 0 : index
    %63 = vector.load %arg7[%c3_53, %c0_54, %c0_55] : memref<5x64x96xf32, #tpu.memory_space<vmem>>, vector<1x64x96xf32>
    %64 = vector.shape_cast %63 : vector<1x64x96xf32> to vector<64x96xf32>
    %cst_56 = arith.constant dense<0.000000e+00> : vector<64x144xf32>
    %65 = tpu.matmul %64, %42, %cst_56 {dimension_numbers = #tpu.dot_dimension_numbers<[1], [0], [0], [1], [0, 0, 1, 1], [], []>} : vector<64x96xf32>, vector<96x144xf32>, vector<64x144xf32> -> vector<64x144xf32>
    %c3_57 = arith.constant 3 : index
    %c0_58 = arith.constant 0 : index
    %c0_59 = arith.constant 0 : index
    %66 = vector.load %arg8[%c3_57, %c0_58, %c0_59] : memref<5x144x96xf32, #tpu.memory_space<vmem>>, vector<1x144x96xf32>
    %67 = vector.shape_cast %66 : vector<1x144x96xf32> to vector<144x96xf32>
    %cst_60 = arith.constant dense<0.000000e+00> : vector<64x96xf32>
    %68 = tpu.matmul %65, %67, %cst_60 {dimension_numbers = #tpu.dot_dimension_numbers<[1], [0], [0], [1], [0, 0, 1, 1], [], []>} : vector<64x144xf32>, vector<144x96xf32>, vector<64x96xf32> -> vector<64x96xf32>
    %69 = arith.addf %62, %68 : vector<64x96xf32>
    %c4_61 = arith.constant 4 : index
    %c0_62 = arith.constant 0 : index
    %c0_63 = arith.constant 0 : index
    %70 = vector.load %arg7[%c4_61, %c0_62, %c0_63] : memref<5x64x96xf32, #tpu.memory_space<vmem>>, vector<1x64x96xf32>
    %71 = vector.shape_cast %70 : vector<1x64x96xf32> to vector<64x96xf32>
    %cst_64 = arith.constant dense<0.000000e+00> : vector<64x144xf32>
    %72 = tpu.matmul %71, %42, %cst_64 {dimension_numbers = #tpu.dot_dimension_numbers<[1], [0], [0], [1], [0, 0, 1, 1], [], []>} : vector<64x96xf32>, vector<96x144xf32>, vector<64x144xf32> -> vector<64x144xf32>
    %c4_65 = arith.constant 4 : index
    %c0_66 = arith.constant 0 : index
    %c0_67 = arith.constant 0 : index
    %73 = vector.load %arg8[%c4_65, %c0_66, %c0_67] : memref<5x144x96xf32, #tpu.memory_space<vmem>>, vector<1x144x96xf32>
    %74 = vector.shape_cast %73 : vector<1x144x96xf32> to vector<144x96xf32>
    %cst_68 = arith.constant dense<0.000000e+00> : vector<64x96xf32>
    %75 = tpu.matmul %72, %74, %cst_68 {dimension_numbers = #tpu.dot_dimension_numbers<[1], [0], [0], [1], [0, 0, 1, 1], [], []>} : vector<64x144xf32>, vector<144x96xf32>, vector<64x96xf32> -> vector<64x96xf32>
    %76 = arith.addf %69, %75 : vector<64x96xf32>
    %c0_69 = arith.constant 0 : index
    %c0_70 = arith.constant 0 : index
    %77 = vector.load %arg9[%c0_69, %c0_70] : memref<1x96xf32, #tpu.memory_space<vmem>>, vector<1x96xf32>
    %78 = vector.broadcast %77 : vector<1x96xf32> to vector<64x96xf32>
    %79 = arith.addf %76, %78 : vector<64x96xf32>
    %cst_71 = arith.constant 0.000000e+00 : f32
    %80 = vector.broadcast %cst_71 : f32 to vector<64x96xf32>
    %81 = arith.maximumf %79, %80 : vector<64x96xf32>
    %c0_72 = arith.constant 0 : index
    %c0_73 = arith.constant 0 : index
    %82 = vector.load %arg10[%c0_72, %c0_73] : memref<96x96xf32, #tpu.memory_space<vmem>>, vector<96x96xf32>
    %cst_74 = arith.constant dense<0.000000e+00> : vector<64x96xf32>
    %83 = tpu.matmul %81, %82, %cst_74 {dimension_numbers = #tpu.dot_dimension_numbers<[1], [0], [0], [1], [0, 0, 1, 1], [], []>} : vector<64x96xf32>, vector<96x96xf32>, vector<64x96xf32> -> vector<64x96xf32>
    %84 = arith.maximumf %81, %83 : vector<64x96xf32>
    %c0_75 = arith.constant 0 : index
    %c0_76 = arith.constant 0 : index
    %c0_77 = arith.constant 0 : index
    %85 = vector.load %arg11[%c0_75, %c0_76, %c0_77] : memref<8x8x64xf32, #tpu.memory_space<vmem>>, vector<1x8x64xf32>
    %86 = vector.shape_cast %85 : vector<1x8x64xf32> to vector<8x64xf32>
    %cst_78 = arith.constant dense<0.000000e+00> : vector<8x96xf32>
    %87 = tpu.matmul %86, %84, %cst_78 {dimension_numbers = #tpu.dot_dimension_numbers<[1], [0], [0], [1], [0, 0, 1, 1], [], []>} : vector<8x64xf32>, vector<64x96xf32>, vector<8x96xf32> -> vector<8x96xf32>
    %c1_79 = arith.constant 1 : index
    %c0_80 = arith.constant 0 : index
    %c0_81 = arith.constant 0 : index
    %88 = vector.load %arg11[%c1_79, %c0_80, %c0_81] : memref<8x8x64xf32, #tpu.memory_space<vmem>>, vector<1x8x64xf32>
    %89 = vector.shape_cast %88 : vector<1x8x64xf32> to vector<8x64xf32>
    %cst_82 = arith.constant dense<0.000000e+00> : vector<8x96xf32>
    %90 = tpu.matmul %89, %84, %cst_82 {dimension_numbers = #tpu.dot_dimension_numbers<[1], [0], [0], [1], [0, 0, 1, 1], [], []>} : vector<8x64xf32>, vector<64x96xf32>, vector<8x96xf32> -> vector<8x96xf32>
    %91 = arith.maximumf %87, %90 : vector<8x96xf32>
    %c0_83 = arith.constant 0 : index
    %c0_84 = arith.constant 0 : index
    %c0_85 = arith.constant 0 : index
    %92 = vector.load %arg12[%c0_83, %c0_84, %c0_85] : memref<4x96x128xf32, #tpu.memory_space<vmem>>, vector<1x96x128xf32>
    %93 = vector.shape_cast %92 : vector<1x96x128xf32> to vector<96x128xf32>
    %cst_86 = arith.constant dense<0.000000e+00> : vector<8x128xf32>
    %94 = tpu.matmul %91, %93, %cst_86 {dimension_numbers = #tpu.dot_dimension_numbers<[1], [0], [0], [1], [0, 0, 1, 1], [], []>} : vector<8x96xf32>, vector<96x128xf32>, vector<8x128xf32> -> vector<8x128xf32>
    %c2_87 = arith.constant 2 : index
    %c0_88 = arith.constant 0 : index
    %c0_89 = arith.constant 0 : index
    %95 = vector.load %arg11[%c2_87, %c0_88, %c0_89] : memref<8x8x64xf32, #tpu.memory_space<vmem>>, vector<1x8x64xf32>
    %96 = vector.shape_cast %95 : vector<1x8x64xf32> to vector<8x64xf32>
    %cst_90 = arith.constant dense<0.000000e+00> : vector<8x96xf32>
    %97 = tpu.matmul %96, %84, %cst_90 {dimension_numbers = #tpu.dot_dimension_numbers<[1], [0], [0], [1], [0, 0, 1, 1], [], []>} : vector<8x64xf32>, vector<64x96xf32>, vector<8x96xf32> -> vector<8x96xf32>
    %c3_91 = arith.constant 3 : index
    %c0_92 = arith.constant 0 : index
    %c0_93 = arith.constant 0 : index
    %98 = vector.load %arg11[%c3_91, %c0_92, %c0_93] : memref<8x8x64xf32, #tpu.memory_space<vmem>>, vector<1x8x64xf32>
    %99 = vector.shape_cast %98 : vector<1x8x64xf32> to vector<8x64xf32>
    %cst_94 = arith.constant dense<0.000000e+00> : vector<8x96xf32>
    %100 = tpu.matmul %99, %84, %cst_94 {dimension_numbers = #tpu.dot_dimension_numbers<[1], [0], [0], [1], [0, 0, 1, 1], [], []>} : vector<8x64xf32>, vector<64x96xf32>, vector<8x96xf32> -> vector<8x96xf32>
    %101 = arith.maximumf %97, %100 : vector<8x96xf32>
    %c1_95 = arith.constant 1 : index
    %c0_96 = arith.constant 0 : index
    %c0_97 = arith.constant 0 : index
    %102 = vector.load %arg12[%c1_95, %c0_96, %c0_97] : memref<4x96x128xf32, #tpu.memory_space<vmem>>, vector<1x96x128xf32>
    %103 = vector.shape_cast %102 : vector<1x96x128xf32> to vector<96x128xf32>
    %cst_98 = arith.constant dense<0.000000e+00> : vector<8x128xf32>
    %104 = tpu.matmul %101, %103, %cst_98 {dimension_numbers = #tpu.dot_dimension_numbers<[1], [0], [0], [1], [0, 0, 1, 1], [], []>} : vector<8x96xf32>, vector<96x128xf32>, vector<8x128xf32> -> vector<8x128xf32>
    %105 = arith.addf %94, %104 : vector<8x128xf32>
    %c4_99 = arith.constant 4 : index
    %c0_100 = arith.constant 0 : index
    %c0_101 = arith.constant 0 : index
    %106 = vector.load %arg11[%c4_99, %c0_100, %c0_101] : memref<8x8x64xf32, #tpu.memory_space<vmem>>, vector<1x8x64xf32>
    %107 = vector.shape_cast %106 : vector<1x8x64xf32> to vector<8x64xf32>
    %cst_102 = arith.constant dense<0.000000e+00> : vector<8x96xf32>
    %108 = tpu.matmul %107, %84, %cst_102 {dimension_numbers = #tpu.dot_dimension_numbers<[1], [0], [0], [1], [0, 0, 1, 1], [], []>} : vector<8x64xf32>, vector<64x96xf32>, vector<8x96xf32> -> vector<8x96xf32>
    %c5 = arith.constant 5 : index
    %c0_103 = arith.constant 0 : index
    %c0_104 = arith.constant 0 : index
    %109 = vector.load %arg11[%c5, %c0_103, %c0_104] : memref<8x8x64xf32, #tpu.memory_space<vmem>>, vector<1x8x64xf32>
    %110 = vector.shape_cast %109 : vector<1x8x64xf32> to vector<8x64xf32>
    %cst_105 = arith.constant dense<0.000000e+00> : vector<8x96xf32>
    %111 = tpu.matmul %110, %84, %cst_105 {dimension_numbers = #tpu.dot_dimension_numbers<[1], [0], [0], [1], [0, 0, 1, 1], [], []>} : vector<8x64xf32>, vector<64x96xf32>, vector<8x96xf32> -> vector<8x96xf32>
    %112 = arith.maximumf %108, %111 : vector<8x96xf32>
    %c2_106 = arith.constant 2 : index
    %c0_107 = arith.constant 0 : index
    %c0_108 = arith.constant 0 : index
    %113 = vector.load %arg12[%c2_106, %c0_107, %c0_108] : memref<4x96x128xf32, #tpu.memory_space<vmem>>, vector<1x96x128xf32>
    %114 = vector.shape_cast %113 : vector<1x96x128xf32> to vector<96x128xf32>
    %cst_109 = arith.constant dense<0.000000e+00> : vector<8x128xf32>
    %115 = tpu.matmul %112, %114, %cst_109 {dimension_numbers = #tpu.dot_dimension_numbers<[1], [0], [0], [1], [0, 0, 1, 1], [], []>} : vector<8x96xf32>, vector<96x128xf32>, vector<8x128xf32> -> vector<8x128xf32>
    %116 = arith.addf %105, %115 : vector<8x128xf32>
    %c6 = arith.constant 6 : index
    %c0_110 = arith.constant 0 : index
    %c0_111 = arith.constant 0 : index
    %117 = vector.load %arg11[%c6, %c0_110, %c0_111] : memref<8x8x64xf32, #tpu.memory_space<vmem>>, vector<1x8x64xf32>
    %118 = vector.shape_cast %117 : vector<1x8x64xf32> to vector<8x64xf32>
    %cst_112 = arith.constant dense<0.000000e+00> : vector<8x96xf32>
    %119 = tpu.matmul %118, %84, %cst_112 {dimension_numbers = #tpu.dot_dimension_numbers<[1], [0], [0], [1], [0, 0, 1, 1], [], []>} : vector<8x64xf32>, vector<64x96xf32>, vector<8x96xf32> -> vector<8x96xf32>
    %c7 = arith.constant 7 : index
    %c0_113 = arith.constant 0 : index
    %c0_114 = arith.constant 0 : index
    %120 = vector.load %arg11[%c7, %c0_113, %c0_114] : memref<8x8x64xf32, #tpu.memory_space<vmem>>, vector<1x8x64xf32>
    %121 = vector.shape_cast %120 : vector<1x8x64xf32> to vector<8x64xf32>
    %cst_115 = arith.constant dense<0.000000e+00> : vector<8x96xf32>
    %122 = tpu.matmul %121, %84, %cst_115 {dimension_numbers = #tpu.dot_dimension_numbers<[1], [0], [0], [1], [0, 0, 1, 1], [], []>} : vector<8x64xf32>, vector<64x96xf32>, vector<8x96xf32> -> vector<8x96xf32>
    %123 = arith.maximumf %119, %122 : vector<8x96xf32>
    %c3_116 = arith.constant 3 : index
    %c0_117 = arith.constant 0 : index
    %c0_118 = arith.constant 0 : index
    %124 = vector.load %arg12[%c3_116, %c0_117, %c0_118] : memref<4x96x128xf32, #tpu.memory_space<vmem>>, vector<1x96x128xf32>
    %125 = vector.shape_cast %124 : vector<1x96x128xf32> to vector<96x128xf32>
    %cst_119 = arith.constant dense<0.000000e+00> : vector<8x128xf32>
    %126 = tpu.matmul %123, %125, %cst_119 {dimension_numbers = #tpu.dot_dimension_numbers<[1], [0], [0], [1], [0, 0, 1, 1], [], []>} : vector<8x96xf32>, vector<96x128xf32>, vector<8x128xf32> -> vector<8x128xf32>
    %127 = arith.addf %116, %126 : vector<8x128xf32>
    %c0_120 = arith.constant 0 : index
    %c0_121 = arith.constant 0 : index
    %128 = vector.load %arg13[%c0_120, %c0_121] : memref<1x128xf32, #tpu.memory_space<vmem>>, vector<1x128xf32>
    %129 = vector.broadcast %128 : vector<1x128xf32> to vector<8x128xf32>
    %130 = arith.addf %127, %129 : vector<8x128xf32>
    %cst_122 = arith.constant 0.000000e+00 : f32
    %131 = vector.broadcast %cst_122 : f32 to vector<8x128xf32>
    %132 = arith.maximumf %130, %131 : vector<8x128xf32>
    %c0_123 = arith.constant 0 : index
    %c0_124 = arith.constant 0 : index
    %133 = vector.load %arg14[%c0_123, %c0_124] : memref<128x64xf32, #tpu.memory_space<vmem>>, vector<128x64xf32>
    %cst_125 = arith.constant dense<0.000000e+00> : vector<8x64xf32>
    %134 = tpu.matmul %132, %133, %cst_125 {dimension_numbers = #tpu.dot_dimension_numbers<[1], [0], [0], [1], [0, 0, 1, 1], [], []>} : vector<8x128xf32>, vector<128x64xf32>, vector<8x64xf32> -> vector<8x64xf32>
    %c0_126 = arith.constant 0 : index
    %c0_127 = arith.constant 0 : index
    %135 = vector.load %arg15[%c0_126, %c0_127] : memref<1x64xf32, #tpu.memory_space<vmem>>, vector<1x64xf32>
    %136 = vector.broadcast %135 : vector<1x64xf32> to vector<8x64xf32>
    %137 = arith.addf %134, %136 : vector<8x64xf32>
    %cst_128 = arith.constant 0.000000e+00 : f32
    %138 = vector.broadcast %cst_128 : f32 to vector<8x64xf32>
    %139 = arith.maximumf %137, %138 : vector<8x64xf32>
    %c0_129 = arith.constant 0 : index
    %c0_130 = arith.constant 0 : index
    %140 = vector.load %arg16[%c0_129, %c0_130] : memref<64x128xf32, #tpu.memory_space<vmem>>, vector<64x128xf32>
    %cst_131 = arith.constant dense<0.000000e+00> : vector<8x128xf32>
    %141 = tpu.matmul %139, %140, %cst_131 {dimension_numbers = #tpu.dot_dimension_numbers<[1], [0], [0], [1], [0, 0, 1, 1], [], []>} : vector<8x64xf32>, vector<64x128xf32>, vector<8x128xf32> -> vector<8x128xf32>
    %c0_132 = arith.constant 0 : index
    %c0_133 = arith.constant 0 : index
    %142 = vector.load %arg17[%c0_132, %c0_133] : memref<1x128xf32, #tpu.memory_space<vmem>>, vector<1x128xf32>
    %143 = vector.broadcast %142 : vector<1x128xf32> to vector<8x128xf32>
    %144 = arith.addf %141, %143 : vector<8x128xf32>
    %c0_134 = arith.constant 0 : index
    %c0_135 = arith.constant 0 : index
    %145 = vector.load %arg18[%c0_134, %c0_135] : memref<8x128xf32, #tpu.memory_space<vmem>>, vector<8x128xf32>
    tpu.vector_store %arg18[%c0_134, %c0_135], %144 {strides = array<i32>} : memref<8x128xf32, #tpu.memory_space<vmem>>, vector<8x128xf32>,
    return
  }
  func.func @transform_0(%arg0: i32) -> (i32, i32, i32) {
    %c0_i32 = arith.constant 0 : i32
    %c0_i32_0 = arith.constant 0 : i32
    %c0_i32_1 = arith.constant 0 : i32
    return %arg0, %c0_i32, %c0_i32_0 : i32, i32, i32
  }
  func.func @transform_1(%arg0: i32) -> (i32, i32, i32) {
    %c0_i32 = arith.constant 0 : i32
    %c0_i32_0 = arith.constant 0 : i32
    %c0_i32_1 = arith.constant 0 : i32
    %c0_i32_2 = arith.constant 0 : i32
    return %c0_i32, %c0_i32_0, %c0_i32_1 : i32, i32, i32
  }
  func.func @transform_2(%arg0: i32) -> (i32, i32) {
    %c0_i32 = arith.constant 0 : i32
    %c0_i32_0 = arith.constant 0 : i32
    %c0_i32_1 = arith.constant 0 : i32
    return %c0_i32, %c0_i32_0 : i32, i32
  }
  func.func @transform_3(%arg0: i32) -> (i32, i32) {
    %c0_i32 = arith.constant 0 : i32
    %c0_i32_0 = arith.constant 0 : i32
    %c0_i32_1 = arith.constant 0 : i32
    return %c0_i32, %c0_i32_0 : i32, i32
  }
  func.func @transform_4(%arg0: i32) -> (i32, i32) {
    %c0_i32 = arith.constant 0 : i32
    %c0_i32_0 = arith.constant 0 : i32
    %c0_i32_1 = arith.constant 0 : i32
    return %c0_i32, %c0_i32_0 : i32, i32
  }
  func.func @transform_5(%arg0: i32) -> (i32, i32) {
    %c0_i32 = arith.constant 0 : i32
    %c0_i32_0 = arith.constant 0 : i32
    %c0_i32_1 = arith.constant 0 : i32
    return %c0_i32, %c0_i32_0 : i32, i32
  }
  func.func @transform_6(%arg0: i32) -> (i32, i32, i32) {
    %c0_i32 = arith.constant 0 : i32
    %c0_i32_0 = arith.constant 0 : i32
    %c0_i32_1 = arith.constant 0 : i32
    %c0_i32_2 = arith.constant 0 : i32
    return %c0_i32, %c0_i32_0, %c0_i32_1 : i32, i32, i32
  }
  func.func @transform_7(%arg0: i32) -> (i32, i32, i32) {
    %c0_i32 = arith.constant 0 : i32
    %c0_i32_0 = arith.constant 0 : i32
    %c0_i32_1 = arith.constant 0 : i32
    %c0_i32_2 = arith.constant 0 : i32
    return %c0_i32, %c0_i32_0, %c0_i32_1 : i32, i32, i32
  }
  func.func @transform_8(%arg0: i32) -> (i32, i32) {
    %c0_i32 = arith.constant 0 : i32
    %c0_i32_0 = arith.constant 0 : i32
    %c0_i32_1 = arith.constant 0 : i32
    return %c0_i32, %c0_i32_0 : i32, i32
  }
  func.func @transform_9(%arg0: i32) -> (i32, i32) {
    %c0_i32 = arith.constant 0 : i32
    %c0_i32_0 = arith.constant 0 : i32
    %c0_i32_1 = arith.constant 0 : i32
    return %c0_i32, %c0_i32_0 : i32, i32
  }
  func.func @transform_10(%arg0: i32) -> (i32, i32, i32) {
    %c0_i32 = arith.constant 0 : i32
    %c0_i32_0 = arith.constant 0 : i32
    %c0_i32_1 = arith.constant 0 : i32
    %c0_i32_2 = arith.constant 0 : i32
    return %c0_i32, %c0_i32_0, %c0_i32_1 : i32, i32, i32
  }
  func.func @transform_11(%arg0: i32) -> (i32, i32, i32) {
    %c0_i32 = arith.constant 0 : i32
    %c0_i32_0 = arith.constant 0 : i32
    %c0_i32_1 = arith.constant 0 : i32
    %c0_i32_2 = arith.constant 0 : i32
    return %c0_i32, %c0_i32_0, %c0_i32_1 : i32, i32, i32
  }
  func.func @transform_12(%arg0: i32) -> (i32, i32) {
    %c0_i32 = arith.constant 0 : i32
    %c0_i32_0 = arith.constant 0 : i32
    %c0_i32_1 = arith.constant 0 : i32
    return %c0_i32, %c0_i32_0 : i32, i32
  }
  func.func @transform_13(%arg0: i32) -> (i32, i32) {
    %c0_i32 = arith.constant 0 : i32
    %c0_i32_0 = arith.constant 0 : i32
    %c0_i32_1 = arith.constant 0 : i32
    return %c0_i32, %c0_i32_0 : i32, i32
  }
  func.func @transform_14(%arg0: i32) -> (i32, i32) {
    %c0_i32 = arith.constant 0 : i32
    %c0_i32_0 = arith.constant 0 : i32
    %c0_i32_1 = arith.constant 0 : i32
    return %c0_i32, %c0_i32_0 : i32, i32
  }
  func.func @transform_15(%arg0: i32) -> (i32, i32) {
    %c0_i32 = arith.constant 0 : i32
    %c0_i32_0 = arith.constant 0 : i32
    %c0_i32_1 = arith.constant 0 : i32
    return %c0_i32, %c0_i32_0 : i32, i32
  }
  func.func @transform_16(%arg0: i32) -> (i32, i32) {
    %c0_i32 = arith.constant 0 : i32
    %c0_i32_0 = arith.constant 0 : i32
    %c0_i32_1 = arith.constant 0 : i32
    return %c0_i32, %c0_i32_0 : i32, i32
  }
  func.func @transform_17(%arg0: i32) -> (i32, i32) {
    %c0_i32 = arith.constant 0 : i32
    %c0_i32_0 = arith.constant 0 : i32
    return %arg0, %c0_i32 : i32, i32
  }
}

</mosaic_0001>

<llo_original>
// kernel: tpu_custom_call.1
$region0: #{tpu_custom_call.1}
  #allocation0 [shape = 'u32[]', space=smem, size = 0x4, offset = 0x4, fixed_abs, tag = 'smem constant byte address 0x4 - core index']
  #allocation1 [shape = 'u32[144,128]{1,0:T(1,128)}', space=vmem, size = 0x12000, scoped, tag = 'internal scratch']
  %s0 = inlined_call_operand.vmem [shape: f32[8,28,28], index: 0, kind: input, shape index: {}]
  %s1 = inlined_call_operand.vmem [shape: f32[5,28,144], index: 1, kind: input, shape index: {}]
  %s2 = inlined_call_operand.vmem [shape: f32[1,144], index: 2, kind: input, shape index: {}]
  %s3 = inlined_call_operand.hbm [shape: f32[144,144], index: 3, kind: input, shape index: {}]
  %s4 = inlined_call_operand.hbm [shape: f32[96,192], index: 4, kind: input, shape index: {}]
  %s5 = inlined_call_operand.hbm [shape: f32[96,192], index: 5, kind: input, shape index: {}]
  %s6 = inlined_call_operand.hbm [shape: f32[5,64,96], index: 6, kind: input, shape index: {}]
  %s7 = inlined_call_operand.hbm [shape: f32[5,144,96], index: 7, kind: input, shape index: {}]
  %s8 = inlined_call_operand.vmem [shape: f32[1,96], index: 8, kind: input, shape index: {}]
  %s9 = inlined_call_operand.hbm [shape: f32[96,96], index: 9, kind: input, shape index: {}]
  %s10 = inlined_call_operand.hbm [shape: f32[8,8,64], index: 10, kind: input, shape index: {}]
  %s11 = inlined_call_operand.vmem [shape: f32[4,96,128], index: 11, kind: input, shape index: {}]
  %s12 = inlined_call_operand.vmem [shape: f32[1,128], index: 12, kind: input, shape index: {}]
  %s13 = inlined_call_operand.vmem [shape: f32[128,64], index: 13, kind: input, shape index: {}]
  %s14 = inlined_call_operand.vmem [shape: f32[1,64], index: 14, kind: input, shape index: {}]
  %s15 = inlined_call_operand.hbm [shape: f32[64,128], index: 15, kind: input, shape index: {}]
  %s16 = inlined_call_operand.vmem [shape: f32[1,128], index: 16, kind: input, shape index: {}]
  %s17 = inlined_call_operand.hbm [shape: f32[8,128], index: 17, kind: output, shape index: {}]
  %s18 = sld [smem:[#allocation0]]
  $region110: #{tpu_custom_call.1} parent=0
    _
  %s20 = ssub.s32 1, %s18
  %s21 = scalar_select 0, %s20, %s18
  $region1: #{tpu_custom_call.1} parent=0
    #allocation2 [shape = 'u8[147456]{0}', space=vmem, size = 0x24000, scoped, tag = 'input window, operand 3, single buffered']
    #allocation3 [shape = 's32[1]{0}', space=sflag, size = 0x4, scoped, tag = 'scoped memory for tpu_custom_call.1']
    #allocation4 [shape = 's32[1]{0}', space=sflag, size = 0x4, scoped, tag = 'scoped memory for tpu_custom_call.1']
    #allocation5 [shape = 'u8[98304]{0}', space=vmem, size = 0x18000, scoped, tag = 'input window, operand 4, single buffered']
    #allocation6 [shape = 's32[1]{0}', space=sflag, size = 0x4, scoped, tag = 'scoped memory for tpu_custom_call.1']
    #allocation7 [shape = 'u8[98304]{0}', space=vmem, size = 0x18000, scoped, tag = 'input window, operand 5, single buffered']
    #allocation8 [shape = 'u8[163840]{0}', space=vmem, size = 0x28000, scoped, tag = 'input window, operand 6, single buffered']
    #allocation9 [shape = 's32[1]{0}', space=sflag, size = 0x4, scoped, tag = 'scoped memory for tpu_custom_call.1']
    #allocation10 [shape = 'u8[368640]{0}', space=vmem, size = 0x5a000, scoped, tag = 'input window, operand 7, single buffered']
    #allocation11 [shape = 'u8[49152]{0}', space=vmem, size = 0xc000, scoped, tag = 'input window, operand 9, single buffered']
    #allocation12 [shape = 's32[1]{0}', space=sflag, size = 0x4, scoped, tag = 'scoped memory for tpu_custom_call.1']
    #allocation13 [shape = 'u8[32768]{0}', space=vmem, size = 0x8000, scoped, tag = 'input window, operand 10, single buffered']
    #allocation14 [shape = 'u8[32768]{0}', space=vmem, size = 0x8000, scoped, tag = 'input window, operand 15, single buffered']
    #allocation15 [shape = 's32[1]{0}', space=sflag, size = 0x4, scoped, tag = 'scoped memory for tpu_custom_call.1']
    #allocation16 [shape = 'u8[4096]{0}', space=vmem, size = 0x1000, scoped, tag = 'output window, operand 0, single buffered']
    %22 = vsyncpa [#allocation3], 0
    %23 = vsyncpa [#allocation6], 0
    %24 = vsyncpa [#allocation9], 0
    %25 = vsyncpa [#allocation12], 0
    %26 = vsyncpa [#allocation15], 0
    %27 = vsyncpa [#allocation4], 0
    // Predicated region
    $region2: #{tpu_custom_call.1} parent=1 // pred_check
      _
    $region3: #{tpu_custom_call.1} parent=1 // pred_check_branch
      %29 = sbr.rel (0) target = $region5
    $region4: #{tpu_custom_call.1} parent=1 // pred_region
      _
    $region5: #{tpu_custom_call.1} parent=1 // pred_fallthru
      _
    // Predicated region
    $region6: #{tpu_custom_call.1} parent=1 // pred_check
      _
    $region7: #{tpu_custom_call.1} parent=1 // pred_check_branch
      %31 = sbr.rel (0) target = $region9
    $region8: #{tpu_custom_call.1} parent=1 // pred_region
      _
    $region9: #{tpu_custom_call.1} parent=1 // pred_fallthru
      _
    // Predicated region
    $region10: #{tpu_custom_call.1} parent=1 // pred_check
      _
    $region11: #{tpu_custom_call.1} parent=1 // pred_check_branch
      %33 = sbr.rel (0) target = $region13
    $region12: #{tpu_custom_call.1} parent=1 // pred_region
      _
    $region13: #{tpu_custom_call.1} parent=1 // pred_fallthru
      _
    // Predicated region
    $region14: #{tpu_custom_call.1} parent=1 // pred_check
      _
    $region15: #{tpu_custom_call.1} parent=1 // pred_check_branch
      %35 = sbr.rel (0) target = $region17
    $region16: #{tpu_custom_call.1} parent=1 // pred_region
      %s37 = ssub.s32 4608, 4608
      %38 = vsyncadd [#allocation3], %s37
      %s39 = sshll.u32 [#allocation2], 4
      %s40 = int_to_ptr.vmem [resolvable:$true] %s39
      %45 = dma.hbm_to_vmem [thread:$0]  %s3, 4608, %s40, [#allocation3], 256, 256, 16
    $region17: #{tpu_custom_call.1} parent=1 // pred_fallthru
      _
    // Predicated region
    $region18: #{tpu_custom_call.1} parent=1 // pred_check
      _
    $region19: #{tpu_custom_call.1} parent=1 // pred_check_branch
      %47 = sbr.rel (0) target = $region21
    $region20: #{tpu_custom_call.1} parent=1 // pred_region
      %s49 = ssub.s32 3072, 3072
      %50 = vsyncadd [#allocation6], %s49
      %s51 = sshll.u32 [#allocation5], 4
      %s52 = int_to_ptr.vmem [resolvable:$true] %s51
      %57 = dma.hbm_to_vmem [thread:$0]  %s4, 3072, %s52, [#allocation6], 256, 256, 16
    $region21: #{tpu_custom_call.1} parent=1 // pred_fallthru
      _
    // Predicated region
    $region22: #{tpu_custom_call.1} parent=1 // pred_check
      _
    $region23: #{tpu_custom_call.1} parent=1 // pred_check_branch
      %59 = sbr.rel (0) target = $region25
    $region24: #{tpu_custom_call.1} parent=1 // pred_region
      %s61 = ssub.s32 3072, 3072
      %62 = vsyncadd [#allocation6], %s61
      %s63 = sshll.u32 [#allocation7], 4
      %s64 = int_to_ptr.vmem [resolvable:$true] %s63
      %69 = dma.hbm_to_vmem [thread:$0]  %s5, 3072, %s64, [#allocation6], 256, 256, 16
    $region25: #{tpu_custom_call.1} parent=1 // pred_fallthru
      _
    // Predicated region
    $region26: #{tpu_custom_call.1} parent=1 // pred_check
      _
    $region27: #{tpu_custom_call.1} parent=1 // pred_check_branch
      %71 = sbr.rel (0) target = $region29
    $region28: #{tpu_custom_call.1} parent=1 // pred_region
      %s73 = ssub.s32 5120, 5120
      %74 = vsyncadd [#allocation9], %s73
      %s75 = sshll.u32 [#allocation8], 4
      %s76 = int_to_ptr.vmem [resolvable:$true] %s75
      %81 = dma.hbm_to_vmem [thread:$0]  %s6, 5120, %s76, [#allocation9], 128, 128, 8
    $region29: #{tpu_custom_call.1} parent=1 // pred_fallthru
      _
    // Predicated region
    $region30: #{tpu_custom_call.1} parent=1 // pred_check
      _
    $region31: #{tpu_custom_call.1} parent=1 // pred_check_branch
      %83 = sbr.rel (0) target = $region33
    $region32: #{tpu_custom_call.1} parent=1 // pred_region
      %s85 = ssub.s32 11520, 11520
      %86 = vsyncadd [#allocation9], %s85
      %s87 = sshll.u32 [#allocation10], 4
      %s88 = int_to_ptr.vmem [resolvable:$true] %s87
      %93 = dma.hbm_to_vmem [thread:$0]  %s7, 11520, %s88, [#allocation9], 128, 128, 8
    $region33: #{tpu_custom_call.1} parent=1 // pred_fallthru
      _
    // Predicated region
    $region34: #{tpu_custom_call.1} parent=1 // pred_check
      _
    $region35: #{tpu_custom_call.1} parent=1 // pred_check_branch
      %95 = sbr.rel (0) target = $region37
    $region36: #{tpu_custom_call.1} parent=1 // pred_region
      _
    $region37: #{tpu_custom_call.1} parent=1 // pred_fallthru
      _
    // Predicated region
    $region38: #{tpu_custom_call.1} parent=1 // pred_check
      _
    $region39: #{tpu_custom_call.1} parent=1 // pred_check_branch
      %97 = sbr.rel (0) target = $region41
    $region40: #{tpu_custom_call.1} parent=1 // pred_region
      %s99 = ssub.s32 1536, 1536
      %100 = vsyncadd [#allocation12], %s99
      %s101 = sshll.u32 [#allocation11], 4
      %s102 = int_to_ptr.vmem [resolvable:$true] %s101
      %107 = dma.hbm_to_vmem [thread:$0]  %s9, 1536, %s102, [#allocation12], 128, 128, 8
    $region41: #{tpu_custom_call.1} parent=1 // pred_fallthru
      _
    // Predicated region
    $region42: #{tpu_custom_call.1} parent=1 // pred_check
      _
    $region43: #{tpu_custom_call.1} parent=1 // pred_check_branch
      %109 = sbr.rel (0) target = $region45
    $region44: #{tpu_custom_call.1} parent=1 // pred_region
      %s111 = ssub.s32 1024, 1024
      %112 = vsyncadd [#allocation12], %s111
      %s113 = sshll.u32 [#allocation13], 4
      %s114 = int_to_ptr.vmem [resolvable:$true] %s113
      %119 = dma.hbm_to_vmem [thread:$0]  %s10, 1024, %s114, [#allocation12], 128, 128, 8
    $region45: #{tpu_custom_call.1} parent=1 // pred_fallthru
      _
    // Predicated region
    $region46: #{tpu_custom_call.1} parent=1 // pred_check
      _
    $region47: #{tpu_custom_call.1} parent=1 // pred_check_branch
      %121 = sbr.rel (0) target = $region49
    $region48: #{tpu_custom_call.1} parent=1 // pred_region
      _
    $region49: #{tpu_custom_call.1} parent=1 // pred_fallthru
      _
    // Predicated region
    $region50: #{tpu_custom_call.1} parent=1 // pred_check
      _
    $region51: #{tpu_custom_call.1} parent=1 // pred_check_branch
      %123 = sbr.rel (0) target = $region53
    $region52: #{tpu_custom_call.1} parent=1 // pred_region
      _
    $region53: #{tpu_custom_call.1} parent=1 // pred_fallthru
      _
    // Predicated region
    $region54: #{tpu_custom_call.1} parent=1 // pred_check
      _
    $region55: #{tpu_custom_call.1} parent=1 // pred_check_branch
      %125 = sbr.rel (0) target = $region57
    $region56: #{tpu_custom_call.1} parent=1 // pred_region
      _
    $region57: #{tpu_custom_call.1} parent=1 // pred_fallthru
      _
    // Predicated region
    $region58: #{tpu_custom_call.1} parent=1 // pred_check
      _
    $region59: #{tpu_custom_call.1} parent=1 // pred_check_branch
      %127 = sbr.rel (0) target = $region61
    $region60: #{tpu_custom_call.1} parent=1 // pred_region
      _
    $region61: #{tpu_custom_call.1} parent=1 // pred_fallthru
      _
    // Predicated region
    $region62: #{tpu_custom_call.1} parent=1 // pred_check
      _
    $region63: #{tpu_custom_call.1} parent=1 // pred_check_branch
      %129 = sbr.rel (0) target = $region65
    $region64: #{tpu_custom_call.1} parent=1 // pred_region
      %s131 = ssub.s32 1024, 1024
      %132 = vsyncadd [#allocation15], %s131
      %s133 = sshll.u32 [#allocation14], 4
      %s134 = int_to_ptr.vmem [resolvable:$true] %s133
      %139 = dma.hbm_to_vmem [thread:$0]  %s15, 1024, %s134, [#allocation15], 128, 128, 8
    $region65: #{tpu_custom_call.1} parent=1 // pred_fallthru
      _
    // Predicated region
    $region66: #{tpu_custom_call.1} parent=1 // pred_check
      _
    $region67: #{tpu_custom_call.1} parent=1 // pred_check_branch
      %141 = sbr.rel (0) target = $region69
    $region68: #{tpu_custom_call.1} parent=1 // pred_region
      _
    $region69: #{tpu_custom_call.1} parent=1 // pred_fallthru
      _
    // Predicated region
    $region70: #{tpu_custom_call.1} parent=1 // pred_check
      _
    $region71: #{tpu_custom_call.1} parent=1 // pred_check_branch
      %143 = sbr.rel (0) target = $region73
    $region72: #{tpu_custom_call.1} parent=1 // pred_region
      %144 = dma.done [#allocation3], 4608
    $region73: #{tpu_custom_call.1} parent=1 // pred_fallthru
      _
    // Predicated region
    $region74: #{tpu_custom_call.1} parent=1 // pred_check
      _
    $region75: #{tpu_custom_call.1} parent=1 // pred_check_branch
      %146 = sbr.rel (0) target = $region77
    $region76: #{tpu_custom_call.1} parent=1 // pred_region
      %147 = dma.done [#allocation6], 3072
    $region77: #{tpu_custom_call.1} parent=1 // pred_fallthru
      _
    // Predicated region
    $region78: #{tpu_custom_call.1} parent=1 // pred_check
      _
    $region79: #{tpu_custom_call.1} parent=1 // pred_check_branch
      %149 = sbr.rel (0) target = $region81
    $region80: #{tpu_custom_call.1} parent=1 // pred_region
      %150 = dma.done [#allocation6], 3072
    $region81: #{tpu_custom_call.1} parent=1 // pred_fallthru
      _
    // Predicated region
    $region82: #{tpu_custom_call.1} parent=1 // pred_check
      _
    $region83: #{tpu_custom_call.1} parent=1 // pred_check_branch
      %152 = sbr.rel (0) target = $region85
    $region84: #{tpu_custom_call.1} parent=1 // pred_region
      %153 = dma.done [#allocation9], 5120
    $region85: #{tpu_custom_call.1} parent=1 // pred_fallthru
      _
    // Predicated region
    $region86: #{tpu_custom_call.1} parent=1 // pred_check
      _
    $region87: #{tpu_custom_call.1} parent=1 // pred_check_branch
      %155 = sbr.rel (0) target = $region89
    $region88: #{tpu_custom_call.1} parent=1 // pred_region
      %156 = dma.done [#allocation9], 11520
    $region89: #{tpu_custom_call.1} parent=1 // pred_fallthru
      _
    // Predicated region
    $region90: #{tpu_custom_call.1} parent=1 // pred_check
      _
    $region91: #{tpu_custom_call.1} parent=1 // pred_check_branch
      %158 = sbr.rel (0) target = $region93
    $region92: #{tpu_custom_call.1} parent=1 // pred_region
      %159 = dma.done [#allocation12], 1536
    $region93: #{tpu_custom_call.1} parent=1 // pred_fallthru
      _
    // Predicated region
    $region94: #{tpu_custom_call.1} parent=1 // pred_check
      _
    $region95: #{tpu_custom_call.1} parent=1 // pred_check_branch
      %161 = sbr.rel (0) target = $region97
    $region96: #{tpu_custom_call.1} parent=1 // pred_region
      %162 = dma.done [#allocation12], 1024
    $region97: #{tpu_custom_call.1} parent=1 // pred_fallthru
      _
    // Predicated region
    $region98: #{tpu_custom_call.1} parent=1 // pred_check
      _
    $region99: #{tpu_custom_call.1} parent=1 // pred_check_branch
      %164 = sbr.rel (0) target = $region101
    $region100: #{tpu_custom_call.1} parent=1 // pred_region
      %165 = dma.done [#allocation15], 1024
    $region101: #{tpu_custom_call.1} parent=1 // pred_fallthru
      _
    %v166 = vld [vmem:[%s0] sm:$0xff]
    %v167 = vld [vmem:[%s0 + $0x8] sm:$0xff]
    %v168 = vld [vmem:[%s0 + $0x10] sm:$0xff]
    %v169 = vld [vmem:[%s0 + $0x18] sm:$0xf]
    %v170 = vld [vmem:[%s0 + $0x20] sm:$0xff]
    %v171 = vld [vmem:[%s0 + $0x28] sm:$0xff]
    %v172 = vld [vmem:[%s0 + $0x30] sm:$0xff]
    %v173 = vld [vmem:[%s0 + $0x38] sm:$0xf]
    %v174 = vld [vmem:[%s0 + $0x40] sm:$0xff]
    %v175 = vld [vmem:[%s0 + $0x48] sm:$0xff]
    %v176 = vld [vmem:[%s0 + $0x50] sm:$0xff]
    %v177 = vld [vmem:[%s0 + $0x58] sm:$0xf]
    %v178 = vld [vmem:[%s0 + $0x60] sm:$0xff]
    %v179 = vld [vmem:[%s0 + $0x68] sm:$0xff]
    %v180 = vld [vmem:[%s0 + $0x70] sm:$0xff]
    %v181 = vld [vmem:[%s0 + $0x78] sm:$0xf]
    %v182 = vld [vmem:[%s0 + $0x80] sm:$0xff]
    %v183 = vld [vmem:[%s0 + $0x88] sm:$0xff]
    %v184 = vld [vmem:[%s0 + $0x90] sm:$0xff]
    %v185 = vld [vmem:[%s0 + $0x98] sm:$0xf]
    %v186 = vld [vmem:[%s0 + $0xa0] sm:$0xff]
    %v187 = vld [vmem:[%s0 + $0xa8] sm:$0xff]
    %v188 = vld [vmem:[%s0 + $0xb0] sm:$0xff]
    %v189 = vld [vmem:[%s0 + $0xb8] sm:$0xf]
    %v190 = vld [vmem:[%s0 + $0xc0] sm:$0xff]
    %v191 = vld [vmem:[%s0 + $0xc8] sm:$0xff]
    %v192 = vld [vmem:[%s0 + $0xd0] sm:$0xff]
    %v193 = vld [vmem:[%s0 + $0xd8] sm:$0xf]
    %v194 = vld [vmem:[%s0 + $0xe0] sm:$0xff]
    %v195 = vld [vmem:[%s0 + $0xe8] sm:$0xff]
    %v196 = vld [vmem:[%s0 + $0xf0] sm:$0xff]
    %v197 = vld [vmem:[%s0 + $0xf8] sm:$0xf]
    %v198 = vld [vmem:[%s1] sm:$0xff]
    %v199 = vld [vmem:[%s1 + $0x8] sm:$0xff]
    %v200 = vld [vmem:[%s1 + $0x10] sm:$0xff]
    %v201 = vld [vmem:[%s1 + $0x18] sm:$0xff]
    %v202 = vld [vmem:[%s1 + $0x20] sm:$0xff]
    %v203 = vld [vmem:[%s1 + $0x28] sm:$0xff]
    %v204 = vld [vmem:[%s1 + $0x30] sm:$0xf]
    %v205 = vld [vmem:[%s1 + $0x38] sm:$0xf]
    %vm238 = vcmask 1046528
    %v239 = vrot.slane %v166, 1
    %v240 = vrot.slane %v167, 1
    %v241 = vsel %vm238, %v239, %v240
    %v242 = vrot.slane %v168, 1
    %v243 = vsel %vm238, %v240, %v242
    %v244 = vrot.slane %v169, 1
    %v245 = vsel %vm238, %v242, %v244
    %v246 = vrot.slane %v170, 1
    %v247 = vrot.slane %v171, 1
    %v248 = vsel %vm238, %v246, %v247
    %v249 = vrot.slane %v172, 1
    %v250 = vsel %vm238, %v247, %v249
    %v251 = vrot.slane %v173, 1
    %v252 = vsel %vm238, %v249, %v251
    %v253 = vrot.slane %v174, 1
    %v254 = vrot.slane %v175, 1
    %v255 = vsel %vm238, %v253, %v254
    %v256 = vrot.slane %v176, 1
    %v257 = vsel %vm238, %v254, %v256
    %v258 = vrot.slane %v177, 1
    %v259 = vsel %vm238, %v256, %v258
    %v260 = vrot.slane %v178, 1
    %v261 = vrot.slane %v179, 1
    %v262 = vsel %vm238, %v260, %v261
    %v263 = vrot.slane %v180, 1
    %v264 = vsel %vm238, %v261, %v263
    %v265 = vrot.slane %v181, 1
    %v266 = vsel %vm238, %v263, %v265
    %v267 = vrot.slane %v182, 1
    %v268 = vrot.slane %v183, 1
    %v269 = vsel %vm238, %v267, %v268
    %v270 = vrot.slane %v184, 1
    %v271 = vsel %vm238, %v268, %v270
    %v272 = vrot.slane %v185, 1
    %v273 = vsel %vm238, %v270, %v272
    %v274 = vrot.slane %v186, 1
    %v275 = vrot.slane %v187, 1
    %v276 = vsel %vm238, %v274, %v275
    %v277 = vrot.slane %v188, 1
    %v278 = vsel %vm238, %v275, %v277
    %v279 = vrot.slane %v189, 1
    %v280 = vsel %vm238, %v277, %v279
    %v281 = vrot.slane %v190, 1
    %v282 = vrot.slane %v191, 1
    %v283 = vsel %vm238, %v281, %v282
    %v284 = vrot.slane %v192, 1
    %v285 = vsel %vm238, %v282, %v284
    %v286 = vrot.slane %v193, 1
    %v287 = vsel %vm238, %v284, %v286
    %v288 = vrot.slane %v194, 1
    %v289 = vrot.slane %v195, 1
    %v290 = vsel %vm238, %v288, %v289
    %v291 = vrot.slane %v196, 1
    %v292 = vsel %vm238, %v289, %v291
    %v293 = vrot.slane %v197, 1
    %v294 = vsel %vm238, %v291, %v293
    %s295 = scalar_lea.vmem %s1, 64
    %v296 = vld [vmem:[%s295] sm:$0xff]
    %v297 = vld [vmem:[%s295 + $0x8] sm:$0xff]
    %v298 = vld [vmem:[%s295 + $0x10] sm:$0xff]
    %v299 = vld [vmem:[%s295 + $0x18] sm:$0xff]
    %v300 = vld [vmem:[%s295 + $0x20] sm:$0xff]
    %v301 = vld [vmem:[%s295 + $0x28] sm:$0xff]
    %v302 = vld [vmem:[%s295 + $0x30] sm:$0xf]
    %v303 = vld [vmem:[%s295 + $0x38] sm:$0xf]
    %vm304 = vcmask 228352
    %v305 = vsel %vm304, %v241, 0
    %v307 = vsel %vm304, %v243, 0
    %v309 = vsel %vm304, %v245, 0
    %v311 = vsel %vm304, %v248, 0
    %v313 = vsel %vm304, %v250, 0
    %v315 = vsel %vm304, %v252, 0
    %v317 = vsel %vm304, %v255, 0
    %v319 = vsel %vm304, %v257, 0
    %v321 = vsel %vm304, %v259, 0
    %v323 = vsel %vm304, %v262, 0
    %v325 = vsel %vm304, %v264, 0
    %v327 = vsel %vm304, %v266, 0
    %v329 = vsel %vm304, %v269, 0
    %v331 = vsel %vm304, %v271, 0
    %v333 = vsel %vm304, %v273, 0
    %v335 = vsel %vm304, %v276, 0
    %v337 = vsel %vm304, %v278, 0
    %v339 = vsel %vm304, %v280, 0
    %v341 = vsel %vm304, %v283, 0
    %v343 = vsel %vm304, %v285, 0
    %v345 = vsel %vm304, %v287, 0
    %v347 = vsel %vm304, %v290, 0
    %v349 = vsel %vm304, %v292, 0
    %v351 = vsel %vm304, %v294, 0
    %vm353 = vcmask 1043456
    %v355 = vsel %vm353, %v302, 0
    %v358 = vsel %vm353, %v303, 0
    %360 = vmatprep.subr.mxu0 %v297
    %361 = vmatpush1.msra.mxu0 %v296
    %362 = vmatprep.subr.mxu0 %v299
    %363 = vmatpush1.msra.mxu0 %v298
    %364 = vmatprep.subr.mxu0 %v301
    %365 = vmatpush1.msra.mxu0 %v300
    %366 = vmatprep.subr.mxu0 %v358
    %367 = vmatpush1.msra.mxu0 %v355
    %368 = vmatprep.subr.mxu0 0.0
    %369 = vmatpush1.msra.mxu0 0.0
    %370 = vmatprep.subr.mxu0 0.0
    %371 = vmatpush1.msra.mxu0 0.0
    %372 = vmatprep.subr.mxu0 0.0
    %373 = vmatpush1.msra.mxu0 0.0
    %374 = vmatprep.subr.mxu0 0.0
    %375 = vmatpush1.msra.mxu0 0.0
    %376 = vmatprep.subr.mxu0 0.0
    %377 = vmatpush1.msra.mxu0 0.0
    %378 = vmatprep.subr.mxu0 0.0
    %379 = vmatpush1.msra.mxu0 0.0
    %380 = vmatprep.subr.mxu0 0.0
    %381 = vmatpush1.msra.mxu0 0.0
    %382 = vmatprep.subr.mxu0 0.0
    %383 = vmatpush1.msra.mxu0 0.0
    %384 = vmatprep.subr.mxu0 0.0
    %385 = vmatpush1.msra.mxu0 0.0
    %386 = vmatprep.subr.mxu0 0.0
    %387 = vmatpush1.msra.mxu0 0.0
    %388 = vmatprep.subr.mxu0 0.0
    %389 = vmatpush1.msra.mxu0 0.0
    %390 = vmatprep.subr.mxu0 0.0
    %391 = vmatpush1.msra.mxu0 0.0
    %392 = vmatprep.subr.mxu0 0.0
    %393 = vmatpush1.msra.mxu0 0.0
    %394 = vmatprep.subr.mxu0 0.0
    %395 = vmatpush1.msra.mxu0 0.0
    %396 = vmatprep.subr.mxu0 0.0
    %397 = vmatpush1.msra.mxu0 0.0
    %398 = vmatprep.subr.mxu0 0.0
    %399 = vmatpush1.msra.mxu0 0.0
    %400 = vmatprep.subr.mxu0 0.0
    %401 = vmatpush1.msra.mxu0 0.0
    %402 = vmatprep.subr.mxu0 0.0
    %403 = vmatpush1.msra.mxu0 0.0
    %404 = vmatprep.subr.mxu0 0.0
    %405 = vmatpush1.msra.mxu0 0.0
    %406 = vmatprep.subr.mxu0 0.0
    %407 = vmatpush1.msra.mxu0 0.0
    %408 = vmatprep.subr.mxu0 0.0
    %409 = vmatpush1.msra.mxu0 0.0
    %410 = vmatprep.subr.mxu0 0.0
    %411 = vmatpush1.msra.mxu0 0.0
    %412 = vmatprep.subr.mxu0 0.0
    %413 = vmatpush1.msra.mxu0 0.0
    %414 = vmatprep.subr.mxu0 0.0
    %415 = vmatpush1.msra.mxu0 0.0
    %416 = vmatprep.subr.mxu0 0.0
    %417 = vmatpush1.msra.mxu0 0.0
    %418 = vmatprep.subr.mxu0 0.0
    %419 = vmatpush1.msra.mxu0 0.0
    %420 = vmatprep.subr.mxu0 0.0
    %421 = vmatpush1.msra.mxu0 0.0
    %422 = vmatprep.subr.mxu0 0.0
    %423 = vmatpush1.msra.mxu0 0.0
    %424 = vmatprep.mubr.f32.mxu0 0.0
    %425 = vmatmul.mubr.f32.gmra.mrb[0].mxu0 %v305
    %v426 = vpop.f32.mrb[0].mxu0
    %v427 = vadd.f32 0.0, %v426
    %v428 = vpop.f32.mrb[0].mxu0
    %v429 = vadd.f32 0.0, %v428
    %430 = vmatprep.mubr.f32.mxu0 0.0
    %431 = vmatmul.mubr.f32.gmra.mrb[0].mxu0 %v307
    %v432 = vpop.f32.mrb[0].mxu0
    %v433 = vadd.f32 0.0, %v432
    %v434 = vpop.f32.mrb[0].mxu0
    %v435 = vadd.f32 0.0, %v434
    %436 = vmatprep.mubr.f32.mxu0 0.0
    %437 = vmatmul.mubr.f32.gmra.mrb[0].mxu0 %v309
    %v438 = vpop.f32.mrb[0].mxu0
    %v439 = vadd.f32 0.0, %v438
    %v440 = vpop.f32.mrb[0].mxu0
    %v441 = vadd.f32 0.0, %v440
    %442 = vmatprep.mubr.f32.mxu0 0.0
    %443 = vmatmul.mubr.f32.gmra.mrb[0].mxu0 %v311
    %v444 = vpop.f32.mrb[0].mxu0
    %v445 = vadd.f32 0.0, %v444
    %v446 = vpop.f32.mrb[0].mxu0
    %v447 = vadd.f32 0.0, %v446
    %448 = vmatprep.mubr.f32.mxu0 0.0
    %449 = vmatmul.mubr.f32.gmra.mrb[0].mxu0 %v313
    %v450 = vpop.f32.mrb[0].mxu0
    %v451 = vadd.f32 0.0, %v450
    %v452 = vpop.f32.mrb[0].mxu0
    %v453 = vadd.f32 0.0, %v452
    %454 = vmatprep.mubr.f32.mxu0 0.0
    %455 = vmatmul.mubr.f32.gmra.mrb[0].mxu0 %v315
    %v456 = vpop.f32.mrb[0].mxu0
    %v457 = vadd.f32 0.0, %v456
    %v458 = vpop.f32.mrb[0].mxu0
    %v459 = vadd.f32 0.0, %v458
    %460 = vmatprep.mubr.f32.mxu0 0.0
    %461 = vmatmul.mubr.f32.gmra.mrb[0].mxu0 %v317
    %v462 = vpop.f32.mrb[0].mxu0
    %v463 = vadd.f32 0.0, %v462
    %v464 = vpop.f32.mrb[0].mxu0
    %v465 = vadd.f32 0.0, %v464
    %466 = vmatprep.mubr.f32.mxu0 0.0
    %467 = vmatmul.mubr.f32.gmra.mrb[0].mxu0 %v319
    %v468 = vpop.f32.mrb[0].mxu0
    %v469 = vadd.f32 0.0, %v468
    %v470 = vpop.f32.mrb[0].mxu0
    %v471 = vadd.f32 0.0, %v470
    %472 = vmatprep.mubr.f32.mxu0 0.0
    %473 = vmatmul.mubr.f32.gmra.mrb[0].mxu0 %v321
    %v474 = vpop.f32.mrb[0].mxu0
    %v475 = vadd.f32 0.0, %v474
    %v476 = vpop.f32.mrb[0].mxu0
    %v477 = vadd.f32 0.0, %v476
    %478 = vmatprep.mubr.f32.mxu0 0.0
    %479 = vmatmul.mubr.f32.gmra.mrb[0].mxu0 %v323
    %v480 = vpop.f32.mrb[0].mxu0
    %v481 = vadd.f32 0.0, %v480
    %v482 = vpop.f32.mrb[0].mxu0
    %v483 = vadd.f32 0.0, %v482
    %484 = vmatprep.mubr.f32.mxu0 0.0
    %485 = vmatmul.mubr.f32.gmra.mrb[0].mxu0 %v325
    %v486 = vpop.f32.mrb[0].mxu0
    %v487 = vadd.f32 0.0, %v486
    %v488 = vpop.f32.mrb[0].mxu0
    %v489 = vadd.f32 0.0, %v488
    %490 = vmatprep.mubr.f32.mxu0 0.0
    %491 = vmatmul.mubr.f32.gmra.mrb[0].mxu0 %v327
    %v492 = vpop.f32.mrb[0].mxu0
    %v493 = vadd.f32 0.0, %v492
    %v494 = vpop.f32.mrb[0].mxu0
    %v495 = vadd.f32 0.0, %v494
    %496 = vmatprep.mubr.f32.mxu0 0.0
    %497 = vmatmul.mubr.f32.gmra.mrb[0].mxu0 %v329
    %v498 = vpop.f32.mrb[0].mxu0
    %v499 = vadd.f32 0.0, %v498
    %v500 = vpop.f32.mrb[0].mxu0
    %v501 = vadd.f32 0.0, %v500
    %502 = vmatprep.mubr.f32.mxu0 0.0
    %503 = vmatmul.mubr.f32.gmra.mrb[0].mxu0 %v331
    %v504 = vpop.f32.mrb[0].mxu0
    %v505 = vadd.f32 0.0, %v504
    %v506 = vpop.f32.mrb[0].mxu0
    %v507 = vadd.f32 0.0, %v506
    %508 = vmatprep.mubr.f32.mxu0 0.0
    %509 = vmatmul.mubr.f32.gmra.mrb[0].mxu0 %v333
    %v510 = vpop.f32.mrb[0].mxu0
    %v511 = vadd.f32 0.0, %v510
    %v512 = vpop.f32.mrb[0].mxu0
    %v513 = vadd.f32 0.0, %v512
    %514 = vmatprep.mubr.f32.mxu0 0.0
    %515 = vmatmul.mubr.f32.gmra.mrb[0].mxu0 %v335
    %v516 = vpop.f32.mrb[0].mxu0
    %v517 = vadd.f32 0.0, %v516
    %v518 = vpop.f32.mrb[0].mxu0
    %v519 = vadd.f32 0.0, %v518
    %520 = vmatprep.mubr.f32.mxu0 0.0
    %521 = vmatmul.mubr.f32.gmra.mrb[0].mxu0 %v337
    %v522 = vpop.f32.mrb[0].mxu0
    %v523 = vadd.f32 0.0, %v522
    %v524 = vpop.f32.mrb[0].mxu0
    %v525 = vadd.f32 0.0, %v524
    %526 = vmatprep.mubr.f32.mxu0 0.0
    %527 = vmatmul.mubr.f32.gmra.mrb[0].mxu0 %v339
    %v528 = vpop.f32.mrb[0].mxu0
    %v529 = vadd.f32 0.0, %v528
    %v530 = vpop.f32.mrb[0].mxu0
    %v531 = vadd.f32 0.0, %v530
    %532 = vmatprep.mubr.f32.mxu0 0.0
    %533 = vmatmul.mubr.f32.gmra.mrb[0].mxu0 %v341
    %v534 = vpop.f32.mrb[0].mxu0
    %v535 = vadd.f32 0.0, %v534
    %v536 = vpop.f32.mrb[0].mxu0
    %v537 = vadd.f32 0.0, %v536
    %538 = vmatprep.mubr.f32.mxu0 0.0
    %539 = vmatmul.mubr.f32.gmra.mrb[0].mxu0 %v343
    %v540 = vpop.f32.mrb[0].mxu0
    %v541 = vadd.f32 0.0, %v540
    %v542 = vpop.f32.mrb[0].mxu0
    %v543 = vadd.f32 0.0, %v542
    %544 = vmatprep.mubr.f32.mxu0 0.0
    %545 = vmatmul.mubr.f32.gmra.mrb[0].mxu0 %v345
    %v546 = vpop.f32.mrb[0].mxu0
    %v547 = vadd.f32 0.0, %v546
    %v548 = vpop.f32.mrb[0].mxu0
    %v549 = vadd.f32 0.0, %v548
    %550 = vmatprep.mubr.f32.mxu0 0.0
    %551 = vmatmul.mubr.f32.gmra.mrb[0].mxu0 %v347
    %v552 = vpop.f32.mrb[0].mxu0
    %v553 = vadd.f32 0.0, %v552
    %v554 = vpop.f32.mrb[0].mxu0
    %v555 = vadd.f32 0.0, %v554
    %556 = vmatprep.mubr.f32.mxu0 0.0
    %557 = vmatmul.mubr.f32.gmra.mrb[0].mxu0 %v349
    %v558 = vpop.f32.mrb[0].mxu0
    %v559 = vadd.f32 0.0, %v558
    %v560 = vpop.f32.mrb[0].mxu0
    %v561 = vadd.f32 0.0, %v560
    %562 = vmatprep.mubr.f32.mxu0 0.0
    %563 = vmatmul.mubr.f32.gmra.mrb[0].mxu0 %v351
    %v564 = vpop.f32.mrb[0].mxu0
    %v565 = vadd.f32 0.0, %v564
    %v566 = vpop.f32.mrb[0].mxu0
    %v567 = vadd.f32 0.0, %v566
    %568 = vdwg.mxu0
    %v569 = vsel %vm304, %v166, 0
    %v571 = vsel %vm304, %v167, 0
    %v573 = vsel %vm304, %v168, 0
    %v575 = vsel %vm304, %v170, 0
    %v577 = vsel %vm304, %v171, 0
    %v579 = vsel %vm304, %v172, 0
    %v581 = vsel %vm304, %v174, 0
    %v583 = vsel %vm304, %v175, 0
    %v585 = vsel %vm304, %v176, 0
    %v587 = vsel %vm304, %v178, 0
    %v589 = vsel %vm304, %v179, 0
    %v591 = vsel %vm304, %v180, 0
    %v593 = vsel %vm304, %v182, 0
    %v595 = vsel %vm304, %v183, 0
    %v597 = vsel %vm304, %v184, 0
    %v599 = vsel %vm304, %v186, 0
    %v601 = vsel %vm304, %v187, 0
    %v603 = vsel %vm304, %v188, 0
    %v605 = vsel %vm304, %v190, 0
    %v607 = vsel %vm304, %v191, 0
    %v609 = vsel %vm304, %v192, 0
    %v611 = vsel %vm304, %v194, 0
    %v613 = vsel %vm304, %v195, 0
    %v615 = vsel %vm304, %v196, 0
    %v618 = vsel %vm353, %v204, 0
    %v621 = vsel %vm353, %v205, 0
    %623 = vmatprep.subr.mxu0 %v199
    %624 = vmatpush1.msra.mxu0 %v198
    %625 = vmatprep.subr.mxu0 %v201
    %626 = vmatpush1.msra.mxu0 %v200
    %627 = vmatprep.subr.mxu0 %v203
    %628 = vmatpush1.msra.mxu0 %v202
    %629 = vmatprep.subr.mxu0 %v621
    %630 = vmatpush1.msra.mxu0 %v618
    %631 = vmatprep.subr.mxu0 0.0
    %632 = vmatpush1.msra.mxu0 0.0
    %633 = vmatprep.subr.mxu0 0.0
    %634 = vmatpush1.msra.mxu0 0.0
    %635 = vmatprep.subr.mxu0 0.0
    %636 = vmatpush1.msra.mxu0 0.0
    %637 = vmatprep.subr.mxu0 0.0
    %638 = vmatpush1.msra.mxu0 0.0
    %639 = vmatprep.subr.mxu0 0.0
    %640 = vmatpush1.msra.mxu0 0.0
    %641 = vmatprep.subr.mxu0 0.0
    %642 = vmatpush1.msra.mxu0 0.0
    %643 = vmatprep.subr.mxu0 0.0
    %644 = vmatpush1.msra.mxu0 0.0
    %645 = vmatprep.subr.mxu0 0.0
    %646 = vmatpush1.msra.mxu0 0.0
    %647 = vmatprep.subr.mxu0 0.0
    %648 = vmatpush1.msra.mxu0 0.0
    %649 = vmatprep.subr.mxu0 0.0
    %650 = vmatpush1.msra.mxu0 0.0
    %651 = vmatprep.subr.mxu0 0.0
    %652 = vmatpush1.msra.mxu0 0.0
    %653 = vmatprep.subr.mxu0 0.0
    %654 = vmatpush1.msra.mxu0 0.0
    %655 = vmatprep.subr.mxu0 0.0
    %656 = vmatpush1.msra.mxu0 0.0
    %657 = vmatprep.subr.mxu0 0.0
    %658 = vmatpush1.msra.mxu0 0.0
    %659 = vmatprep.subr.mxu0 0.0
    %660 = vmatpush1.msra.mxu0 0.0
    %661 = vmatprep.subr.mxu0 0.0
    %662 = vmatpush1.msra.mxu0 0.0
    %663 = vmatprep.subr.mxu0 0.0
    %664 = vmatpush1.msra.mxu0 0.0
    %665 = vmatprep.subr.mxu0 0.0
    %666 = vmatpush1.msra.mxu0 0.0
    %667 = vmatprep.subr.mxu0 0.0
    %668 = vmatpush1.msra.mxu0 0.0
    %669 = vmatprep.subr.mxu0 0.0
    %670 = vmatpush1.msra.mxu0 0.0
    %671 = vmatprep.subr.mxu0 0.0
    %672 = vmatpush1.msra.mxu0 0.0
    %673 = vmatprep.subr.mxu0 0.0
    %674 = vmatpush1.msra.mxu0 0.0
    %675 = vmatprep.subr.mxu0 0.0
    %676 = vmatpush1.msra.mxu0 0.0
    %677 = vmatprep.subr.mxu0 0.0
    %678 = vmatpush1.msra.mxu0 0.0
    %679 = vmatprep.subr.mxu0 0.0
    %680 = vmatpush1.msra.mxu0 0.0
    %681 = vmatprep.subr.mxu0 0.0
    %682 = vmatpush1.msra.mxu0 0.0
    %683 = vmatprep.subr.mxu0 0.0
    %684 = vmatpush1.msra.mxu0 0.0
    %685 = vmatprep.subr.mxu0 0.0
    %686 = vmatpush1.msra.mxu0 0.0
    %687 = vmatprep.mubr.f32.mxu0 0.0
    %688 = vmatmul.mubr.f32.gmra.mrb[0].mxu0 %v569
    %v689 = vpop.f32.mrb[0].mxu0
    %v690 = vadd.f32 %v427, %v689
    %v691 = vpop.f32.mrb[0].mxu0
    %v692 = vadd.f32 %v429, %v691
    %693 = vmatprep.mubr.f32.mxu0 0.0
    %694 = vmatmul.mubr.f32.gmra.mrb[0].mxu0 %v571
    %v695 = vpop.f32.mrb[0].mxu0
    %v696 = vadd.f32 %v433, %v695
    %v697 = vpop.f32.mrb[0].mxu0
    %v698 = vadd.f32 %v435, %v697
    %699 = vmatprep.mubr.f32.mxu0 0.0
    %700 = vmatmul.mubr.f32.gmra.mrb[0].mxu0 %v573
    %v701 = vpop.f32.mrb[0].mxu0
    %v702 = vadd.f32 %v439, %v701
    %v703 = vpop.f32.mrb[0].mxu0
    %v704 = vadd.f32 %v441, %v703
    %705 = vmatprep.mubr.f32.mxu0 0.0
    %706 = vmatmul.mubr.f32.gmra.mrb[0].mxu0 %v575
    %v707 = vpop.f32.mrb[0].mxu0
    %v708 = vadd.f32 %v445, %v707
    %v709 = vpop.f32.mrb[0].mxu0
    %v710 = vadd.f32 %v447, %v709
    %711 = vmatprep.mubr.f32.mxu0 0.0
    %712 = vmatmul.mubr.f32.gmra.mrb[0].mxu0 %v577
    %v713 = vpop.f32.mrb[0].mxu0
    %v714 = vadd.f32 %v451, %v713
    %v715 = vpop.f32.mrb[0].mxu0
    %v716 = vadd.f32 %v453, %v715
    %717 = vmatprep.mubr.f32.mxu0 0.0
    %718 = vmatmul.mubr.f32.gmra.mrb[0].mxu0 %v579
    %v719 = vpop.f32.mrb[0].mxu0
    %v720 = vadd.f32 %v457, %v719
    %v721 = vpop.f32.mrb[0].mxu0
    %v722 = vadd.f32 %v459, %v721
    %723 = vmatprep.mubr.f32.mxu0 0.0
    %724 = vmatmul.mubr.f32.gmra.mrb[0].mxu0 %v581
    %v725 = vpop.f32.mrb[0].mxu0
    %v726 = vadd.f32 %v463, %v725
    %v727 = vpop.f32.mrb[0].mxu0
    %v728 = vadd.f32 %v465, %v727
    %729 = vmatprep.mubr.f32.mxu0 0.0
    %730 = vmatmul.mubr.f32.gmra.mrb[0].mxu0 %v583
    %v731 = vpop.f32.mrb[0].mxu0
    %v732 = vadd.f32 %v469, %v731
    %v733 = vpop.f32.mrb[0].mxu0
    %v734 = vadd.f32 %v471, %v733
    %735 = vmatprep.mubr.f32.mxu0 0.0
    %736 = vmatmul.mubr.f32.gmra.mrb[0].mxu0 %v585
    %v737 = vpop.f32.mrb[0].mxu0
    %v738 = vadd.f32 %v475, %v737
    %v739 = vpop.f32.mrb[0].mxu0
    %v740 = vadd.f32 %v477, %v739
    %741 = vmatprep.mubr.f32.mxu0 0.0
    %742 = vmatmul.mubr.f32.gmra.mrb[0].mxu0 %v587
    %v743 = vpop.f32.mrb[0].mxu0
    %v744 = vadd.f32 %v481, %v743
    %v745 = vpop.f32.mrb[0].mxu0
    %v746 = vadd.f32 %v483, %v745
    %747 = vmatprep.mubr.f32.mxu0 0.0
    %748 = vmatmul.mubr.f32.gmra.mrb[0].mxu0 %v589
    %v749 = vpop.f32.mrb[0].mxu0
    %v750 = vadd.f32 %v487, %v749
    %v751 = vpop.f32.mrb[0].mxu0
    %v752 = vadd.f32 %v489, %v751
    %753 = vmatprep.mubr.f32.mxu0 0.0
    %754 = vmatmul.mubr.f32.gmra.mrb[0].mxu0 %v591
    %v755 = vpop.f32.mrb[0].mxu0
    %v756 = vadd.f32 %v493, %v755
    %v757 = vpop.f32.mrb[0].mxu0
    %v758 = vadd.f32 %v495, %v757
    %759 = vmatprep.mubr.f32.mxu0 0.0
    %760 = vmatmul.mubr.f32.gmra.mrb[0].mxu0 %v593
    %v761 = vpop.f32.mrb[0].mxu0
    %v762 = vadd.f32 %v499, %v761
    %v763 = vpop.f32.mrb[0].mxu0
    %v764 = vadd.f32 %v501, %v763
    %765 = vmatprep.mubr.f32.mxu0 0.0
    %766 = vmatmul.mubr.f32.gmra.mrb[0].mxu0 %v595
    %v767 = vpop.f32.mrb[0].mxu0
    %v768 = vadd.f32 %v505, %v767
    %v769 = vpop.f32.mrb[0].mxu0
    %v770 = vadd.f32 %v507, %v769
    %771 = vmatprep.mubr.f32.mxu0 0.0
    %772 = vmatmul.mubr.f32.gmra.mrb[0].mxu0 %v597
    %v773 = vpop.f32.mrb[0].mxu0
    %v774 = vadd.f32 %v511, %v773
    %v775 = vpop.f32.mrb[0].mxu0
    %v776 = vadd.f32 %v513, %v775
    %777 = vmatprep.mubr.f32.mxu0 0.0
    %778 = vmatmul.mubr.f32.gmra.mrb[0].mxu0 %v599
    %v779 = vpop.f32.mrb[0].mxu0
    %v780 = vadd.f32 %v517, %v779
    %v781 = vpop.f32.mrb[0].mxu0
    %v782 = vadd.f32 %v519, %v781
    %783 = vmatprep.mubr.f32.mxu0 0.0
    %784 = vmatmul.mubr.f32.gmra.mrb[0].mxu0 %v601
    %v785 = vpop.f32.mrb[0].mxu0
    %v786 = vadd.f32 %v523, %v785
    %v787 = vpop.f32.mrb[0].mxu0
    %v788 = vadd.f32 %v525, %v787
    %789 = vmatprep.mubr.f32.mxu0 0.0
    %790 = vmatmul.mubr.f32.gmra.mrb[0].mxu0 %v603
    %v791 = vpop.f32.mrb[0].mxu0
    %v792 = vadd.f32 %v529, %v791
    %v793 = vpop.f32.mrb[0].mxu0
    %v794 = vadd.f32 %v531, %v793
    %795 = vmatprep.mubr.f32.mxu0 0.0
    %796 = vmatmul.mubr.f32.gmra.mrb[0].mxu0 %v605
    %v797 = vpop.f32.mrb[0].mxu0
    %v798 = vadd.f32 %v535, %v797
    %v799 = vpop.f32.mrb[0].mxu0
    %v800 = vadd.f32 %v537, %v799
    %801 = vmatprep.mubr.f32.mxu0 0.0
    %802 = vmatmul.mubr.f32.gmra.mrb[0].mxu0 %v607
    %v803 = vpop.f32.mrb[0].mxu0
    %v804 = vadd.f32 %v541, %v803
    %v805 = vpop.f32.mrb[0].mxu0
    %v806 = vadd.f32 %v543, %v805
    %807 = vmatprep.mubr.f32.mxu0 0.0
    %808 = vmatmul.mubr.f32.gmra.mrb[0].mxu0 %v609
    %v809 = vpop.f32.mrb[0].mxu0
    %v810 = vadd.f32 %v547, %v809
    %v811 = vpop.f32.mrb[0].mxu0
    %v812 = vadd.f32 %v549, %v811
    %813 = vmatprep.mubr.f32.mxu0 0.0
    %814 = vmatmul.mubr.f32.gmra.mrb[0].mxu0 %v611
    %v815 = vpop.f32.mrb[0].mxu0
    %v816 = vadd.f32 %v553, %v815
    %v817 = vpop.f32.mrb[0].mxu0
    %v818 = vadd.f32 %v555, %v817
    %819 = vmatprep.mubr.f32.mxu0 0.0
    %820 = vmatmul.mubr.f32.gmra.mrb[0].mxu0 %v613
    %v821 = vpop.f32.mrb[0].mxu0
    %v822 = vadd.f32 %v559, %v821
    %v823 = vpop.f32.mrb[0].mxu0
    %v824 = vadd.f32 %v561, %v823
    %825 = vmatprep.mubr.f32.mxu0 0.0
    %826 = vmatmul.mubr.f32.gmra.mrb[0].mxu0 %v615
    %v827 = vpop.f32.mrb[0].mxu0
    %v828 = vadd.f32 %v565, %v827
    %v829 = vpop.f32.mrb[0].mxu0
    %v830 = vadd.f32 %v567, %v829
    %831 = vdwg.mxu0
    %vm832 = vcmask 1045504
    %v833 = vrot.slane %v166, 2
    %v834 = vrot.slane %v167, 2
    %v835 = vsel %vm832, %v833, %v834
    %v836 = vrot.slane %v168, 2
    %v837 = vsel %vm832, %v834, %v836
    %v838 = vrot.slane %v169, 2
    %v839 = vsel %vm832, %v836, %v838
    %v840 = vrot.slane %v170, 2
    %v841 = vrot.slane %v171, 2
    %v842 = vsel %vm832, %v840, %v841
    %v843 = vrot.slane %v172, 2
    %v844 = vsel %vm832, %v841, %v843
    %v845 = vrot.slane %v173, 2
    %v846 = vsel %vm832, %v843, %v845
    %v847 = vrot.slane %v174, 2
    %v848 = vrot.slane %v175, 2
    %v849 = vsel %vm832, %v847, %v848
    %v850 = vrot.slane %v176, 2
    %v851 = vsel %vm832, %v848, %v850
    %v852 = vrot.slane %v177, 2
    %v853 = vsel %vm832, %v850, %v852
    %v854 = vrot.slane %v178, 2
    %v855 = vrot.slane %v179, 2
    %v856 = vsel %vm832, %v854, %v855
    %v857 = vrot.slane %v180, 2
    %v858 = vsel %vm832, %v855, %v857
    %v859 = vrot.slane %v181, 2
    %v860 = vsel %vm832, %v857, %v859
    %v861 = vrot.slane %v182, 2
    %v862 = vrot.slane %v183, 2
    %v863 = vsel %vm832, %v861, %v862
    %v864 = vrot.slane %v184, 2
    %v865 = vsel %vm832, %v862, %v864
    %v866 = vrot.slane %v185, 2
    %v867 = vsel %vm832, %v864, %v866
    %v868 = vrot.slane %v186, 2
    %v869 = vrot.slane %v187, 2
    %v870 = vsel %vm832, %v868, %v869
    %v871 = vrot.slane %v188, 2
    %v872 = vsel %vm832, %v869, %v871
    %v873 = vrot.slane %v189, 2
    %v874 = vsel %vm832, %v871, %v873
    %v875 = vrot.slane %v190, 2
    %v876 = vrot.slane %v191, 2
    %v877 = vsel %vm832, %v875, %v876
    %v878 = vrot.slane %v192, 2
    %v879 = vsel %vm832, %v876, %v878
    %v880 = vrot.slane %v193, 2
    %v881 = vsel %vm832, %v878, %v880
    %v882 = vrot.slane %v194, 2
    %v883 = vrot.slane %v195, 2
    %v884 = vsel %vm832, %v882, %v883
    %v885 = vrot.slane %v196, 2
    %v886 = vsel %vm832, %v883, %v885
    %v887 = vrot.slane %v197, 2
    %v888 = vsel %vm832, %v885, %v887
    %s889 = scalar_lea.vmem %s1, 128
    %v890 = vld [vmem:[%s889] sm:$0xff]
    %v891 = vld [vmem:[%s889 + $0x8] sm:$0xff]
    %v892 = vld [vmem:[%s889 + $0x10] sm:$0xff]
    %v893 = vld [vmem:[%s889 + $0x18] sm:$0xff]
    %v894 = vld [vmem:[%s889 + $0x20] sm:$0xff]
    %v895 = vld [vmem:[%s889 + $0x28] sm:$0xff]
    %v896 = vld [vmem:[%s889 + $0x30] sm:$0xf]
    %v897 = vld [vmem:[%s889 + $0x38] sm:$0xf]
    %v898 = vsel %vm304, %v835, 0
    %v900 = vsel %vm304, %v837, 0
    %v902 = vsel %vm304, %v839, 0
    %v904 = vsel %vm304, %v842, 0
    %v906 = vsel %vm304, %v844, 0
    %v908 = vsel %vm304, %v846, 0
    %v910 = vsel %vm304, %v849, 0
    %v912 = vsel %vm304, %v851, 0
    %v914 = vsel %vm304, %v853, 0
    %v916 = vsel %vm304, %v856, 0
    %v918 = vsel %vm304, %v858, 0
    %v920 = vsel %vm304, %v860, 0
    %v922 = vsel %vm304, %v863, 0
    %v924 = vsel %vm304, %v865, 0
    %v926 = vsel %vm304, %v867, 0
    %v928 = vsel %vm304, %v870, 0
    %v930 = vsel %vm304, %v872, 0
    %v932 = vsel %vm304, %v874, 0
    %v934 = vsel %vm304, %v877, 0
    %v936 = vsel %vm304, %v879, 0
    %v938 = vsel %vm304, %v881, 0
    %v940 = vsel %vm304, %v884, 0
    %v942 = vsel %vm304, %v886, 0
    %v944 = vsel %vm304, %v888, 0
    %v947 = vsel %vm353, %v896, 0
    %v950 = vsel %vm353, %v897, 0
    %952 = vmatprep.subr.mxu0 %v891
    %953 = vmatpush1.msra.mxu0 %v890
    %954 = vmatprep.subr.mxu0 %v893
    %955 = vmatpush1.msra.mxu0 %v892
    %956 = vmatprep.subr.mxu0 %v895
    %957 = vmatpush1.msra.mxu0 %v894
    %958 = vmatprep.subr.mxu0 %v950
    %959 = vmatpush1.msra.mxu0 %v947
    %960 = vmatprep.subr.mxu0 0.0
    %961 = vmatpush1.msra.mxu0 0.0
    %962 = vmatprep.subr.mxu0 0.0
    %963 = vmatpush1.msra.mxu0 0.0
    %964 = vmatprep.subr.mxu0 0.0
    %965 = vmatpush1.msra.mxu0 0.0
    %966 = vmatprep.subr.mxu0 0.0
    %967 = vmatpush1.msra.mxu0 0.0
    %968 = vmatprep.subr.mxu0 0.0
    %969 = vmatpush1.msra.mxu0 0.0
    %970 = vmatprep.subr.mxu0 0.0
    %971 = vmatpush1.msra.mxu0 0.0
    %972 = vmatprep.subr.mxu0 0.0
    %973 = vmatpush1.msra.mxu0 0.0
    %974 = vmatprep.subr.mxu0 0.0
    %975 = vmatpush1.msra.mxu0 0.0
    %976 = vmatprep.subr.mxu0 0.0
    %977 = vmatpush1.msra.mxu0 0.0
    %978 = vmatprep.subr.mxu0 0.0
    %979 = vmatpush1.msra.mxu0 0.0
    %980 = vmatprep.subr.mxu0 0.0
    %981 = vmatpush1.msra.mxu0 0.0
    %982 = vmatprep.subr.mxu0 0.0
    %983 = vmatpush1.msra.mxu0 0.0
    %984 = vmatprep.subr.mxu0 0.0
    %985 = vmatpush1.msra.mxu0 0.0
    %986 = vmatprep.subr.mxu0 0.0
    %987 = vmatpush1.msra.mxu0 0.0
    %988 = vmatprep.subr.mxu0 0.0
    %989 = vmatpush1.msra.mxu0 0.0
    %990 = vmatprep.subr.mxu0 0.0
    %991 = vmatpush1.msra.mxu0 0.0
    %992 = vmatprep.subr.mxu0 0.0
    %993 = vmatpush1.msra.mxu0 0.0
    %994 = vmatprep.subr.mxu0 0.0
    %995 = vmatpush1.msra.mxu0 0.0
    %996 = vmatprep.subr.mxu0 0.0
    %997 = vmatpush1.msra.mxu0 0.0
    %998 = vmatprep.subr.mxu0 0.0
    %999 = vmatpush1.msra.mxu0 0.0
    %1000 = vmatprep.subr.mxu0 0.0
    %1001 = vmatpush1.msra.mxu0 0.0
    %1002 = vmatprep.subr.mxu0 0.0
    %1003 = vmatpush1.msra.mxu0 0.0
    %1004 = vmatprep.subr.mxu0 0.0
    %1005 = vmatpush1.msra.mxu0 0.0
    %1006 = vmatprep.subr.mxu0 0.0
    %1007 = vmatpush1.msra.mxu0 0.0
    %1008 = vmatprep.subr.mxu0 0.0
    %1009 = vmatpush1.msra.mxu0 0.0
    %1010 = vmatprep.subr.mxu0 0.0
    %1011 = vmatpush1.msra.mxu0 0.0
    %1012 = vmatprep.subr.mxu0 0.0
    %1013 = vmatpush1.msra.mxu0 0.0
    %1014 = vmatprep.subr.mxu0 0.0
    %1015 = vmatpush1.msra.mxu0 0.0
    %1016 = vmatprep.mubr.f32.mxu0 0.0
    %1017 = vmatmul.mubr.f32.gmra.mrb[0].mxu0 %v898
    %v1018 = vpop.f32.mrb[0].mxu0
    %v1019 = vadd.f32 0.0, %v1018
    %v1020 = vpop.f32.mrb[0].mxu0
    %v1021 = vadd.f32 0.0, %v1020
    %1022 = vmatprep.mubr.f32.mxu0 0.0
    %1023 = vmatmul.mubr.f32.gmra.mrb[0].mxu0 %v900
    %v1024 = vpop.f32.mrb[0].mxu0
    %v1025 = vadd.f32 0.0, %v1024
    %v1026 = vpop.f32.mrb[0].mxu0
    %v1027 = vadd.f32 0.0, %v1026
    %1028 = vmatprep.mubr.f32.mxu0 0.0
    %1029 = vmatmul.mubr.f32.gmra.mrb[0].mxu0 %v902
    %v1030 = vpop.f32.mrb[0].mxu0
    %v1031 = vadd.f32 0.0, %v1030
    %v1032 = vpop.f32.mrb[0].mxu0
    %v1033 = vadd.f32 0.0, %v1032
    %1034 = vmatprep.mubr.f32.mxu0 0.0
    %1035 = vmatmul.mubr.f32.gmra.mrb[0].mxu0 %v904
    %v1036 = vpop.f32.mrb[0].mxu0
    %v1037 = vadd.f32 0.0, %v1036
    %v1038 = vpop.f32.mrb[0].mxu0
    %v1039 = vadd.f32 0.0, %v1038
    %1040 = vmatprep.mubr.f32.mxu0 0.0
    %1041 = vmatmul.mubr.f32.gmra.mrb[0].mxu0 %v906
    %v1042 = vpop.f32.mrb[0].mxu0
    %v1043 = vadd.f32 0.0, %v1042
    %v1044 = vpop.f32.mrb[0].mxu0
    %v1045 = vadd.f32 0.0, %v1044
    %1046 = vmatprep.mubr.f32.mxu0 0.0
    %1047 = vmatmul.mubr.f32.gmra.mrb[0].mxu0 %v908
    %v1048 = vpop.f32.mrb[0].mxu0
    %v1049 = vadd.f32 0.0, %v1048
    %v1050 = vpop.f32.mrb[0].mxu0
    %v1051 = vadd.f32 0.0, %v1050
    %1052 = vmatprep.mubr.f32.mxu0 0.0
    %1053 = vmatmul.mubr.f32.gmra.mrb[0].mxu0 %v910
    %v1054 = vpop.f32.mrb[0].mxu0
    %v1055 = vadd.f32 0.0, %v1054
    %v1056 = vpop.f32.mrb[0].mxu0
    %v1057 = vadd.f32 0.0, %v1056
    %1058 = vmatprep.mubr.f32.mxu0 0.0
    %1059 = vmatmul.mubr.f32.gmra.mrb[0].mxu0 %v912
    %v1060 = vpop.f32.mrb[0].mxu0
    %v1061 = vadd.f32 0.0, %v1060
    %v1062 = vpop.f32.mrb[0].mxu0
    %v1063 = vadd.f32 0.0, %v1062
    %1064 = vmatprep.mubr.f32.mxu0 0.0
    %1065 = vmatmul.mubr.f32.gmra.mrb[0].mxu0 %v914
    %v1066 = vpop.f32.mrb[0].mxu0
    %v1067 = vadd.f32 0.0, %v1066
    %v1068 = vpop.f32.mrb[0].mxu0
    %v1069 = vadd.f32 0.0, %v1068
    %1070 = vmatprep.mubr.f32.mxu0 0.0
    %1071 = vmatmul.mubr.f32.gmra.mrb[0].mxu0 %v916
    %v1072 = vpop.f32.mrb[0].mxu0
    %v1073 = vadd.f32 0.0, %v1072
    %v1074 = vpop.f32.mrb[0].mxu0
    %v1075 = vadd.f32 0.0, %v1074
    %1076 = vmatprep.mubr.f32.mxu0 0.0
    %1077 = vmatmul.mubr.f32.gmra.mrb[0].mxu0 %v918
    %v1078 = vpop.f32.mrb[0].mxu0
    %v1079 = vadd.f32 0.0, %v1078
    %v1080 = vpop.f32.mrb[0].mxu0
    %v1081 = vadd.f32 0.0, %v1080
    %1082 = vmatprep.mubr.f32.mxu0 0.0
    %1083 = vmatmul.mubr.f32.gmra.mrb[0].mxu0 %v920
    %v1084 = vpop.f32.mrb[0].mxu0
    %v1085 = vadd.f32 0.0, %v1084
    %v1086 = vpop.f32.mrb[0].mxu0
    %v1087 = vadd.f32 0.0, %v1086
    %1088 = vmatprep.mubr.f32.mxu0 0.0
    %1089 = vmatmul.mubr.f32.gmra.mrb[0].mxu0 %v922
    %v1090 = vpop.f32.mrb[0].mxu0
    %v1091 = vadd.f32 0.0, %v1090
    %v1092 = vpop.f32.mrb[0].mxu0
    %v1093 = vadd.f32 0.0, %v1092
    %1094 = vmatprep.mubr.f32.mxu0 0.0
    %1095 = vmatmul.mubr.f32.gmra.mrb[0].mxu0 %v924
    %v1096 = vpop.f32.mrb[0].mxu0
    %v1097 = vadd.f32 0.0, %v1096
    %v1098 = vpop.f32.mrb[0].mxu0
    %v1099 = vadd.f32 0.0, %v1098
    %1100 = vmatprep.mubr.f32.mxu0 0.0
    %1101 = vmatmul.mubr.f32.gmra.mrb[0].mxu0 %v926
    %v1102 = vpop.f32.mrb[0].mxu0
    %v1103 = vadd.f32 0.0, %v1102
    %v1104 = vpop.f32.mrb[0].mxu0
    %v1105 = vadd.f32 0.0, %v1104
    %1106 = vmatprep.mubr.f32.mxu0 0.0
    %1107 = vmatmul.mubr.f32.gmra.mrb[0].mxu0 %v928
    %v1108 = vpop.f32.mrb[0].mxu0
    %v1109 = vadd.f32 0.0, %v1108
    %v1110 = vpop.f32.mrb[0].mxu0
    %v1111 = vadd.f32 0.0, %v1110
    %1112 = vmatprep.mubr.f32.mxu0 0.0
    %1113 = vmatmul.mubr.f32.gmra.mrb[0].mxu0 %v930
    %v1114 = vpop.f32.mrb[0].mxu0
    %v1115 = vadd.f32 0.0, %v1114
    %v1116 = vpop.f32.mrb[0].mxu0
    %v1117 = vadd.f32 0.0, %v1116
    %1118 = vmatprep.mubr.f32.mxu0 0.0
    %1119 = vmatmul.mubr.f32.gmra.mrb[0].mxu0 %v932
    %v1120 = vpop.f32.mrb[0].mxu0
    %v1121 = vadd.f32 0.0, %v1120
    %v1122 = vpop.f32.mrb[0].mxu0
    %v1123 = vadd.f32 0.0, %v1122
    %1124 = vmatprep.mubr.f32.mxu0 0.0
    %1125 = vmatmul.mubr.f32.gmra.mrb[0].mxu0 %v934
    %v1126 = vpop.f32.mrb[0].mxu0
    %v1127 = vadd.f32 0.0, %v1126
    %v1128 = vpop.f32.mrb[0].mxu0
    %v1129 = vadd.f32 0.0, %v1128
    %1130 = vmatprep.mubr.f32.mxu0 0.0
    %1131 = vmatmul.mubr.f32.gmra.mrb[0].mxu0 %v936
    %v1132 = vpop.f32.mrb[0].mxu0
    %v1133 = vadd.f32 0.0, %v1132
    %v1134 = vpop.f32.mrb[0].mxu0
    %v1135 = vadd.f32 0.0, %v1134
    %1136 = vmatprep.mubr.f32.mxu0 0.0
    %1137 = vmatmul.mubr.f32.gmra.mrb[0].mxu0 %v938
    %v1138 = vpop.f32.mrb[0].mxu0
    %v1139 = vadd.f32 0.0, %v1138
    %v1140 = vpop.f32.mrb[0].mxu0
    %v1141 = vadd.f32 0.0, %v1140
    %1142 = vmatprep.mubr.f32.mxu0 0.0
    %1143 = vmatmul.mubr.f32.gmra.mrb[0].mxu0 %v940
    %v1144 = vpop.f32.mrb[0].mxu0
    %v1145 = vadd.f32 0.0, %v1144
    %v1146 = vpop.f32.mrb[0].mxu0
    %v1147 = vadd.f32 0.0, %v1146
    %1148 = vmatprep.mubr.f32.mxu0 0.0
    %1149 = vmatmul.mubr.f32.gmra.mrb[0].mxu0 %v942
    %v1150 = vpop.f32.mrb[0].mxu0
    %v1151 = vadd.f32 0.0, %v1150
    %v1152 = vpop.f32.mrb[0].mxu0
    %v1153 = vadd.f32 0.0, %v1152
    %1154 = vmatprep.mubr.f32.mxu0 0.0
    %1155 = vmatmul.mubr.f32.gmra.mrb[0].mxu0 %v944
    %v1156 = vpop.f32.mrb[0].mxu0
    %v1157 = vadd.f32 0.0, %v1156
    %v1158 = vpop.f32.mrb[0].mxu0
    %v1159 = vadd.f32 0.0, %v1158
    %1160 = vdwg.mxu0
    %v1161 = vadd.f32 %v690, %v1019
    %v1162 = vadd.f32 %v692, %v1021
    %v1163 = vadd.f32 %v696, %v1025
    %v1164 = vadd.f32 %v698, %v1027
    %v1165 = vadd.f32 %v702, %v1031
    %v1166 = vadd.f32 %v704, %v1033
    %v1167 = vadd.f32 %v708, %v1037
    %v1168 = vadd.f32 %v710, %v1039
    %v1169 = vadd.f32 %v714, %v1043
    %v1170 = vadd.f32 %v716, %v1045
    %v1171 = vadd.f32 %v720, %v1049
    %v1172 = vadd.f32 %v722, %v1051
    %v1173 = vadd.f32 %v726, %v1055
    %v1174 = vadd.f32 %v728, %v1057
    %v1175 = vadd.f32 %v732, %v1061
    %v1176 = vadd.f32 %v734, %v1063
    %v1177 = vadd.f32 %v738, %v1067
    %v1178 = vadd.f32 %v740, %v1069
    %v1179 = vadd.f32 %v744, %v1073
    %v1180 = vadd.f32 %v746, %v1075
    %v1181 = vadd.f32 %v750, %v1079
    %v1182 = vadd.f32 %v752, %v1081
    %v1183 = vadd.f32 %v756, %v1085
    %v1184 = vadd.f32 %v758, %v1087
    %v1185 = vadd.f32 %v762, %v1091
    %v1186 = vadd.f32 %v764, %v1093
    %v1187 = vadd.f32 %v768, %v1097
    %v1188 = vadd.f32 %v770, %v1099
    %v1189 = vadd.f32 %v774, %v1103
    %v1190 = vadd.f32 %v776, %v1105
    %v1191 = vadd.f32 %v780, %v1109
    %v1192 = vadd.f32 %v782, %v1111
    %v1193 = vadd.f32 %v786, %v1115
    %v1194 = vadd.f32 %v788, %v1117
    %v1195 = vadd.f32 %v792, %v1121
    %v1196 = vadd.f32 %v794, %v1123
    %v1197 = vadd.f32 %v798, %v1127
    %v1198 = vadd.f32 %v800, %v1129
    %v1199 = vadd.f32 %v804, %v1133
    %v1200 = vadd.f32 %v806, %v1135
    %v1201 = vadd.f32 %v810, %v1139
    %v1202 = vadd.f32 %v812, %v1141
    %v1203 = vadd.f32 %v816, %v1145
    %v1204 = vadd.f32 %v818, %v1147
    %v1205 = vadd.f32 %v822, %v1151
    %v1206 = vadd.f32 %v824, %v1153
    %v1207 = vadd.f32 %v828, %v1157
    %v1208 = vadd.f32 %v830, %v1159
    %vm1209 = vcmask 1044480
    %v1210 = vrot.slane %v166, 3
    %v1211 = vrot.slane %v167, 3
    %v1212 = vsel %vm1209, %v1210, %v1211
    %v1213 = vrot.slane %v168, 3
    %v1214 = vsel %vm1209, %v1211, %v1213
    %v1215 = vrot.slane %v169, 3
    %v1216 = vsel %vm1209, %v1213, %v1215
    %v1217 = vrot.slane %v170, 3
    %v1218 = vrot.slane %v171, 3
    %v1219 = vsel %vm1209, %v1217, %v1218
    %v1220 = vrot.slane %v172, 3
    %v1221 = vsel %vm1209, %v1218, %v1220
    %v1222 = vrot.slane %v173, 3
    %v1223 = vsel %vm1209, %v1220, %v1222
    %v1224 = vrot.slane %v174, 3
    %v1225 = vrot.slane %v175, 3
    %v1226 = vsel %vm1209, %v1224, %v1225
    %v1227 = vrot.slane %v176, 3
    %v1228 = vsel %vm1209, %v1225, %v1227
    %v1229 = vrot.slane %v177, 3
    %v1230 = vsel %vm1209, %v1227, %v1229
    %v1231 = vrot.slane %v178, 3
    %v1232 = vrot.slane %v179, 3
    %v1233 = vsel %vm1209, %v1231, %v1232
    %v1234 = vrot.slane %v180, 3
    %v1235 = vsel %vm1209, %v1232, %v1234
    %v1236 = vrot.slane %v181, 3
    %v1237 = vsel %vm1209, %v1234, %v1236
    %v1238 = vrot.slane %v182, 3
    %v1239 = vrot.slane %v183, 3
    %v1240 = vsel %vm1209, %v1238, %v1239
    %v1241 = vrot.slane %v184, 3
    %v1242 = vsel %vm1209, %v1239, %v1241
    %v1243 = vrot.slane %v185, 3
    %v1244 = vsel %vm1209, %v1241, %v1243
    %v1245 = vrot.slane %v186, 3
    %v1246 = vrot.slane %v187, 3
    %v1247 = vsel %vm1209, %v1245, %v1246
    %v1248 = vrot.slane %v188, 3
    %v1249 = vsel %vm1209, %v1246, %v1248
    %v1250 = vrot.slane %v189, 3
    %v1251 = vsel %vm1209, %v1248, %v1250
    %v1252 = vrot.slane %v190, 3
    %v1253 = vrot.slane %v191, 3
    %v1254 = vsel %vm1209, %v1252, %v1253
    %v1255 = vrot.slane %v192, 3
    %v1256 = vsel %vm1209, %v1253, %v1255
    %v1257 = vrot.slane %v193, 3
    %v1258 = vsel %vm1209, %v1255, %v1257
    %v1259 = vrot.slane %v194, 3
    %v1260 = vrot.slane %v195, 3
    %v1261 = vsel %vm1209, %v1259, %v1260
    %v1262 = vrot.slane %v196, 3
    %v1263 = vsel %vm1209, %v1260, %v1262
    %v1264 = vrot.slane %v197, 3
    %v1265 = vsel %vm1209, %v1262, %v1264
    %s1266 = scalar_lea.vmem %s1, 192
    %v1267 = vld [vmem:[%s1266] sm:$0xff]
    %v1268 = vld [vmem:[%s1266 + $0x8] sm:$0xff]
    %v1269 = vld [vmem:[%s1266 + $0x10] sm:$0xff]
    %v1270 = vld [vmem:[%s1266 + $0x18] sm:$0xff]
    %v1271 = vld [vmem:[%s1266 + $0x20] sm:$0xff]
    %v1272 = vld [vmem:[%s1266 + $0x28] sm:$0xff]
    %v1273 = vld [vmem:[%s1266 + $0x30] sm:$0xf]
    %v1274 = vld [vmem:[%s1266 + $0x38] sm:$0xf]
    %v1275 = vsel %vm304, %v1212, 0
    %v1277 = vsel %vm304, %v1214, 0
    %v1279 = vsel %vm304, %v1216, 0
    %v1281 = vsel %vm304, %v1219, 0
    %v1283 = vsel %vm304, %v1221, 0
    %v1285 = vsel %vm304, %v1223, 0
    %v1287 = vsel %vm304, %v1226, 0
    %v1289 = vsel %vm304, %v1228, 0
    %v1291 = vsel %vm304, %v1230, 0
    %v1293 = vsel %vm304, %v1233, 0
    %v1295 = vsel %vm304, %v1235, 0
    %v1297 = vsel %vm304, %v1237, 0
    %v1299 = vsel %vm304, %v1240, 0
    %v1301 = vsel %vm304, %v1242, 0
    %v1303 = vsel %vm304, %v1244, 0
    %v1305 = vsel %vm304, %v1247, 0
    %v1307 = vsel %vm304, %v1249, 0
    %v1309 = vsel %vm304, %v1251, 0
    %v1311 = vsel %vm304, %v1254, 0
    %v1313 = vsel %vm304, %v1256, 0
    %v1315 = vsel %vm304, %v1258, 0
    %v1317 = vsel %vm304, %v1261, 0
    %v1319 = vsel %vm304, %v1263, 0
    %v1321 = vsel %vm304, %v1265, 0
    %v1324 = vsel %vm353, %v1273, 0
    %v1327 = vsel %vm353, %v1274, 0
    %1329 = vmatprep.subr.mxu0 %v1268
    %1330 = vmatpush1.msra.mxu0 %v1267
    %1331 = vmatprep.subr.mxu0 %v1270
    %1332 = vmatpush1.msra.mxu0 %v1269
    %1333 = vmatprep.subr.mxu0 %v1272
    %1334 = vmatpush1.msra.mxu0 %v1271
    %1335 = vmatprep.subr.mxu0 %v1327
    %1336 = vmatpush1.msra.mxu0 %v1324
    %1337 = vmatprep.subr.mxu0 0.0
    %1338 = vmatpush1.msra.mxu0 0.0
    %1339 = vmatprep.subr.mxu0 0.0
    %1340 = vmatpush1.msra.mxu0 0.0
    %1341 = vmatprep.subr.mxu0 0.0
    %1342 = vmatpush1.msra.mxu0 0.0
    %1343 = vmatprep.subr.mxu0 0.0
    %1344 = vmatpush1.msra.mxu0 0.0
    %1345 = vmatprep.subr.mxu0 0.0
    %1346 = vmatpush1.msra.mxu0 0.0
    %1347 = vmatprep.subr.mxu0 0.0
    %1348 = vmatpush1.msra.mxu0 0.0
    %1349 = vmatprep.subr.mxu0 0.0
    %1350 = vmatpush1.msra.mxu0 0.0
    %1351 = vmatprep.subr.mxu0 0.0
    %1352 = vmatpush1.msra.mxu0 0.0
    %1353 = vmatprep.subr.mxu0 0.0
    %1354 = vmatpush1.msra.mxu0 0.0
    %1355 = vmatprep.subr.mxu0 0.0
    %1356 = vmatpush1.msra.mxu0 0.0
    %1357 = vmatprep.subr.mxu0 0.0
    %1358 = vmatpush1.msra.mxu0 0.0
    %1359 = vmatprep.subr.mxu0 0.0
    %1360 = vmatpush1.msra.mxu0 0.0
    %1361 = vmatprep.subr.mxu0 0.0
    %1362 = vmatpush1.msra.mxu0 0.0
    %1363 = vmatprep.subr.mxu0 0.0
    %1364 = vmatpush1.msra.mxu0 0.0
    %1365 = vmatprep.subr.mxu0 0.0
    %1366 = vmatpush1.msra.mxu0 0.0
    %1367 = vmatprep.subr.mxu0 0.0
    %1368 = vmatpush1.msra.mxu0 0.0
    %1369 = vmatprep.subr.mxu0 0.0
    %1370 = vmatpush1.msra.mxu0 0.0
    %1371 = vmatprep.subr.mxu0 0.0
    %1372 = vmatpush1.msra.mxu0 0.0
    %1373 = vmatprep.subr.mxu0 0.0
    %1374 = vmatpush1.msra.mxu0 0.0
    %1375 = vmatprep.subr.mxu0 0.0
    %1376 = vmatpush1.msra.mxu0 0.0
    %1377 = vmatprep.subr.mxu0 0.0
    %1378 = vmatpush1.msra.mxu0 0.0
    %1379 = vmatprep.subr.mxu0 0.0
    %1380 = vmatpush1.msra.mxu0 0.0
    %1381 = vmatprep.subr.mxu0 0.0
    %1382 = vmatpush1.msra.mxu0 0.0
    %1383 = vmatprep.subr.mxu0 0.0
    %1384 = vmatpush1.msra.mxu0 0.0
    %1385 = vmatprep.subr.mxu0 0.0
    %1386 = vmatpush1.msra.mxu0 0.0
    %1387 = vmatprep.subr.mxu0 0.0
    %1388 = vmatpush1.msra.mxu0 0.0
    %1389 = vmatprep.subr.mxu0 0.0
    %1390 = vmatpush1.msra.mxu0 0.0
    %1391 = vmatprep.subr.mxu0 0.0
    %1392 = vmatpush1.msra.mxu0 0.0
    %1393 = vmatprep.mubr.f32.mxu0 0.0
    %1394 = vmatmul.mubr.f32.gmra.mrb[0].mxu0 %v1275
    %v1395 = vpop.f32.mrb[0].mxu0
    %v1396 = vadd.f32 0.0, %v1395
    %v1397 = vpop.f32.mrb[0].mxu0
    %v1398 = vadd.f32 0.0, %v1397
    %1399 = vmatprep.mubr.f32.mxu0 0.0
    %1400 = vmatmul.mubr.f32.gmra.mrb[0].mxu0 %v1277
    %v1401 = vpop.f32.mrb[0].mxu0
    %v1402 = vadd.f32 0.0, %v1401
    %v1403 = vpop.f32.mrb[0].mxu0
    %v1404 = vadd.f32 0.0, %v1403
    %1405 = vmatprep.mubr.f32.mxu0 0.0
    %1406 = vmatmul.mubr.f32.gmra.mrb[0].mxu0 %v1279
    %v1407 = vpop.f32.mrb[0].mxu0
    %v1408 = vadd.f32 0.0, %v1407
    %v1409 = vpop.f32.mrb[0].mxu0
    %v1410 = vadd.f32 0.0, %v1409
    %1411 = vmatprep.mubr.f32.mxu0 0.0
    %1412 = vmatmul.mubr.f32.gmra.mrb[0].mxu0 %v1281
    %v1413 = vpop.f32.mrb[0].mxu0
    %v1414 = vadd.f32 0.0, %v1413
    %v1415 = vpop.f32.mrb[0].mxu0
    %v1416 = vadd.f32 0.0, %v1415
    %1417 = vmatprep.mubr.f32.mxu0 0.0
    %1418 = vmatmul.mubr.f32.gmra.mrb[0].mxu0 %v1283
    %v1419 = vpop.f32.mrb[0].mxu0
    %v1420 = vadd.f32 0.0, %v1419
    %v1421 = vpop.f32.mrb[0].mxu0
    %v1422 = vadd.f32 0.0, %v1421
    %1423 = vmatprep.mubr.f32.mxu0 0.0
    %1424 = vmatmul.mubr.f32.gmra.mrb[0].mxu0 %v1285
    %v1425 = vpop.f32.mrb[0].mxu0
    %v1426 = vadd.f32 0.0, %v1425
    %v1427 = vpop.f32.mrb[0].mxu0
    %v1428 = vadd.f32 0.0, %v1427
    %1429 = vmatprep.mubr.f32.mxu0 0.0
    %1430 = vmatmul.mubr.f32.gmra.mrb[0].mxu0 %v1287
    %v1431 = vpop.f32.mrb[0].mxu0
    %v1432 = vadd.f32 0.0, %v1431
    %v1433 = vpop.f32.mrb[0].mxu0
    %v1434 = vadd.f32 0.0, %v1433
    %1435 = vmatprep.mubr.f32.mxu0 0.0
    %1436 = vmatmul.mubr.f32.gmra.mrb[0].mxu0 %v1289
    %v1437 = vpop.f32.mrb[0].mxu0
    %v1438 = vadd.f32 0.0, %v1437
    %v1439 = vpop.f32.mrb[0].mxu0
    %v1440 = vadd.f32 0.0, %v1439
    %1441 = vmatprep.mubr.f32.mxu0 0.0
    %1442 = vmatmul.mubr.f32.gmra.mrb[0].mxu0 %v1291
    %v1443 = vpop.f32.mrb[0].mxu0
    %v1444 = vadd.f32 0.0, %v1443
    %v1445 = vpop.f32.mrb[0].mxu0
    %v1446 = vadd.f32 0.0, %v1445
    %1447 = vmatprep.mubr.f32.mxu0 0.0
    %1448 = vmatmul.mubr.f32.gmra.mrb[0].mxu0 %v1293
    %v1449 = vpop.f32.mrb[0].mxu0
    %v1450 = vadd.f32 0.0, %v1449
    %v1451 = vpop.f32.mrb[0].mxu0
    %v1452 = vadd.f32 0.0, %v1451
    %1453 = vmatprep.mubr.f32.mxu0 0.0
    %1454 = vmatmul.mubr.f32.gmra.mrb[0].mxu0 %v1295
    %v1455 = vpop.f32.mrb[0].mxu0
    %v1456 = vadd.f32 0.0, %v1455
    %v1457 = vpop.f32.mrb[0].mxu0
    %v1458 = vadd.f32 0.0, %v1457
    %1459 = vmatprep.mubr.f32.mxu0 0.0
    %1460 = vmatmul.mubr.f32.gmra.mrb[0].mxu0 %v1297
    %v1461 = vpop.f32.mrb[0].mxu0
    %v1462 = vadd.f32 0.0, %v1461
    %v1463 = vpop.f32.mrb[0].mxu0
    %v1464 = vadd.f32 0.0, %v1463
    %1465 = vmatprep.mubr.f32.mxu0 0.0
    %1466 = vmatmul.mubr.f32.gmra.mrb[0].mxu0 %v1299
    %v1467 = vpop.f32.mrb[0].mxu0
    %v1468 = vadd.f32 0.0, %v1467
    %v1469 = vpop.f32.mrb[0].mxu0
    %v1470 = vadd.f32 0.0, %v1469
    %1471 = vmatprep.mubr.f32.mxu0 0.0
    %1472 = vmatmul.mubr.f32.gmra.mrb[0].mxu0 %v1301
    %v1473 = vpop.f32.mrb[0].mxu0
    %v1474 = vadd.f32 0.0, %v1473
    %v1475 = vpop.f32.mrb[0].mxu0
    %v1476 = vadd.f32 0.0, %v1475
    %1477 = vmatprep.mubr.f32.mxu0 0.0
    %1478 = vmatmul.mubr.f32.gmra.mrb[0].mxu0 %v1303
    %v1479 = vpop.f32.mrb[0].mxu0
    %v1480 = vadd.f32 0.0, %v1479
    %v1481 = vpop.f32.mrb[0].mxu0
    %v1482 = vadd.f32 0.0, %v1481
    %1483 = vmatprep.mubr.f32.mxu0 0.0
    %1484 = vmatmul.mubr.f32.gmra.mrb[0].mxu0 %v1305
    %v1485 = vpop.f32.mrb[0].mxu0
    %v1486 = vadd.f32 0.0, %v1485
    %v1487 = vpop.f32.mrb[0].mxu0
    %v1488 = vadd.f32 0.0, %v1487
    %1489 = vmatprep.mubr.f32.mxu0 0.0
    %1490 = vmatmul.mubr.f32.gmra.mrb[0].mxu0 %v1307
    %v1491 = vpop.f32.mrb[0].mxu0
    %v1492 = vadd.f32 0.0, %v1491
    %v1493 = vpop.f32.mrb[0].mxu0
    %v1494 = vadd.f32 0.0, %v1493
    %1495 = vmatprep.mubr.f32.mxu0 0.0
    %1496 = vmatmul.mubr.f32.gmra.mrb[0].mxu0 %v1309
    %v1497 = vpop.f32.mrb[0].mxu0
    %v1498 = vadd.f32 0.0, %v1497
    %v1499 = vpop.f32.mrb[0].mxu0
    %v1500 = vadd.f32 0.0, %v1499
    %1501 = vmatprep.mubr.f32.mxu0 0.0
    %1502 = vmatmul.mubr.f32.gmra.mrb[0].mxu0 %v1311
    %v1503 = vpop.f32.mrb[0].mxu0
    %v1504 = vadd.f32 0.0, %v1503
    %v1505 = vpop.f32.mrb[0].mxu0
    %v1506 = vadd.f32 0.0, %v1505
    %1507 = vmatprep.mubr.f32.mxu0 0.0
    %1508 = vmatmul.mubr.f32.gmra.mrb[0].mxu0 %v1313
    %v1509 = vpop.f32.mrb[0].mxu0
    %v1510 = vadd.f32 0.0, %v1509
    %v1511 = vpop.f32.mrb[0].mxu0
    %v1512 = vadd.f32 0.0, %v1511
    %1513 = vmatprep.mubr.f32.mxu0 0.0
    %1514 = vmatmul.mubr.f32.gmra.mrb[0].mxu0 %v1315
    %v1515 = vpop.f32.mrb[0].mxu0
    %v1516 = vadd.f32 0.0, %v1515
    %v1517 = vpop.f32.mrb[0].mxu0
    %v1518 = vadd.f32 0.0, %v1517
    %1519 = vmatprep.mubr.f32.mxu0 0.0
    %1520 = vmatmul.mubr.f32.gmra.mrb[0].mxu0 %v1317
    %v1521 = vpop.f32.mrb[0].mxu0
    %v1522 = vadd.f32 0.0, %v1521
    %v1523 = vpop.f32.mrb[0].mxu0
    %v1524 = vadd.f32 0.0, %v1523
    %1525 = vmatprep.mubr.f32.mxu0 0.0
    %1526 = vmatmul.mubr.f32.gmra.mrb[0].mxu0 %v1319
    %v1527 = vpop.f32.mrb[0].mxu0
    %v1528 = vadd.f32 0.0, %v1527
    %v1529 = vpop.f32.mrb[0].mxu0
    %v1530 = vadd.f32 0.0, %v1529
    %1531 = vmatprep.mubr.f32.mxu0 0.0
    %1532 = vmatmul.mubr.f32.gmra.mrb[0].mxu0 %v1321
    %v1533 = vpop.f32.mrb[0].mxu0
    %v1534 = vadd.f32 0.0, %v1533
    %v1535 = vpop.f32.mrb[0].mxu0
    %v1536 = vadd.f32 0.0, %v1535
    %1537 = vdwg.mxu0
    %v1538 = vadd.f32 %v1161, %v1396
    %v1539 = vadd.f32 %v1162, %v1398
    %v1540 = vadd.f32 %v1163, %v1402
    %v1541 = vadd.f32 %v1164, %v1404
    %v1542 = vadd.f32 %v1165, %v1408
    %v1543 = vadd.f32 %v1166, %v1410
    %v1544 = vadd.f32 %v1167, %v1414
    %v1545 = vadd.f32 %v1168, %v1416
    %v1546 = vadd.f32 %v1169, %v1420
    %v1547 = vadd.f32 %v1170, %v1422
    %v1548 = vadd.f32 %v1171, %v1426
    %v1549 = vadd.f32 %v1172, %v1428
    %v1550 = vadd.f32 %v1173, %v1432
    %v1551 = vadd.f32 %v1174, %v1434
    %v1552 = vadd.f32 %v1175, %v1438
    %v1553 = vadd.f32 %v1176, %v1440
    %v1554 = vadd.f32 %v1177, %v1444
    %v1555 = vadd.f32 %v1178, %v1446
    %v1556 = vadd.f32 %v1179, %v1450
    %v1557 = vadd.f32 %v1180, %v1452
    %v1558 = vadd.f32 %v1181, %v1456
    %v1559 = vadd.f32 %v1182, %v1458
    %v1560 = vadd.f32 %v1183, %v1462
    %v1561 = vadd.f32 %v1184, %v1464
    %v1562 = vadd.f32 %v1185, %v1468
    %v1563 = vadd.f32 %v1186, %v1470
    %v1564 = vadd.f32 %v1187, %v1474
    %v1565 = vadd.f32 %v1188, %v1476
    %v1566 = vadd.f32 %v1189, %v1480
    %v1567 = vadd.f32 %v1190, %v1482
    %v1568 = vadd.f32 %v1191, %v1486
    %v1569 = vadd.f32 %v1192, %v1488
    %v1570 = vadd.f32 %v1193, %v1492
    %v1571 = vadd.f32 %v1194, %v1494
    %v1572 = vadd.f32 %v1195, %v1498
    %v1573 = vadd.f32 %v1196, %v1500
    %v1574 = vadd.f32 %v1197, %v1504
    %v1575 = vadd.f32 %v1198, %v1506
    %v1576 = vadd.f32 %v1199, %v1510
    %v1577 = vadd.f32 %v1200, %v1512
    %v1578 = vadd.f32 %v1201, %v1516
    %v1579 = vadd.f32 %v1202, %v1518
    %v1580 = vadd.f32 %v1203, %v1522
    %v1581 = vadd.f32 %v1204, %v1524
    %v1582 = vadd.f32 %v1205, %v1528
    %v1583 = vadd.f32 %v1206, %v1530
    %v1584 = vadd.f32 %v1207, %v1534
    %v1585 = vadd.f32 %v1208, %v1536
    %v1586 = vrot.slane %v166, 4
    %v1587 = vrot.slane %v167, 4
    %v1588 = vsel %vm353, %v1586, %v1587
    %v1589 = vrot.slane %v168, 4
    %v1590 = vsel %vm353, %v1587, %v1589
    %v1591 = vrot.slane %v169, 4
    %v1592 = vsel %vm353, %v1589, %v1591
    %v1593 = vrot.slane %v170, 4
    %v1594 = vrot.slane %v171, 4
    %v1595 = vsel %vm353, %v1593, %v1594
    %v1596 = vrot.slane %v172, 4
    %v1597 = vsel %vm353, %v1594, %v1596
    %v1598 = vrot.slane %v173, 4
    %v1599 = vsel %vm353, %v1596, %v1598
    %v1600 = vrot.slane %v174, 4
    %v1601 = vrot.slane %v175, 4
    %v1602 = vsel %vm353, %v1600, %v1601
    %v1603 = vrot.slane %v176, 4
    %v1604 = vsel %vm353, %v1601, %v1603
    %v1605 = vrot.slane %v177, 4
    %v1606 = vsel %vm353, %v1603, %v1605
    %v1607 = vrot.slane %v178, 4
    %v1608 = vrot.slane %v179, 4
    %v1609 = vsel %vm353, %v1607, %v1608
    %v1610 = vrot.slane %v180, 4
    %v1611 = vsel %vm353, %v1608, %v1610
    %v1612 = vrot.slane %v181, 4
    %v1613 = vsel %vm353, %v1610, %v1612
    %v1614 = vrot.slane %v182, 4
    %v1615 = vrot.slane %v183, 4
    %v1616 = vsel %vm353, %v1614, %v1615
    %v1617 = vrot.slane %v184, 4
    %v1618 = vsel %vm353, %v1615, %v1617
    %v1619 = vrot.slane %v185, 4
    %v1620 = vsel %vm353, %v1617, %v1619
    %v1621 = vrot.slane %v186, 4
    %v1622 = vrot.slane %v187, 4
    %v1623 = vsel %vm353, %v1621, %v1622
    %v1624 = vrot.slane %v188, 4
    %v1625 = vsel %vm353, %v1622, %v1624
    %v1626 = vrot.slane %v189, 4
    %v1627 = vsel %vm353, %v1624, %v1626
    %v1628 = vrot.slane %v190, 4
    %v1629 = vrot.slane %v191, 4
    %v1630 = vsel %vm353, %v1628, %v1629
    %v1631 = vrot.slane %v192, 4
    %v1632 = vsel %vm353, %v1629, %v1631
    %v1633 = vrot.slane %v193, 4
    %v1634 = vsel %vm353, %v1631, %v1633
    %v1635 = vrot.slane %v194, 4
    %v1636 = vrot.slane %v195, 4
    %v1637 = vsel %vm353, %v1635, %v1636
    %v1638 = vrot.slane %v196, 4
    %v1639 = vsel %vm353, %v1636, %v1638
    %v1640 = vrot.slane %v197, 4
    %v1641 = vsel %vm353, %v1638, %v1640
    %s1642 = scalar_lea.vmem %s1, 256
    %v1643 = vld [vmem:[%s1642] sm:$0xff]
    %v1644 = vld [vmem:[%s1642 + $0x8] sm:$0xff]
    %v1645 = vld [vmem:[%s1642 + $0x10] sm:$0xff]
    %v1646 = vld [vmem:[%s1642 + $0x18] sm:$0xff]
    %v1647 = vld [vmem:[%s1642 + $0x20] sm:$0xff]
    %v1648 = vld [vmem:[%s1642 + $0x28] sm:$0xff]
    %v1649 = vld [vmem:[%s1642 + $0x30] sm:$0xf]
    %v1650 = vld [vmem:[%s1642 + $0x38] sm:$0xf]
    %v1651 = vsel %vm304, %v1588, 0
    %v1653 = vsel %vm304, %v1590, 0
    %v1655 = vsel %vm304, %v1592, 0
    %v1657 = vsel %vm304, %v1595, 0
    %v1659 = vsel %vm304, %v1597, 0
    %v1661 = vsel %vm304, %v1599, 0
    %v1663 = vsel %vm304, %v1602, 0
    %v1665 = vsel %vm304, %v1604, 0
    %v1667 = vsel %vm304, %v1606, 0
    %v1669 = vsel %vm304, %v1609, 0
    %v1671 = vsel %vm304, %v1611, 0
    %v1673 = vsel %vm304, %v1613, 0
    %v1675 = vsel %vm304, %v1616, 0
    %v1677 = vsel %vm304, %v1618, 0
    %v1679 = vsel %vm304, %v1620, 0
    %v1681 = vsel %vm304, %v1623, 0
    %v1683 = vsel %vm304, %v1625, 0
    %v1685 = vsel %vm304, %v1627, 0
    %v1687 = vsel %vm304, %v1630, 0
    %v1689 = vsel %vm304, %v1632, 0
    %v1691 = vsel %vm304, %v1634, 0
    %v1693 = vsel %vm304, %v1637, 0
    %v1695 = vsel %vm304, %v1639, 0
    %v1697 = vsel %vm304, %v1641, 0
    %v1700 = vsel %vm353, %v1649, 0
    %v1703 = vsel %vm353, %v1650, 0
    %1705 = vmatprep.subr.mxu0 %v1644
    %1706 = vmatpush1.msra.mxu0 %v1643
    %1707 = vmatprep.subr.mxu0 %v1646
    %1708 = vmatpush1.msra.mxu0 %v1645
    %1709 = vmatprep.subr.mxu0 %v1648
    %1710 = vmatpush1.msra.mxu0 %v1647
    %1711 = vmatprep.subr.mxu0 %v1703
    %1712 = vmatpush1.msra.mxu0 %v1700
    %1713 = vmatprep.subr.mxu0 0.0
    %1714 = vmatpush1.msra.mxu0 0.0
    %1715 = vmatprep.subr.mxu0 0.0
    %1716 = vmatpush1.msra.mxu0 0.0
    %1717 = vmatprep.subr.mxu0 0.0
    %1718 = vmatpush1.msra.mxu0 0.0
    %1719 = vmatprep.subr.mxu0 0.0
    %1720 = vmatpush1.msra.mxu0 0.0
    %1721 = vmatprep.subr.mxu0 0.0
    %1722 = vmatpush1.msra.mxu0 0.0
    %1723 = vmatprep.subr.mxu0 0.0
    %1724 = vmatpush1.msra.mxu0 0.0
    %1725 = vmatprep.subr.mxu0 0.0
    %1726 = vmatpush1.msra.mxu0 0.0
    %1727 = vmatprep.subr.mxu0 0.0
    %1728 = vmatpush1.msra.mxu0 0.0
    %1729 = vmatprep.subr.mxu0 0.0
    %1730 = vmatpush1.msra.mxu0 0.0
    %1731 = vmatprep.subr.mxu0 0.0
    %1732 = vmatpush1.msra.mxu0 0.0
    %1733 = vmatprep.subr.mxu0 0.0
    %1734 = vmatpush1.msra.mxu0 0.0
    %1735 = vmatprep.subr.mxu0 0.0
    %1736 = vmatpush1.msra.mxu0 0.0
    %1737 = vmatprep.subr.mxu0 0.0
    %1738 = vmatpush1.msra.mxu0 0.0
    %1739 = vmatprep.subr.mxu0 0.0
    %1740 = vmatpush1.msra.mxu0 0.0
    %1741 = vmatprep.subr.mxu0 0.0
    %1742 = vmatpush1.msra.mxu0 0.0
    %1743 = vmatprep.subr.mxu0 0.0
    %1744 = vmatpush1.msra.mxu0 0.0
    %1745 = vmatprep.subr.mxu0 0.0
    %1746 = vmatpush1.msra.mxu0 0.0
    %1747 = vmatprep.subr.mxu0 0.0
    %1748 = vmatpush1.msra.mxu0 0.0
    %1749 = vmatprep.subr.mxu0 0.0
    %1750 = vmatpush1.msra.mxu0 0.0
    %1751 = vmatprep.subr.mxu0 0.0
    %1752 = vmatpush1.msra.mxu0 0.0
    %1753 = vmatprep.subr.mxu0 0.0
    %1754 = vmatpush1.msra.mxu0 0.0
    %1755 = vmatprep.subr.mxu0 0.0
    %1756 = vmatpush1.msra.mxu0 0.0
    %1757 = vmatprep.subr.mxu0 0.0
    %1758 = vmatpush1.msra.mxu0 0.0
    %1759 = vmatprep.subr.mxu0 0.0
    %1760 = vmatpush1.msra.mxu0 0.0
    %1761 = vmatprep.subr.mxu0 0.0
    %1762 = vmatpush1.msra.mxu0 0.0
    %1763 = vmatprep.subr.mxu0 0.0
    %1764 = vmatpush1.msra.mxu0 0.0
    %1765 = vmatprep.subr.mxu0 0.0
    %1766 = vmatpush1.msra.mxu0 0.0
    %1767 = vmatprep.subr.mxu0 0.0
    %1768 = vmatpush1.msra.mxu0 0.0
    %1769 = vmatprep.mubr.f32.mxu0 0.0
    %1770 = vmatmul.mubr.f32.gmra.mrb[0].mxu0 %v1651
    %v1771 = vpop.f32.mrb[0].mxu0
    %v1772 = vadd.f32 0.0, %v1771
    %v1773 = vpop.f32.mrb[0].mxu0
    %v1774 = vadd.f32 0.0, %v1773
    %1775 = vmatprep.mubr.f32.mxu0 0.0
    %1776 = vmatmul.mubr.f32.gmra.mrb[0].mxu0 %v1653
    %v1777 = vpop.f32.mrb[0].mxu0
    %v1778 = vadd.f32 0.0, %v1777
    %v1779 = vpop.f32.mrb[0].mxu0
    %v1780 = vadd.f32 0.0, %v1779
    %1781 = vmatprep.mubr.f32.mxu0 0.0
    %1782 = vmatmul.mubr.f32.gmra.mrb[0].mxu0 %v1655
    %v1783 = vpop.f32.mrb[0].mxu0
    %v1784 = vadd.f32 0.0, %v1783
    %v1785 = vpop.f32.mrb[0].mxu0
    %v1786 = vadd.f32 0.0, %v1785
    %1787 = vmatprep.mubr.f32.mxu0 0.0
    %1788 = vmatmul.mubr.f32.gmra.mrb[0].mxu0 %v1657
    %v1789 = vpop.f32.mrb[0].mxu0
    %v1790 = vadd.f32 0.0, %v1789
    %v1791 = vpop.f32.mrb[0].mxu0
    %v1792 = vadd.f32 0.0, %v1791
    %1793 = vmatprep.mubr.f32.mxu0 0.0
    %1794 = vmatmul.mubr.f32.gmra.mrb[0].mxu0 %v1659
    %v1795 = vpop.f32.mrb[0].mxu0
    %v1796 = vadd.f32 0.0, %v1795
    %v1797 = vpop.f32.mrb[0].mxu0
    %v1798 = vadd.f32 0.0, %v1797
    %1799 = vmatprep.mubr.f32.mxu0 0.0
    %1800 = vmatmul.mubr.f32.gmra.mrb[0].mxu0 %v1661
    %v1801 = vpop.f32.mrb[0].mxu0
    %v1802 = vadd.f32 0.0, %v1801
    %v1803 = vpop.f32.mrb[0].mxu0
    %v1804 = vadd.f32 0.0, %v1803
    %1805 = vmatprep.mubr.f32.mxu0 0.0
    %1806 = vmatmul.mubr.f32.gmra.mrb[0].mxu0 %v1663
    %v1807 = vpop.f32.mrb[0].mxu0
    %v1808 = vadd.f32 0.0, %v1807
    %v1809 = vpop.f32.mrb[0].mxu0
    %v1810 = vadd.f32 0.0, %v1809
    %1811 = vmatprep.mubr.f32.mxu0 0.0
    %1812 = vmatmul.mubr.f32.gmra.mrb[0].mxu0 %v1665
    %v1813 = vpop.f32.mrb[0].mxu0
    %v1814 = vadd.f32 0.0, %v1813
    %v1815 = vpop.f32.mrb[0].mxu0
    %v1816 = vadd.f32 0.0, %v1815
    %1817 = vmatprep.mubr.f32.mxu0 0.0
    %1818 = vmatmul.mubr.f32.gmra.mrb[0].mxu0 %v1667
    %v1819 = vpop.f32.mrb[0].mxu0
    %v1820 = vadd.f32 0.0, %v1819
    %v1821 = vpop.f32.mrb[0].mxu0
    %v1822 = vadd.f32 0.0, %v1821
    %1823 = vmatprep.mubr.f32.mxu0 0.0
    %1824 = vmatmul.mubr.f32.gmra.mrb[0].mxu0 %v1669
    %v1825 = vpop.f32.mrb[0].mxu0
    %v1826 = vadd.f32 0.0, %v1825
    %v1827 = vpop.f32.mrb[0].mxu0
    %v1828 = vadd.f32 0.0, %v1827
    %1829 = vmatprep.mubr.f32.mxu0 0.0
    %1830 = vmatmul.mubr.f32.gmra.mrb[0].mxu0 %v1671
    %v1831 = vpop.f32.mrb[0].mxu0
    %v1832 = vadd.f32 0.0, %v1831
    %v1833 = vpop.f32.mrb[0].mxu0
    %v1834 = vadd.f32 0.0, %v1833
    %1835 = vmatprep.mubr.f32.mxu0 0.0
    %1836 = vmatmul.mubr.f32.gmra.mrb[0].mxu0 %v1673
    %v1837 = vpop.f32.mrb[0].mxu0
    %v1838 = vadd.f32 0.0, %v1837
    %v1839 = vpop.f32.mrb[0].mxu0
    %v1840 = vadd.f32 0.0, %v1839
    %1841 = vmatprep.mubr.f32.mxu0 0.0
    %1842 = vmatmul.mubr.f32.gmra.mrb[0].mxu0 %v1675
    %v1843 = vpop.f32.mrb[0].mxu0
    %v1844 = vadd.f32 0.0, %v1843
    %v1845 = vpop.f32.mrb[0].mxu0
    %v1846 = vadd.f32 0.0, %v1845
    %1847 = vmatprep.mubr.f32.mxu0 0.0
    %1848 = vmatmul.mubr.f32.gmra.mrb[0].mxu0 %v1677
    %v1849 = vpop.f32.mrb[0].mxu0
    %v1850 = vadd.f32 0.0, %v1849
    %v1851 = vpop.f32.mrb[0].mxu0
    %v1852 = vadd.f32 0.0, %v1851
    %1853 = vmatprep.mubr.f32.mxu0 0.0
    %1854 = vmatmul.mubr.f32.gmra.mrb[0].mxu0 %v1679
    %v1855 = vpop.f32.mrb[0].mxu0
    %v1856 = vadd.f32 0.0, %v1855
    %v1857 = vpop.f32.mrb[0].mxu0
    %v1858 = vadd.f32 0.0, %v1857
    %1859 = vmatprep.mubr.f32.mxu0 0.0
    %1860 = vmatmul.mubr.f32.gmra.mrb[0].mxu0 %v1681
    %v1861 = vpop.f32.mrb[0].mxu0
    %v1862 = vadd.f32 0.0, %v1861
    %v1863 = vpop.f32.mrb[0].mxu0
    %v1864 = vadd.f32 0.0, %v1863
    %1865 = vmatprep.mubr.f32.mxu0 0.0
    %1866 = vmatmul.mubr.f32.gmra.mrb[0].mxu0 %v1683
    %v1867 = vpop.f32.mrb[0].mxu0
    %v1868 = vadd.f32 0.0, %v1867
    %v1869 = vpop.f32.mrb[0].mxu0
    %v1870 = vadd.f32 0.0, %v1869
    %1871 = vmatprep.mubr.f32.mxu0 0.0
    %1872 = vmatmul.mubr.f32.gmra.mrb[0].mxu0 %v1685
    %v1873 = vpop.f32.mrb[0].mxu0
    %v1874 = vadd.f32 0.0, %v1873
    %v1875 = vpop.f32.mrb[0].mxu0
    %v1876 = vadd.f32 0.0, %v1875
    %1877 = vmatprep.mubr.f32.mxu0 0.0
    %1878 = vmatmul.mubr.f32.gmra.mrb[0].mxu0 %v1687
    %v1879 = vpop.f32.mrb[0].mxu0
    %v1880 = vadd.f32 0.0, %v1879
    %v1881 = vpop.f32.mrb[0].mxu0
    %v1882 = vadd.f32 0.0, %v1881
    %1883 = vmatprep.mubr.f32.mxu0 0.0
    %1884 = vmatmul.mubr.f32.gmra.mrb[0].mxu0 %v1689
    %v1885 = vpop.f32.mrb[0].mxu0
    %v1886 = vadd.f32 0.0, %v1885
    %v1887 = vpop.f32.mrb[0].mxu0
    %v1888 = vadd.f32 0.0, %v1887
    %1889 = vmatprep.mubr.f32.mxu0 0.0
    %1890 = vmatmul.mubr.f32.gmra.mrb[0].mxu0 %v1691
    %v1891 = vpop.f32.mrb[0].mxu0
    %v1892 = vadd.f32 0.0, %v1891
    %v1893 = vpop.f32.mrb[0].mxu0
    %v1894 = vadd.f32 0.0, %v1893
    %1895 = vmatprep.mubr.f32.mxu0 0.0
    %1896 = vmatmul.mubr.f32.gmra.mrb[0].mxu0 %v1693
    %v1897 = vpop.f32.mrb[0].mxu0
    %v1898 = vadd.f32 0.0, %v1897
    %v1899 = vpop.f32.mrb[0].mxu0
    %v1900 = vadd.f32 0.0, %v1899
    %1901 = vmatprep.mubr.f32.mxu0 0.0
    %1902 = vmatmul.mubr.f32.gmra.mrb[0].mxu0 %v1695
    %v1903 = vpop.f32.mrb[0].mxu0
    %v1904 = vadd.f32 0.0, %v1903
    %v1905 = vpop.f32.mrb[0].mxu0
    %v1906 = vadd.f32 0.0, %v1905
    %1907 = vmatprep.mubr.f32.mxu0 0.0
    %1908 = vmatmul.mubr.f32.gmra.mrb[0].mxu0 %v1697
    %v1909 = vpop.f32.mrb[0].mxu0
    %v1910 = vadd.f32 0.0, %v1909
    %v1911 = vpop.f32.mrb[0].mxu0
    %v1912 = vadd.f32 0.0, %v1911
    %1913 = vdwg.mxu0
    %v1914 = vadd.f32 %v1538, %v1772
    %v1915 = vadd.f32 %v1539, %v1774
    %v1916 = vadd.f32 %v1540, %v1778
    %v1917 = vadd.f32 %v1541, %v1780
    %v1918 = vadd.f32 %v1542, %v1784
    %v1919 = vadd.f32 %v1543, %v1786
    %v1920 = vadd.f32 %v1544, %v1790
    %v1921 = vadd.f32 %v1545, %v1792
    %v1922 = vadd.f32 %v1546, %v1796
    %v1923 = vadd.f32 %v1547, %v1798
    %v1924 = vadd.f32 %v1548, %v1802
    %v1925 = vadd.f32 %v1549, %v1804
    %v1926 = vadd.f32 %v1550, %v1808
    %v1927 = vadd.f32 %v1551, %v1810
    %v1928 = vadd.f32 %v1552, %v1814
    %v1929 = vadd.f32 %v1553, %v1816
    %v1930 = vadd.f32 %v1554, %v1820
    %v1931 = vadd.f32 %v1555, %v1822
    %v1932 = vadd.f32 %v1556, %v1826
    %v1933 = vadd.f32 %v1557, %v1828
    %v1934 = vadd.f32 %v1558, %v1832
    %v1935 = vadd.f32 %v1559, %v1834
    %v1936 = vadd.f32 %v1560, %v1838
    %v1937 = vadd.f32 %v1561, %v1840
    %v1938 = vadd.f32 %v1562, %v1844
    %v1939 = vadd.f32 %v1563, %v1846
    %v1940 = vadd.f32 %v1564, %v1850
    %v1941 = vadd.f32 %v1565, %v1852
    %v1942 = vadd.f32 %v1566, %v1856
    %v1943 = vadd.f32 %v1567, %v1858
    %v1944 = vadd.f32 %v1568, %v1862
    %v1945 = vadd.f32 %v1569, %v1864
    %v1946 = vadd.f32 %v1570, %v1868
    %v1947 = vadd.f32 %v1571, %v1870
    %v1948 = vadd.f32 %v1572, %v1874
    %v1949 = vadd.f32 %v1573, %v1876
    %v1950 = vadd.f32 %v1574, %v1880
    %v1951 = vadd.f32 %v1575, %v1882
    %v1952 = vadd.f32 %v1576, %v1886
    %v1953 = vadd.f32 %v1577, %v1888
    %v1954 = vadd.f32 %v1578, %v1892
    %v1955 = vadd.f32 %v1579, %v1894
    %v1956 = vadd.f32 %v1580, %v1898
    %v1957 = vadd.f32 %v1581, %v1900
    %v1958 = vadd.f32 %v1582, %v1904
    %v1959 = vadd.f32 %v1583, %v1906
    %v1960 = vadd.f32 %v1584, %v1910
    %v1961 = vadd.f32 %v1585, %v1912
    %v1962 = vld [vmem:[%s2] sm:$0x3]
    %v1964 = vlaneseq
    %v1965 = vshrl.u32 %v1964, 7
    %v1966 = vsub.s32 0, %v1965
    %v1967 = vrot.slane %v1962, %v1966
    %v1968 = vlaneseq
    %v1969 = vshrl.u32 %v1968, 7
    %v1970 = vsub.s32 1, %v1969
    %v1971 = vrot.slane %v1962, %v1970
    %v1974 = vadd.f32 %v1914, %v1967
    %v1975 = vadd.f32 %v1915, %v1971
    %v1976 = vadd.f32 %v1916, %v1967
    %v1977 = vadd.f32 %v1917, %v1971
    %v1978 = vadd.f32 %v1918, %v1967
    %v1979 = vadd.f32 %v1919, %v1971
    %v1980 = vadd.f32 %v1920, %v1967
    %v1981 = vadd.f32 %v1921, %v1971
    %v1982 = vadd.f32 %v1922, %v1967
    %v1983 = vadd.f32 %v1923, %v1971
    %v1984 = vadd.f32 %v1924, %v1967
    %v1985 = vadd.f32 %v1925, %v1971
    %v1986 = vadd.f32 %v1926, %v1967
    %v1987 = vadd.f32 %v1927, %v1971
    %v1988 = vadd.f32 %v1928, %v1967
    %v1989 = vadd.f32 %v1929, %v1971
    %v1990 = vadd.f32 %v1930, %v1967
    %v1991 = vadd.f32 %v1931, %v1971
    %v1992 = vadd.f32 %v1932, %v1967
    %v1993 = vadd.f32 %v1933, %v1971
    %v1994 = vadd.f32 %v1934, %v1967
    %v1995 = vadd.f32 %v1935, %v1971
    %v1996 = vadd.f32 %v1936, %v1967
    %v1997 = vadd.f32 %v1937, %v1971
    %v1998 = vadd.f32 %v1938, %v1967
    %v1999 = vadd.f32 %v1939, %v1971
    %v2000 = vadd.f32 %v1940, %v1967
    %v2001 = vadd.f32 %v1941, %v1971
    %v2002 = vadd.f32 %v1942, %v1967
    %v2003 = vadd.f32 %v1943, %v1971
    %v2004 = vadd.f32 %v1944, %v1967
    %v2005 = vadd.f32 %v1945, %v1971
    %v2006 = vadd.f32 %v1946, %v1967
    %v2007 = vadd.f32 %v1947, %v1971
    %v2008 = vadd.f32 %v1948, %v1967
    %v2009 = vadd.f32 %v1949, %v1971
    %v2010 = vadd.f32 %v1950, %v1967
    %v2011 = vadd.f32 %v1951, %v1971
    %v2012 = vadd.f32 %v1952, %v1967
    %v2013 = vadd.f32 %v1953, %v1971
    %v2014 = vadd.f32 %v1954, %v1967
    %v2015 = vadd.f32 %v1955, %v1971
    %v2016 = vadd.f32 %v1956, %v1967
    %v2017 = vadd.f32 %v1957, %v1971
    %v2018 = vadd.f32 %v1958, %v1967
    %v2019 = vadd.f32 %v1959, %v1971
    %v2020 = vadd.f32 %v1960, %v1967
    %v2021 = vadd.f32 %v1961, %v1971
    %v2022 = vmax.f32 %v1974, 0.0
    %v2023 = vmax.f32 %v1975, 0.0
    %v2024 = vmax.f32 %v1976, 0.0
    %v2025 = vmax.f32 %v1977, 0.0
    %v2026 = vmax.f32 %v1978, 0.0
    %v2027 = vmax.f32 %v1979, 0.0
    %v2028 = vmax.f32 %v1980, 0.0
    %v2029 = vmax.f32 %v1981, 0.0
    %v2030 = vmax.f32 %v1982, 0.0
    %v2031 = vmax.f32 %v1983, 0.0
    %v2032 = vmax.f32 %v1984, 0.0
    %v2033 = vmax.f32 %v1985, 0.0
    %v2034 = vmax.f32 %v1986, 0.0
    %v2035 = vmax.f32 %v1987, 0.0
    %v2036 = vmax.f32 %v1988, 0.0
    %v2037 = vmax.f32 %v1989, 0.0
    %v2038 = vmax.f32 %v1990, 0.0
    %v2039 = vmax.f32 %v1991, 0.0
    %v2040 = vmax.f32 %v1992, 0.0
    %v2041 = vmax.f32 %v1993, 0.0
    %v2042 = vmax.f32 %v1994, 0.0
    %v2043 = vmax.f32 %v1995, 0.0
    %v2044 = vmax.f32 %v1996, 0.0
    %v2045 = vmax.f32 %v1997, 0.0
    %v2046 = vmax.f32 %v1998, 0.0
    %v2047 = vmax.f32 %v1999, 0.0
    %v2048 = vmax.f32 %v2000, 0.0
    %v2049 = vmax.f32 %v2001, 0.0
    %v2050 = vmax.f32 %v2002, 0.0
    %v2051 = vmax.f32 %v2003, 0.0
    %v2052 = vmax.f32 %v2004, 0.0
    %v2053 = vmax.f32 %v2005, 0.0
    %v2054 = vmax.f32 %v2006, 0.0
    %v2055 = vmax.f32 %v2007, 0.0
    %v2056 = vmax.f32 %v2008, 0.0
    %v2057 = vmax.f32 %v2009, 0.0
    %v2058 = vmax.f32 %v2010, 0.0
    %v2059 = vmax.f32 %v2011, 0.0
    %v2060 = vmax.f32 %v2012, 0.0
    %v2061 = vmax.f32 %v2013, 0.0
    %v2062 = vmax.f32 %v2014, 0.0
    %v2063 = vmax.f32 %v2015, 0.0
    %v2064 = vmax.f32 %v2016, 0.0
    %v2065 = vmax.f32 %v2017, 0.0
    %v2066 = vmax.f32 %v2018, 0.0
    %v2067 = vmax.f32 %v2019, 0.0
    %v2068 = vmax.f32 %v2020, 0.0
    %v2069 = vmax.f32 %v2021, 0.0
    %v2070 = vld [vmem:[#allocation2] sm:$0xff]
    %v2071 = vld [vmem:[#allocation2 + $0x8] sm:$0xff]
    %v2072 = vld [vmem:[#allocation2 + $0x10] sm:$0xff]
    %v2073 = vld [vmem:[#allocation2 + $0x18] sm:$0xff]
    %v2074 = vld [vmem:[#allocation2 + $0x20] sm:$0xff]
    %v2075 = vld [vmem:[#allocation2 + $0x28] sm:$0xff]
    %v2076 = vld [vmem:[#allocation2 + $0x30] sm:$0xff]
    %v2077 = vld [vmem:[#allocation2 + $0x38] sm:$0xff]
    %v2078 = vld [vmem:[#allocation2 + $0x40] sm:$0xff]
    %v2079 = vld [vmem:[#allocation2 + $0x48] sm:$0xff]
    %v2080 = vld [vmem:[#allocation2 + $0x50] sm:$0xff]
    %v2081 = vld [vmem:[#allocation2 + $0x58] sm:$0xff]
    %v2082 = vld [vmem:[#allocation2 + $0x60] sm:$0xff]
    %v2083 = vld [vmem:[#allocation2 + $0x68] sm:$0xff]
    %v2084 = vld [vmem:[#allocation2 + $0x70] sm:$0xff]
    %v2085 = vld [vmem:[#allocation2 + $0x78] sm:$0xff]
    %v2086 = vld [vmem:[#allocation2 + $0x80] sm:$0xff]
    %v2087 = vld [vmem:[#allocation2 + $0x88] sm:$0xff]
    %v2088 = vld [vmem:[#allocation2 + $0x90] sm:$0xff]
    %v2089 = vld [vmem:[#allocation2 + $0x98] sm:$0xff]
    %v2090 = vld [vmem:[#allocation2 + $0xa0] sm:$0xff]
    %v2091 = vld [vmem:[#allocation2 + $0xa8] sm:$0xff]
    %v2092 = vld [vmem:[#allocation2 + $0xb0] sm:$0xff]
    %v2093 = vld [vmem:[#allocation2 + $0xb8] sm:$0xff]
    %v2094 = vld [vmem:[#allocation2 + $0xc0] sm:$0xff]
    %v2095 = vld [vmem:[#allocation2 + $0xc8] sm:$0xff]
    %v2096 = vld [vmem:[#allocation2 + $0xd0] sm:$0xff]
    %v2097 = vld [vmem:[#allocation2 + $0xd8] sm:$0xff]
    %v2098 = vld [vmem:[#allocation2 + $0xe0] sm:$0xff]
    %v2099 = vld [vmem:[#allocation2 + $0xe8] sm:$0xff]
    %v2100 = vld [vmem:[#allocation2 + $0xf0] sm:$0xff]
    %v2101 = vld [vmem:[#allocation2 + $0xf8] sm:$0xff]
    %v2102 = vld [vmem:[#allocation2 + $0x100] sm:$0xff]
    %v2103 = vld [vmem:[#allocation2 + $0x108] sm:$0xff]
    %v2104 = vld [vmem:[#allocation2 + $0x110] sm:$0xff]
    %v2105 = vld [vmem:[#allocation2 + $0x118] sm:$0xff]
    %vm2106 = vcmask 130048
    %v2108 = vsel %vm2106, %v2023, 0
    %v2111 = vsel %vm2106, %v2025, 0
    %v2114 = vsel %vm2106, %v2027, 0
    %v2117 = vsel %vm2106, %v2029, 0
    %v2120 = vsel %vm2106, %v2031, 0
    %v2123 = vsel %vm2106, %v2033, 0
    %v2126 = vsel %vm2106, %v2035, 0
    %v2129 = vsel %vm2106, %v2037, 0
    %v2132 = vsel %vm2106, %v2039, 0
    %v2135 = vsel %vm2106, %v2041, 0
    %v2138 = vsel %vm2106, %v2043, 0
    %v2141 = vsel %vm2106, %v2045, 0
    %v2144 = vsel %vm2106, %v2047, 0
    %v2147 = vsel %vm2106, %v2049, 0
    %v2150 = vsel %vm2106, %v2051, 0
    %v2153 = vsel %vm2106, %v2053, 0
    %v2156 = vsel %vm2106, %v2055, 0
    %v2159 = vsel %vm2106, %v2057, 0
    %v2162 = vsel %vm2106, %v2059, 0
    %v2165 = vsel %vm2106, %v2061, 0
    %v2168 = vsel %vm2106, %v2063, 0
    %v2171 = vsel %vm2106, %v2065, 0
    %v2174 = vsel %vm2106, %v2067, 0
    %v2177 = vsel %vm2106, %v2069, 0
    %2179 = vmatprep.subr.mxu0 %v2071
    %2180 = vmatpush1.msra.mxu0 %v2070
    %2181 = vmatprep.subr.mxu0 %v2073
    %2182 = vmatpush1.msra.mxu0 %v2072
    %2183 = vmatprep.subr.mxu0 %v2075
    %2184 = vmatpush1.msra.mxu0 %v2074
    %2185 = vmatprep.subr.mxu0 %v2077
    %2186 = vmatpush1.msra.mxu0 %v2076
    %2187 = vmatprep.subr.mxu0 %v2079
    %2188 = vmatpush1.msra.mxu0 %v2078
    %2189 = vmatprep.subr.mxu0 %v2081
    %2190 = vmatpush1.msra.mxu0 %v2080
    %2191 = vmatprep.subr.mxu0 %v2083
    %2192 = vmatpush1.msra.mxu0 %v2082
    %2193 = vmatprep.subr.mxu0 %v2085
    %2194 = vmatpush1.msra.mxu0 %v2084
    %2195 = vmatprep.subr.mxu0 %v2087
    %2196 = vmatpush1.msra.mxu0 %v2086
    %2197 = vmatprep.subr.mxu0 %v2089
    %2198 = vmatpush1.msra.mxu0 %v2088
    %2199 = vmatprep.subr.mxu0 %v2091
    %2200 = vmatpush1.msra.mxu0 %v2090
    %2201 = vmatprep.subr.mxu0 %v2093
    %2202 = vmatpush1.msra.mxu0 %v2092
    %2203 = vmatprep.subr.mxu0 %v2095
    %2204 = vmatpush1.msra.mxu0 %v2094
    %2205 = vmatprep.subr.mxu0 %v2097
    %2206 = vmatpush1.msra.mxu0 %v2096
    %2207 = vmatprep.subr.mxu0 %v2099
    %2208 = vmatpush1.msra.mxu0 %v2098
    %2209 = vmatprep.subr.mxu0 %v2101
    %2210 = vmatpush1.msra.mxu0 %v2100
    %2211 = vmatprep.subr.mxu0 %v2103
    %2212 = vmatpush1.msra.mxu0 %v2102
    %2213 = vmatprep.subr.mxu0 %v2105
    %2214 = vmatpush1.msra.mxu0 %v2104
    %2215 = vmatprep.subr.mxu0 0.0
    %2216 = vmatpush1.msra.mxu0 0.0
    %2217 = vmatprep.subr.mxu0 0.0
    %2218 = vmatpush1.msra.mxu0 0.0
    %2219 = vmatprep.subr.mxu0 0.0
    %2220 = vmatpush1.msra.mxu0 0.0
    %2221 = vmatprep.subr.mxu0 0.0
    %2222 = vmatpush1.msra.mxu0 0.0
    %2223 = vmatprep.subr.mxu0 0.0
    %2224 = vmatpush1.msra.mxu0 0.0
    %2225 = vmatprep.subr.mxu0 0.0
    %2226 = vmatpush1.msra.mxu0 0.0
    %2227 = vmatprep.subr.mxu0 0.0
    %2228 = vmatpush1.msra.mxu0 0.0
    %2229 = vmatprep.subr.mxu0 0.0
    %2230 = vmatpush1.msra.mxu0 0.0
    %2231 = vmatprep.subr.mxu0 0.0
    %2232 = vmatpush1.msra.mxu0 0.0
    %2233 = vmatprep.subr.mxu0 0.0
    %2234 = vmatpush1.msra.mxu0 0.0
    %2235 = vmatprep.subr.mxu0 0.0
    %2236 = vmatpush1.msra.mxu0 0.0
    %2237 = vmatprep.subr.mxu0 0.0
    %2238 = vmatpush1.msra.mxu0 0.0
    %2239 = vmatprep.subr.mxu0 0.0
    %2240 = vmatpush1.msra.mxu0 0.0
    %2241 = vmatprep.subr.mxu0 0.0
    %2242 = vmatpush1.msra.mxu0 0.0
    %2243 = vmatprep.mubr.f32.mxu0 %v2108
    %2244 = vmatmul.mubr.f32.gmra.mrb[0].mxu0 %v2022
    %v2245 = vpop.f32.mrb[0].mxu0
    %v2246 = vadd.f32 0.0, %v2245
    %v2247 = vpop.f32.mrb[0].mxu0
    %v2248 = vadd.f32 0.0, %v2247
    %2249 = vmatprep.mubr.f32.mxu0 %v2111
    %2250 = vmatmul.mubr.f32.gmra.mrb[0].mxu0 %v2024
    %v2251 = vpop.f32.mrb[0].mxu0
    %v2252 = vadd.f32 0.0, %v2251
    %v2253 = vpop.f32.mrb[0].mxu0
    %v2254 = vadd.f32 0.0, %v2253
    %2255 = vmatprep.mubr.f32.mxu0 %v2114
    %2256 = vmatmul.mubr.f32.gmra.mrb[0].mxu0 %v2026
    %v2257 = vpop.f32.mrb[0].mxu0
    %v2258 = vadd.f32 0.0, %v2257
    %v2259 = vpop.f32.mrb[0].mxu0
    %v2260 = vadd.f32 0.0, %v2259
    %2261 = vmatprep.mubr.f32.mxu0 %v2117
    %2262 = vmatmul.mubr.f32.gmra.mrb[0].mxu0 %v2028
    %v2263 = vpop.f32.mrb[0].mxu0
    %v2264 = vadd.f32 0.0, %v2263
    %v2265 = vpop.f32.mrb[0].mxu0
    %v2266 = vadd.f32 0.0, %v2265
    %2267 = vmatprep.mubr.f32.mxu0 %v2120
    %2268 = vmatmul.mubr.f32.gmra.mrb[0].mxu0 %v2030
    %v2269 = vpop.f32.mrb[0].mxu0
    %v2270 = vadd.f32 0.0, %v2269
    %v2271 = vpop.f32.mrb[0].mxu0
    %v2272 = vadd.f32 0.0, %v2271
    %2273 = vmatprep.mubr.f32.mxu0 %v2123
    %2274 = vmatmul.mubr.f32.gmra.mrb[0].mxu0 %v2032
    %v2275 = vpop.f32.mrb[0].mxu0
    %v2276 = vadd.f32 0.0, %v2275
    %v2277 = vpop.f32.mrb[0].mxu0
    %v2278 = vadd.f32 0.0, %v2277
    %2279 = vmatprep.mubr.f32.mxu0 %v2126
    %2280 = vmatmul.mubr.f32.gmra.mrb[0].mxu0 %v2034
    %v2281 = vpop.f32.mrb[0].mxu0
    %v2282 = vadd.f32 0.0, %v2281
    %v2283 = vpop.f32.mrb[0].mxu0
    %v2284 = vadd.f32 0.0, %v2283
    %2285 = vmatprep.mubr.f32.mxu0 %v2129
    %2286 = vmatmul.mubr.f32.gmra.mrb[0].mxu0 %v2036
    %v2287 = vpop.f32.mrb[0].mxu0
    %v2288 = vadd.f32 0.0, %v2287
    %v2289 = vpop.f32.mrb[0].mxu0
    %v2290 = vadd.f32 0.0, %v2289
    %2291 = vmatprep.mubr.f32.mxu0 %v2132
    %2292 = vmatmul.mubr.f32.gmra.mrb[0].mxu0 %v2038
    %v2293 = vpop.f32.mrb[0].mxu0
    %v2294 = vadd.f32 0.0, %v2293
    %v2295 = vpop.f32.mrb[0].mxu0
    %v2296 = vadd.f32 0.0, %v2295
    %2297 = vmatprep.mubr.f32.mxu0 %v2135
    %2298 = vmatmul.mubr.f32.gmra.mrb[0].mxu0 %v2040
    %v2299 = vpop.f32.mrb[0].mxu0
    %v2300 = vadd.f32 0.0, %v2299
    %v2301 = vpop.f32.mrb[0].mxu0
    %v2302 = vadd.f32 0.0, %v2301
    %2303 = vmatprep.mubr.f32.mxu0 %v2138
    %2304 = vmatmul.mubr.f32.gmra.mrb[0].mxu0 %v2042
    %v2305 = vpop.f32.mrb[0].mxu0
    %v2306 = vadd.f32 0.0, %v2305
    %v2307 = vpop.f32.mrb[0].mxu0
    %v2308 = vadd.f32 0.0, %v2307
    %2309 = vmatprep.mubr.f32.mxu0 %v2141
    %2310 = vmatmul.mubr.f32.gmra.mrb[0].mxu0 %v2044
    %v2311 = vpop.f32.mrb[0].mxu0
    %v2312 = vadd.f32 0.0, %v2311
    %v2313 = vpop.f32.mrb[0].mxu0
    %v2314 = vadd.f32 0.0, %v2313
    %2315 = vmatprep.mubr.f32.mxu0 %v2144
    %2316 = vmatmul.mubr.f32.gmra.mrb[0].mxu0 %v2046
    %v2317 = vpop.f32.mrb[0].mxu0
    %v2318 = vadd.f32 0.0, %v2317
    %v2319 = vpop.f32.mrb[0].mxu0
    %v2320 = vadd.f32 0.0, %v2319
    %2321 = vmatprep.mubr.f32.mxu0 %v2147
    %2322 = vmatmul.mubr.f32.gmra.mrb[0].mxu0 %v2048
    %v2323 = vpop.f32.mrb[0].mxu0
    %v2324 = vadd.f32 0.0, %v2323
    %v2325 = vpop.f32.mrb[0].mxu0
    %v2326 = vadd.f32 0.0, %v2325
    %2327 = vmatprep.mubr.f32.mxu0 %v2150
    %2328 = vmatmul.mubr.f32.gmra.mrb[0].mxu0 %v2050
    %v2329 = vpop.f32.mrb[0].mxu0
    %v2330 = vadd.f32 0.0, %v2329
    %v2331 = vpop.f32.mrb[0].mxu0
    %v2332 = vadd.f32 0.0, %v2331
    %2333 = vmatprep.mubr.f32.mxu0 %v2153
    %2334 = vmatmul.mubr.f32.gmra.mrb[0].mxu0 %v2052
    %v2335 = vpop.f32.mrb[0].mxu0
    %v2336 = vadd.f32 0.0, %v2335
    %v2337 = vpop.f32.mrb[0].mxu0
    %v2338 = vadd.f32 0.0, %v2337
    %2339 = vmatprep.mubr.f32.mxu0 %v2156
    %2340 = vmatmul.mubr.f32.gmra.mrb[0].mxu0 %v2054
    %v2341 = vpop.f32.mrb[0].mxu0
    %v2342 = vadd.f32 0.0, %v2341
    %v2343 = vpop.f32.mrb[0].mxu0
    %v2344 = vadd.f32 0.0, %v2343
    %2345 = vmatprep.mubr.f32.mxu0 %v2159
    %2346 = vmatmul.mubr.f32.gmra.mrb[0].mxu0 %v2056
    %v2347 = vpop.f32.mrb[0].mxu0
    %v2348 = vadd.f32 0.0, %v2347
    %v2349 = vpop.f32.mrb[0].mxu0
    %v2350 = vadd.f32 0.0, %v2349
    %2351 = vmatprep.mubr.f32.mxu0 %v2162
    %2352 = vmatmul.mubr.f32.gmra.mrb[0].mxu0 %v2058
    %v2353 = vpop.f32.mrb[0].mxu0
    %v2354 = vadd.f32 0.0, %v2353
    %v2355 = vpop.f32.mrb[0].mxu0
    %v2356 = vadd.f32 0.0, %v2355
    %2357 = vmatprep.mubr.f32.mxu0 %v2165
    %2358 = vmatmul.mubr.f32.gmra.mrb[0].mxu0 %v2060
    %v2359 = vpop.f32.mrb[0].mxu0
    %v2360 = vadd.f32 0.0, %v2359
    %v2361 = vpop.f32.mrb[0].mxu0
    %v2362 = vadd.f32 0.0, %v2361
    %2363 = vmatprep.mubr.f32.mxu0 %v2168
    %2364 = vmatmul.mubr.f32.gmra.mrb[0].mxu0 %v2062
    %v2365 = vpop.f32.mrb[0].mxu0
    %v2366 = vadd.f32 0.0, %v2365
    %v2367 = vpop.f32.mrb[0].mxu0
    %v2368 = vadd.f32 0.0, %v2367
    %2369 = vmatprep.mubr.f32.mxu0 %v2171
    %2370 = vmatmul.mubr.f32.gmra.mrb[0].mxu0 %v2064
    %v2371 = vpop.f32.mrb[0].mxu0
    %v2372 = vadd.f32 0.0, %v2371
    %v2373 = vpop.f32.mrb[0].mxu0
    %v2374 = vadd.f32 0.0, %v2373
    %2375 = vmatprep.mubr.f32.mxu0 %v2174
    %2376 = vmatmul.mubr.f32.gmra.mrb[0].mxu0 %v2066
    %v2377 = vpop.f32.mrb[0].mxu0
    %v2378 = vadd.f32 0.0, %v2377
    %v2379 = vpop.f32.mrb[0].mxu0
    %v2380 = vadd.f32 0.0, %v2379
    %2381 = vmatprep.mubr.f32.mxu0 %v2177
    %2382 = vmatmul.mubr.f32.gmra.mrb[0].mxu0 %v2068
    %v2383 = vpop.f32.mrb[0].mxu0
    %v2384 = vadd.f32 0.0, %v2383
    %v2385 = vpop.f32.mrb[0].mxu0
    %v2386 = vadd.f32 0.0, %v2385
    %2387 = vdwg.mxu0
    %v2388 = vmax.f32 %v2022, %v2246
    %v2389 = vmax.f32 %v2023, %v2248
    %v2390 = vmax.f32 %v2024, %v2252
    %v2391 = vmax.f32 %v2025, %v2254
    %v2392 = vmax.f32 %v2026, %v2258
    %v2393 = vmax.f32 %v2027, %v2260
    %v2394 = vmax.f32 %v2028, %v2264
    %v2395 = vmax.f32 %v2029, %v2266
    %v2396 = vmax.f32 %v2030, %v2270
    %v2397 = vmax.f32 %v2031, %v2272
    %v2398 = vmax.f32 %v2032, %v2276
    %v2399 = vmax.f32 %v2033, %v2278
    %v2400 = vmax.f32 %v2034, %v2282
    %v2401 = vmax.f32 %v2035, %v2284
    %v2402 = vmax.f32 %v2036, %v2288
    %v2403 = vmax.f32 %v2037, %v2290
    %v2404 = vmax.f32 %v2038, %v2294
    %v2405 = vmax.f32 %v2039, %v2296
    %v2406 = vmax.f32 %v2040, %v2300
    %v2407 = vmax.f32 %v2041, %v2302
    %v2408 = vmax.f32 %v2042, %v2306
    %v2409 = vmax.f32 %v2043, %v2308
    %v2410 = vmax.f32 %v2044, %v2312
    %v2411 = vmax.f32 %v2045, %v2314
    %v2412 = vmax.f32 %v2046, %v2318
    %v2413 = vmax.f32 %v2047, %v2320
    %v2414 = vmax.f32 %v2048, %v2324
    %v2415 = vmax.f32 %v2049, %v2326
    %v2416 = vmax.f32 %v2050, %v2330
    %v2417 = vmax.f32 %v2051, %v2332
    %v2418 = vmax.f32 %v2052, %v2336
    %v2419 = vmax.f32 %v2053, %v2338
    %v2420 = vmax.f32 %v2054, %v2342
    %v2421 = vmax.f32 %v2055, %v2344
    %v2422 = vmax.f32 %v2056, %v2348
    %v2423 = vmax.f32 %v2057, %v2350
    %v2424 = vmax.f32 %v2058, %v2354
    %v2425 = vmax.f32 %v2059, %v2356
    %v2426 = vmax.f32 %v2060, %v2360
    %v2427 = vmax.f32 %v2061, %v2362
    %v2428 = vmax.f32 %v2062, %v2366
    %v2429 = vmax.f32 %v2063, %v2368
    %v2430 = vmax.f32 %v2064, %v2372
    %v2431 = vmax.f32 %v2065, %v2374
    %v2432 = vmax.f32 %v2066, %v2378
    %v2433 = vmax.f32 %v2067, %v2380
    %v2434 = vmax.f32 %v2068, %v2384
    %v2435 = vmax.f32 %v2069, %v2386
    %v2436 = vld [vmem:[#allocation5] sm:$0xff]
    %v2437 = vld [vmem:[#allocation5 + $0x8] sm:$0xff]
    %v2438 = vld [vmem:[#allocation5 + $0x10] sm:$0xff]
    %v2439 = vld [vmem:[#allocation5 + $0x18] sm:$0xff]
    %v2440 = vld [vmem:[#allocation5 + $0x20] sm:$0xff]
    %v2441 = vld [vmem:[#allocation5 + $0x28] sm:$0xff]
    %v2442 = vld [vmem:[#allocation5 + $0x30] sm:$0xff]
    %v2443 = vld [vmem:[#allocation5 + $0x38] sm:$0xff]
    %v2444 = vld [vmem:[#allocation5 + $0x40] sm:$0xff]
    %v2445 = vld [vmem:[#allocation5 + $0x48] sm:$0xff]
    %v2446 = vld [vmem:[#allocation5 + $0x50] sm:$0xff]
    %v2447 = vld [vmem:[#allocation5 + $0x58] sm:$0xff]
    %v2448 = vld [vmem:[#allocation5 + $0x60] sm:$0xff]
    %v2449 = vld [vmem:[#allocation5 + $0x68] sm:$0xff]
    %v2450 = vld [vmem:[#allocation5 + $0x70] sm:$0xff]
    %v2451 = vld [vmem:[#allocation5 + $0x78] sm:$0xff]
    %v2452 = vld [vmem:[#allocation5 + $0x80] sm:$0xff]
    %v2453 = vld [vmem:[#allocation5 + $0x88] sm:$0xff]
    %v2454 = vld [vmem:[#allocation5 + $0x90] sm:$0xff]
    %v2455 = vld [vmem:[#allocation5 + $0x98] sm:$0xff]
    %v2456 = vld [vmem:[#allocation5 + $0xa0] sm:$0xff]
    %v2457 = vld [vmem:[#allocation5 + $0xa8] sm:$0xff]
    %v2458 = vld [vmem:[#allocation5 + $0xb0] sm:$0xff]
    %v2459 = vld [vmem:[#allocation5 + $0xb8] sm:$0xff]
    %vm2460 = vcmask 523264
    %v2462 = vsel %vm2460, %v2437, 0
    %v2465 = vsel %vm2460, %v2439, 0
    %v2468 = vsel %vm2460, %v2441, 0
    %v2471 = vsel %vm2460, %v2443, 0
    %v2474 = vsel %vm2460, %v2445, 0
    %v2477 = vsel %vm2460, %v2447, 0
    %v2480 = vsel %vm2460, %v2449, 0
    %v2483 = vsel %vm2460, %v2451, 0
    %v2486 = vsel %vm2460, %v2453, 0
    %v2489 = vsel %vm2460, %v2455, 0
    %v2492 = vsel %vm2460, %v2457, 0
    %v2495 = vsel %vm2460, %v2459, 0
    %2497 = vmatprep.subr.mxu0 %v2389
    %2498 = vmatpush1.msra.mxu0 %v2388
    %2499 = vmatprep.subr.mxu0 %v2391
    %2500 = vmatpush1.msra.mxu0 %v2390
    %2501 = vmatprep.subr.mxu0 %v2393
    %2502 = vmatpush1.msra.mxu0 %v2392
    %2503 = vmatprep.subr.mxu0 %v2395
    %2504 = vmatpush1.msra.mxu0 %v2394
    %2505 = vmatprep.subr.mxu0 %v2397
    %2506 = vmatpush1.msra.mxu0 %v2396
    %2507 = vmatprep.subr.mxu0 %v2399
    %2508 = vmatpush1.msra.mxu0 %v2398
    %2509 = vmatprep.subr.mxu0 %v2401
    %2510 = vmatpush1.msra.mxu0 %v2400
    %2511 = vmatprep.subr.mxu0 %v2403
    %2512 = vmatpush1.msra.mxu0 %v2402
    %2513 = vmatprep.subr.mxu0 %v2405
    %2514 = vmatpush1.msra.mxu0 %v2404
    %2515 = vmatprep.subr.mxu0 %v2407
    %2516 = vmatpush1.msra.mxu0 %v2406
    %2517 = vmatprep.subr.mxu0 %v2409
    %2518 = vmatpush1.msra.mxu0 %v2408
    %2519 = vmatprep.subr.mxu0 %v2411
    %2520 = vmatpush1.msra.mxu0 %v2410
    %2521 = vmatprep.subr.mxu0 %v2413
    %2522 = vmatpush1.msra.mxu0 %v2412
    %2523 = vmatprep.subr.mxu0 %v2415
    %2524 = vmatpush1.msra.mxu0 %v2414
    %2525 = vmatprep.subr.mxu0 %v2417
    %2526 = vmatpush1.msra.mxu0 %v2416
    %2527 = vmatprep.subr.mxu0 %v2419
    %2528 = vmatpush1.msra.mxu0 %v2418
    %2529 = vmatprep.subr.mxu0 %v2421
    %2530 = vmatpush1.msra.mxu0 %v2420
    %2531 = vmatprep.subr.mxu0 %v2423
    %2532 = vmatpush1.msra.mxu0 %v2422
    %2533 = vmatprep.subr.mxu0 %v2425
    %2534 = vmatpush1.msra.mxu0 %v2424
    %2535 = vmatprep.subr.mxu0 %v2427
    %2536 = vmatpush1.msra.mxu0 %v2426
    %2537 = vmatprep.subr.mxu0 %v2429
    %2538 = vmatpush1.msra.mxu0 %v2428
    %2539 = vmatprep.subr.mxu0 %v2431
    %2540 = vmatpush1.msra.mxu0 %v2430
    %2541 = vmatprep.subr.mxu0 %v2433
    %2542 = vmatpush1.msra.mxu0 %v2432
    %2543 = vmatprep.subr.mxu0 %v2435
    %2544 = vmatpush1.msra.mxu0 %v2434
    %2545 = vmatprep.subr.mxu0 0.0
    %2546 = vmatpush1.msra.mxu0 0.0
    %2547 = vmatprep.subr.mxu0 0.0
    %2548 = vmatpush1.msra.mxu0 0.0
    %2549 = vmatprep.subr.mxu0 0.0
    %2550 = vmatpush1.msra.mxu0 0.0
    %2551 = vmatprep.subr.mxu0 0.0
    %2552 = vmatpush1.msra.mxu0 0.0
    %2553 = vmatprep.subr.mxu0 0.0
    %2554 = vmatpush1.msra.mxu0 0.0
    %2555 = vmatprep.subr.mxu0 0.0
    %2556 = vmatpush1.msra.mxu0 0.0
    %2557 = vmatprep.subr.mxu0 0.0
    %2558 = vmatpush1.msra.mxu0 0.0
    %2559 = vmatprep.subr.mxu0 0.0
    %2560 = vmatpush1.msra.mxu0 0.0
    %2561 = vmatprep.mubr.f32.mxu0 %v2462
    %2562 = vmatmul.mubr.f32.gmra.mrb[0].mxu0 %v2436
    %v2563 = vpop.f32.mrb[0].mxu0
    %v2564 = vadd.f32 0.0, %v2563
    %v2565 = vpop.f32.mrb[0].mxu0
    %v2566 = vadd.f32 0.0, %v2565
    %2567 = vmatprep.mubr.f32.mxu0 %v2465
    %2568 = vmatmul.mubr.f32.gmra.mrb[0].mxu0 %v2438
    %v2569 = vpop.f32.mrb[0].mxu0
    %v2570 = vadd.f32 0.0, %v2569
    %v2571 = vpop.f32.mrb[0].mxu0
    %v2572 = vadd.f32 0.0, %v2571
    %2573 = vmatprep.mubr.f32.mxu0 %v2468
    %2574 = vmatmul.mubr.f32.gmra.mrb[0].mxu0 %v2440
    %v2575 = vpop.f32.mrb[0].mxu0
    %v2576 = vadd.f32 0.0, %v2575
    %v2577 = vpop.f32.mrb[0].mxu0
    %v2578 = vadd.f32 0.0, %v2577
    %2579 = vmatprep.mubr.f32.mxu0 %v2471
    %2580 = vmatmul.mubr.f32.gmra.mrb[0].mxu0 %v2442
    %v2581 = vpop.f32.mrb[0].mxu0
    %v2582 = vadd.f32 0.0, %v2581
    %v2583 = vpop.f32.mrb[0].mxu0
    %v2584 = vadd.f32 0.0, %v2583
    %2585 = vmatprep.mubr.f32.mxu0 %v2474
    %2586 = vmatmul.mubr.f32.gmra.mrb[0].mxu0 %v2444
    %v2587 = vpop.f32.mrb[0].mxu0
    %v2588 = vadd.f32 0.0, %v2587
    %v2589 = vpop.f32.mrb[0].mxu0
    %v2590 = vadd.f32 0.0, %v2589
    %2591 = vmatprep.mubr.f32.mxu0 %v2477
    %2592 = vmatmul.mubr.f32.gmra.mrb[0].mxu0 %v2446
    %v2593 = vpop.f32.mrb[0].mxu0
    %v2594 = vadd.f32 0.0, %v2593
    %v2595 = vpop.f32.mrb[0].mxu0
    %v2596 = vadd.f32 0.0, %v2595
    %2597 = vmatprep.mubr.f32.mxu0 %v2480
    %2598 = vmatmul.mubr.f32.gmra.mrb[0].mxu0 %v2448
    %v2599 = vpop.f32.mrb[0].mxu0
    %v2600 = vadd.f32 0.0, %v2599
    %v2601 = vpop.f32.mrb[0].mxu0
    %v2602 = vadd.f32 0.0, %v2601
    %2603 = vmatprep.mubr.f32.mxu0 %v2483
    %2604 = vmatmul.mubr.f32.gmra.mrb[0].mxu0 %v2450
    %v2605 = vpop.f32.mrb[0].mxu0
    %v2606 = vadd.f32 0.0, %v2605
    %v2607 = vpop.f32.mrb[0].mxu0
    %v2608 = vadd.f32 0.0, %v2607
    %2609 = vmatprep.mubr.f32.mxu0 %v2486
    %2610 = vmatmul.mubr.f32.gmra.mrb[0].mxu0 %v2452
    %v2611 = vpop.f32.mrb[0].mxu0
    %v2612 = vadd.f32 0.0, %v2611
    %v2613 = vpop.f32.mrb[0].mxu0
    %v2614 = vadd.f32 0.0, %v2613
    %2615 = vmatprep.mubr.f32.mxu0 %v2489
    %2616 = vmatmul.mubr.f32.gmra.mrb[0].mxu0 %v2454
    %v2617 = vpop.f32.mrb[0].mxu0
    %v2618 = vadd.f32 0.0, %v2617
    %v2619 = vpop.f32.mrb[0].mxu0
    %v2620 = vadd.f32 0.0, %v2619
    %2621 = vmatprep.mubr.f32.mxu0 %v2492
    %2622 = vmatmul.mubr.f32.gmra.mrb[0].mxu0 %v2456
    %v2623 = vpop.f32.mrb[0].mxu0
    %v2624 = vadd.f32 0.0, %v2623
    %v2625 = vpop.f32.mrb[0].mxu0
    %v2626 = vadd.f32 0.0, %v2625
    %2627 = vmatprep.mubr.f32.mxu0 %v2495
    %2628 = vmatmul.mubr.f32.gmra.mrb[0].mxu0 %v2458
    %v2629 = vpop.f32.mrb[0].mxu0
    %v2630 = vadd.f32 0.0, %v2629
    %v2631 = vpop.f32.mrb[0].mxu0
    %v2632 = vadd.f32 0.0, %v2631
    %2633 = vdwg.mxu0
    %v2634 = vld [vmem:[#allocation7] sm:$0xff]
    %v2635 = vld [vmem:[#allocation7 + $0x8] sm:$0xff]
    %v2636 = vld [vmem:[#allocation7 + $0x10] sm:$0xff]
    %v2637 = vld [vmem:[#allocation7 + $0x18] sm:$0xff]
    %v2638 = vld [vmem:[#allocation7 + $0x20] sm:$0xff]
    %v2639 = vld [vmem:[#allocation7 + $0x28] sm:$0xff]
    %v2640 = vld [vmem:[#allocation7 + $0x30] sm:$0xff]
    %v2641 = vld [vmem:[#allocation7 + $0x38] sm:$0xff]
    %v2642 = vld [vmem:[#allocation7 + $0x40] sm:$0xff]
    %v2643 = vld [vmem:[#allocation7 + $0x48] sm:$0xff]
    %v2644 = vld [vmem:[#allocation7 + $0x50] sm:$0xff]
    %v2645 = vld [vmem:[#allocation7 + $0x58] sm:$0xff]
    %v2646 = vld [vmem:[#allocation7 + $0x60] sm:$0xff]
    %v2647 = vld [vmem:[#allocation7 + $0x68] sm:$0xff]
    %v2648 = vld [vmem:[#allocation7 + $0x70] sm:$0xff]
    %v2649 = vld [vmem:[#allocation7 + $0x78] sm:$0xff]
    %v2650 = vld [vmem:[#allocation7 + $0x80] sm:$0xff]
    %v2651 = vld [vmem:[#allocation7 + $0x88] sm:$0xff]
    %v2652 = vld [vmem:[#allocation7 + $0x90] sm:$0xff]
    %v2653 = vld [vmem:[#allocation7 + $0x98] sm:$0xff]
    %v2654 = vld [vmem:[#allocation7 + $0xa0] sm:$0xff]
    %v2655 = vld [vmem:[#allocation7 + $0xa8] sm:$0xff]
    %v2656 = vld [vmem:[#allocation7 + $0xb0] sm:$0xff]
    %v2657 = vld [vmem:[#allocation7 + $0xb8] sm:$0xff]
    %v2659 = vsel %vm2460, %v2635, 0
    %v2662 = vsel %vm2460, %v2637, 0
    %v2665 = vsel %vm2460, %v2639, 0
    %v2668 = vsel %vm2460, %v2641, 0
    %v2671 = vsel %vm2460, %v2643, 0
    %v2674 = vsel %vm2460, %v2645, 0
    %v2677 = vsel %vm2460, %v2647, 0
    %v2680 = vsel %vm2460, %v2649, 0
    %v2683 = vsel %vm2460, %v2651, 0
    %v2686 = vsel %vm2460, %v2653, 0
    %v2689 = vsel %vm2460, %v2655, 0
    %v2692 = vsel %vm2460, %v2657, 0
    %2694 = vmatprep.subr.mxu0 %v2389
    %2695 = vmatpush1.msra.mxu0 %v2388
    %2696 = vmatprep.subr.mxu0 %v2391
    %2697 = vmatpush1.msra.mxu0 %v2390
    %2698 = vmatprep.subr.mxu0 %v2393
    %2699 = vmatpush1.msra.mxu0 %v2392
    %2700 = vmatprep.subr.mxu0 %v2395
    %2701 = vmatpush1.msra.mxu0 %v2394
    %2702 = vmatprep.subr.mxu0 %v2397
    %2703 = vmatpush1.msra.mxu0 %v2396
    %2704 = vmatprep.subr.mxu0 %v2399
    %2705 = vmatpush1.msra.mxu0 %v2398
    %2706 = vmatprep.subr.mxu0 %v2401
    %2707 = vmatpush1.msra.mxu0 %v2400
    %2708 = vmatprep.subr.mxu0 %v2403
    %2709 = vmatpush1.msra.mxu0 %v2402
    %2710 = vmatprep.subr.mxu0 %v2405
    %2711 = vmatpush1.msra.mxu0 %v2404
    %2712 = vmatprep.subr.mxu0 %v2407
    %2713 = vmatpush1.msra.mxu0 %v2406
    %2714 = vmatprep.subr.mxu0 %v2409
    %2715 = vmatpush1.msra.mxu0 %v2408
    %2716 = vmatprep.subr.mxu0 %v2411
    %2717 = vmatpush1.msra.mxu0 %v2410
    %2718 = vmatprep.subr.mxu0 %v2413
    %2719 = vmatpush1.msra.mxu0 %v2412
    %2720 = vmatprep.subr.mxu0 %v2415
    %2721 = vmatpush1.msra.mxu0 %v2414
    %2722 = vmatprep.subr.mxu0 %v2417
    %2723 = vmatpush1.msra.mxu0 %v2416
    %2724 = vmatprep.subr.mxu0 %v2419
    %2725 = vmatpush1.msra.mxu0 %v2418
    %2726 = vmatprep.subr.mxu0 %v2421
    %2727 = vmatpush1.msra.mxu0 %v2420
    %2728 = vmatprep.subr.mxu0 %v2423
    %2729 = vmatpush1.msra.mxu0 %v2422
    %2730 = vmatprep.subr.mxu0 %v2425
    %2731 = vmatpush1.msra.mxu0 %v2424
    %2732 = vmatprep.subr.mxu0 %v2427
    %2733 = vmatpush1.msra.mxu0 %v2426
    %2734 = vmatprep.subr.mxu0 %v2429
    %2735 = vmatpush1.msra.mxu0 %v2428
    %2736 = vmatprep.subr.mxu0 %v2431
    %2737 = vmatpush1.msra.mxu0 %v2430
    %2738 = vmatprep.subr.mxu0 %v2433
    %2739 = vmatpush1.msra.mxu0 %v2432
    %2740 = vmatprep.subr.mxu0 %v2435
    %2741 = vmatpush1.msra.mxu0 %v2434
    %2742 = vmatprep.subr.mxu0 0.0
    %2743 = vmatpush1.msra.mxu0 0.0
    %2744 = vmatprep.subr.mxu0 0.0
    %2745 = vmatpush1.msra.mxu0 0.0
    %2746 = vmatprep.subr.mxu0 0.0
    %2747 = vmatpush1.msra.mxu0 0.0
    %2748 = vmatprep.subr.mxu0 0.0
    %2749 = vmatpush1.msra.mxu0 0.0
    %2750 = vmatprep.subr.mxu0 0.0
    %2751 = vmatpush1.msra.mxu0 0.0
    %2752 = vmatprep.subr.mxu0 0.0
    %2753 = vmatpush1.msra.mxu0 0.0
    %2754 = vmatprep.subr.mxu0 0.0
    %2755 = vmatpush1.msra.mxu0 0.0
    %2756 = vmatprep.subr.mxu0 0.0
    %2757 = vmatpush1.msra.mxu0 0.0
    %2758 = vmatprep.mubr.f32.mxu0 %v2659
    %2759 = vmatmul.mubr.f32.gmra.mrb[0].mxu0 %v2634
    %v2760 = vpop.f32.mrb[0].mxu0
    %v2761 = vadd.f32 0.0, %v2760
    %v2762 = vpop.f32.mrb[0].mxu0
    %v2763 = vadd.f32 0.0, %v2762
    %2764 = vmatprep.mubr.f32.mxu0 %v2662
    %2765 = vmatmul.mubr.f32.gmra.mrb[0].mxu0 %v2636
    %v2766 = vpop.f32.mrb[0].mxu0
    %v2767 = vadd.f32 0.0, %v2766
    %v2768 = vpop.f32.mrb[0].mxu0
    %v2769 = vadd.f32 0.0, %v2768
    %2770 = vmatprep.mubr.f32.mxu0 %v2665
    %2771 = vmatmul.mubr.f32.gmra.mrb[0].mxu0 %v2638
    %v2772 = vpop.f32.mrb[0].mxu0
    %v2773 = vadd.f32 0.0, %v2772
    %v2774 = vpop.f32.mrb[0].mxu0
    %v2775 = vadd.f32 0.0, %v2774
    %2776 = vmatprep.mubr.f32.mxu0 %v2668
    %2777 = vmatmul.mubr.f32.gmra.mrb[0].mxu0 %v2640
    %v2778 = vpop.f32.mrb[0].mxu0
    %v2779 = vadd.f32 0.0, %v2778
    %v2780 = vpop.f32.mrb[0].mxu0
    %v2781 = vadd.f32 0.0, %v2780
    %2782 = vmatprep.mubr.f32.mxu0 %v2671
    %2783 = vmatmul.mubr.f32.gmra.mrb[0].mxu0 %v2642
    %v2784 = vpop.f32.mrb[0].mxu0
    %v2785 = vadd.f32 0.0, %v2784
    %v2786 = vpop.f32.mrb[0].mxu0
    %v2787 = vadd.f32 0.0, %v2786
    %2788 = vmatprep.mubr.f32.mxu0 %v2674
    %2789 = vmatmul.mubr.f32.gmra.mrb[0].mxu0 %v2644
    %v2790 = vpop.f32.mrb[0].mxu0
    %v2791 = vadd.f32 0.0, %v2790
    %v2792 = vpop.f32.mrb[0].mxu0
    %v2793 = vadd.f32 0.0, %v2792
    %2794 = vmatprep.mubr.f32.mxu0 %v2677
    %2795 = vmatmul.mubr.f32.gmra.mrb[0].mxu0 %v2646
    %v2796 = vpop.f32.mrb[0].mxu0
    %v2797 = vadd.f32 0.0, %v2796
    %v2798 = vpop.f32.mrb[0].mxu0
    %v2799 = vadd.f32 0.0, %v2798
    %2800 = vmatprep.mubr.f32.mxu0 %v2680
    %2801 = vmatmul.mubr.f32.gmra.mrb[0].mxu0 %v2648
    %v2802 = vpop.f32.mrb[0].mxu0
    %v2803 = vadd.f32 0.0, %v2802
    %v2804 = vpop.f32.mrb[0].mxu0
    %v2805 = vadd.f32 0.0, %v2804
    %2806 = vmatprep.mubr.f32.mxu0 %v2683
    %2807 = vmatmul.mubr.f32.gmra.mrb[0].mxu0 %v2650
    %v2808 = vpop.f32.mrb[0].mxu0
    %v2809 = vadd.f32 0.0, %v2808
    %v2810 = vpop.f32.mrb[0].mxu0
    %v2811 = vadd.f32 0.0, %v2810
    %2812 = vmatprep.mubr.f32.mxu0 %v2686
    %2813 = vmatmul.mubr.f32.gmra.mrb[0].mxu0 %v2652
    %v2814 = vpop.f32.mrb[0].mxu0
    %v2815 = vadd.f32 0.0, %v2814
    %v2816 = vpop.f32.mrb[0].mxu0
    %v2817 = vadd.f32 0.0, %v2816
    %2818 = vmatprep.mubr.f32.mxu0 %v2689
    %2819 = vmatmul.mubr.f32.gmra.mrb[0].mxu0 %v2654
    %v2820 = vpop.f32.mrb[0].mxu0
    %v2821 = vadd.f32 0.0, %v2820
    %v2822 = vpop.f32.mrb[0].mxu0
    %v2823 = vadd.f32 0.0, %v2822
    %2824 = vmatprep.mubr.f32.mxu0 %v2692
    %2825 = vmatmul.mubr.f32.gmra.mrb[0].mxu0 %v2656
    %v2826 = vpop.f32.mrb[0].mxu0
    %v2827 = vadd.f32 0.0, %v2826
    %v2828 = vpop.f32.mrb[0].mxu0
    %v2829 = vadd.f32 0.0, %v2828
    %2830 = vdwg.mxu0
    %v2831 = vmax.f32 %v2564, %v2761
    %v2832 = vmax.f32 %v2566, %v2763
    %v2833 = vmax.f32 %v2570, %v2767
    %v2834 = vmax.f32 %v2572, %v2769
    %v2835 = vmax.f32 %v2576, %v2773
    %v2836 = vmax.f32 %v2578, %v2775
    %v2837 = vmax.f32 %v2582, %v2779
    %v2838 = vmax.f32 %v2584, %v2781
    %v2839 = vmax.f32 %v2588, %v2785
    %v2840 = vmax.f32 %v2590, %v2787
    %v2841 = vmax.f32 %v2594, %v2791
    %v2842 = vmax.f32 %v2596, %v2793
    %v2843 = vmax.f32 %v2600, %v2797
    %v2844 = vmax.f32 %v2602, %v2799
    %v2845 = vmax.f32 %v2606, %v2803
    %v2846 = vmax.f32 %v2608, %v2805
    %v2847 = vmax.f32 %v2612, %v2809
    %v2848 = vmax.f32 %v2614, %v2811
    %v2849 = vmax.f32 %v2618, %v2815
    %v2850 = vmax.f32 %v2620, %v2817
    %v2851 = vmax.f32 %v2624, %v2821
    %v2852 = vmax.f32 %v2626, %v2823
    %v2853 = vmax.f32 %v2630, %v2827
    %v2854 = vmax.f32 %v2632, %v2829
    %v2855 = vld [vmem:[#allocation8] sm:$0xff]
    %v2856 = vld [vmem:[#allocation8 + $0x8] sm:$0xff]
    %v2857 = vld [vmem:[#allocation8 + $0x10] sm:$0xff]
    %v2858 = vld [vmem:[#allocation8 + $0x18] sm:$0xff]
    %v2859 = vld [vmem:[#allocation8 + $0x20] sm:$0xff]
    %v2860 = vld [vmem:[#allocation8 + $0x28] sm:$0xff]
    %v2861 = vld [vmem:[#allocation8 + $0x30] sm:$0xff]
    %v2862 = vld [vmem:[#allocation8 + $0x38] sm:$0xff]
    %vm2863 = vcmask 785408
    %v2865 = vsel %vm2863, %v2855, 0
    %v2868 = vsel %vm2863, %v2856, 0
    %v2871 = vsel %vm2863, %v2857, 0
    %v2874 = vsel %vm2863, %v2858, 0
    %v2877 = vsel %vm2863, %v2859, 0
    %v2880 = vsel %vm2863, %v2860, 0
    %v2883 = vsel %vm2863, %v2861, 0
    %v2886 = vsel %vm2863, %v2862, 0
    %2888 = vmatprep.subr.mxu0 %v2832
    %2889 = vmatpush1.msra.mxu0 %v2831
    %2890 = vmatprep.subr.mxu0 %v2834
    %2891 = vmatpush1.msra.mxu0 %v2833
    %2892 = vmatprep.subr.mxu0 %v2836
    %2893 = vmatpush1.msra.mxu0 %v2835
    %2894 = vmatprep.subr.mxu0 %v2838
    %2895 = vmatpush1.msra.mxu0 %v2837
    %2896 = vmatprep.subr.mxu0 %v2840
    %2897 = vmatpush1.msra.mxu0 %v2839
    %2898 = vmatprep.subr.mxu0 %v2842
    %2899 = vmatpush1.msra.mxu0 %v2841
    %2900 = vmatprep.subr.mxu0 %v2844
    %2901 = vmatpush1.msra.mxu0 %v2843
    %2902 = vmatprep.subr.mxu0 %v2846
    %2903 = vmatpush1.msra.mxu0 %v2845
    %2904 = vmatprep.subr.mxu0 %v2848
    %2905 = vmatpush1.msra.mxu0 %v2847
    %2906 = vmatprep.subr.mxu0 %v2850
    %2907 = vmatpush1.msra.mxu0 %v2849
    %2908 = vmatprep.subr.mxu0 %v2852
    %2909 = vmatpush1.msra.mxu0 %v2851
    %2910 = vmatprep.subr.mxu0 %v2854
    %2911 = vmatpush1.msra.mxu0 %v2853
    %2912 = vmatprep.subr.mxu0 0.0
    %2913 = vmatpush1.msra.mxu0 0.0
    %2914 = vmatprep.subr.mxu0 0.0
    %2915 = vmatpush1.msra.mxu0 0.0
    %2916 = vmatprep.subr.mxu0 0.0
    %2917 = vmatpush1.msra.mxu0 0.0
    %2918 = vmatprep.subr.mxu0 0.0
    %2919 = vmatpush1.msra.mxu0 0.0
    %2920 = vmatprep.subr.mxu0 0.0
    %2921 = vmatpush1.msra.mxu0 0.0
    %2922 = vmatprep.subr.mxu0 0.0
    %2923 = vmatpush1.msra.mxu0 0.0
    %2924 = vmatprep.subr.mxu0 0.0
    %2925 = vmatpush1.msra.mxu0 0.0
    %2926 = vmatprep.subr.mxu0 0.0
    %2927 = vmatpush1.msra.mxu0 0.0
    %2928 = vmatprep.subr.mxu0 0.0
    %2929 = vmatpush1.msra.mxu0 0.0
    %2930 = vmatprep.subr.mxu0 0.0
    %2931 = vmatpush1.msra.mxu0 0.0
    %2932 = vmatprep.subr.mxu0 0.0
    %2933 = vmatpush1.msra.mxu0 0.0
    %2934 = vmatprep.subr.mxu0 0.0
    %2935 = vmatpush1.msra.mxu0 0.0
    %2936 = vmatprep.subr.mxu0 0.0
    %2937 = vmatpush1.msra.mxu0 0.0
    %2938 = vmatprep.subr.mxu0 0.0
    %2939 = vmatpush1.msra.mxu0 0.0
    %2940 = vmatprep.subr.mxu0 0.0
    %2941 = vmatpush1.msra.mxu0 0.0
    %2942 = vmatprep.subr.mxu0 0.0
    %2943 = vmatpush1.msra.mxu0 0.0
    %2944 = vmatprep.subr.mxu0 0.0
    %2945 = vmatpush1.msra.mxu0 0.0
    %2946 = vmatprep.subr.mxu0 0.0
    %2947 = vmatpush1.msra.mxu0 0.0
    %2948 = vmatprep.subr.mxu0 0.0
    %2949 = vmatpush1.msra.mxu0 0.0
    %2950 = vmatprep.subr.mxu0 0.0
    %2951 = vmatpush1.msra.mxu0 0.0
    %2952 = vmatprep.mubr.f32.mxu0 0.0
    %2953 = vmatmul.mubr.f32.gmra.mrb[0].mxu0 %v2865
    %v2954 = vpop.f32.mrb[0].mxu0
    %v2955 = vadd.f32 0.0, %v2954
    %v2956 = vpop.f32.mrb[0].mxu0
    %v2957 = vadd.f32 0.0, %v2956
    %2958 = vmatprep.mubr.f32.mxu0 0.0
    %2959 = vmatmul.mubr.f32.gmra.mrb[0].mxu0 %v2868
    %v2960 = vpop.f32.mrb[0].mxu0
    %v2961 = vadd.f32 0.0, %v2960
    %v2962 = vpop.f32.mrb[0].mxu0
    %v2963 = vadd.f32 0.0, %v2962
    %2964 = vmatprep.mubr.f32.mxu0 0.0
    %2965 = vmatmul.mubr.f32.gmra.mrb[0].mxu0 %v2871
    %v2966 = vpop.f32.mrb[0].mxu0
    %v2967 = vadd.f32 0.0, %v2966
    %v2968 = vpop.f32.mrb[0].mxu0
    %v2969 = vadd.f32 0.0, %v2968
    %2970 = vmatprep.mubr.f32.mxu0 0.0
    %2971 = vmatmul.mubr.f32.gmra.mrb[0].mxu0 %v2874
    %v2972 = vpop.f32.mrb[0].mxu0
    %v2973 = vadd.f32 0.0, %v2972
    %v2974 = vpop.f32.mrb[0].mxu0
    %v2975 = vadd.f32 0.0, %v2974
    %2976 = vmatprep.mubr.f32.mxu0 0.0
    %2977 = vmatmul.mubr.f32.gmra.mrb[0].mxu0 %v2877
    %v2978 = vpop.f32.mrb[0].mxu0
    %v2979 = vadd.f32 0.0, %v2978
    %v2980 = vpop.f32.mrb[0].mxu0
    %v2981 = vadd.f32 0.0, %v2980
    %2982 = vmatprep.mubr.f32.mxu0 0.0
    %2983 = vmatmul.mubr.f32.gmra.mrb[0].mxu0 %v2880
    %v2984 = vpop.f32.mrb[0].mxu0
    %v2985 = vadd.f32 0.0, %v2984
    %v2986 = vpop.f32.mrb[0].mxu0
    %v2987 = vadd.f32 0.0, %v2986
    %2988 = vmatprep.mubr.f32.mxu0 0.0
    %2989 = vmatmul.mubr.f32.gmra.mrb[0].mxu0 %v2883
    %v2990 = vpop.f32.mrb[0].mxu0
    %v2991 = vadd.f32 0.0, %v2990
    %v2992 = vpop.f32.mrb[0].mxu0
    %v2993 = vadd.f32 0.0, %v2992
    %2994 = vmatprep.mubr.f32.mxu0 0.0
    %2995 = vmatmul.mubr.f32.gmra.mrb[0].mxu0 %v2886
    %v2996 = vpop.f32.mrb[0].mxu0
    %v2997 = vadd.f32 0.0, %v2996
    %v2998 = vpop.f32.mrb[0].mxu0
    %v2999 = vadd.f32 0.0, %v2998
    %3000 = vdwg.mxu0
    %v3001 = vld [vmem:[#allocation10] sm:$0xff]
    %v3002 = vld [vmem:[#allocation10 + $0x8] sm:$0xff]
    %v3003 = vld [vmem:[#allocation10 + $0x10] sm:$0xff]
    %v3004 = vld [vmem:[#allocation10 + $0x18] sm:$0xff]
    %v3005 = vld [vmem:[#allocation10 + $0x20] sm:$0xff]
    %v3006 = vld [vmem:[#allocation10 + $0x28] sm:$0xff]
    %v3007 = vld [vmem:[#allocation10 + $0x30] sm:$0xff]
    %v3008 = vld [vmem:[#allocation10 + $0x38] sm:$0xff]
    %v3009 = vld [vmem:[#allocation10 + $0x40] sm:$0xff]
    %v3010 = vld [vmem:[#allocation10 + $0x48] sm:$0xff]
    %v3011 = vld [vmem:[#allocation10 + $0x50] sm:$0xff]
    %v3012 = vld [vmem:[#allocation10 + $0x58] sm:$0xff]
    %v3013 = vld [vmem:[#allocation10 + $0x60] sm:$0xff]
    %v3014 = vld [vmem:[#allocation10 + $0x68] sm:$0xff]
    %v3015 = vld [vmem:[#allocation10 + $0x70] sm:$0xff]
    %v3016 = vld [vmem:[#allocation10 + $0x78] sm:$0xff]
    %v3017 = vld [vmem:[#allocation10 + $0x80] sm:$0xff]
    %v3018 = vld [vmem:[#allocation10 + $0x88] sm:$0xff]
    %s3019 = scalar_lea.vmem [#allocation8], 64
    %v3020 = vld [vmem:[%s3019] sm:$0xff]
    %v3021 = vld [vmem:[%s3019 + $0x8] sm:$0xff]
    %v3022 = vld [vmem:[%s3019 + $0x10] sm:$0xff]
    %v3023 = vld [vmem:[%s3019 + $0x18] sm:$0xff]
    %v3024 = vld [vmem:[%s3019 + $0x20] sm:$0xff]
    %v3025 = vld [vmem:[%s3019 + $0x28] sm:$0xff]
    %v3026 = vld [vmem:[%s3019 + $0x30] sm:$0xff]
    %v3027 = vld [vmem:[%s3019 + $0x38] sm:$0xff]
    %v3029 = vsel %vm2863, %v3020, 0
    %v3032 = vsel %vm2863, %v3021, 0
    %v3035 = vsel %vm2863, %v3022, 0
    %v3038 = vsel %vm2863, %v3023, 0
    %v3041 = vsel %vm2863, %v3024, 0
    %v3044 = vsel %vm2863, %v3025, 0
    %v3047 = vsel %vm2863, %v3026, 0
    %v3050 = vsel %vm2863, %v3027, 0
    %3052 = vmatprep.subr.mxu0 %v2832
    %3053 = vmatpush1.msra.mxu0 %v2831
    %3054 = vmatprep.subr.mxu0 %v2834
    %3055 = vmatpush1.msra.mxu0 %v2833
    %3056 = vmatprep.subr.mxu0 %v2836
    %3057 = vmatpush1.msra.mxu0 %v2835
    %3058 = vmatprep.subr.mxu0 %v2838
    %3059 = vmatpush1.msra.mxu0 %v2837
    %3060 = vmatprep.subr.mxu0 %v2840
    %3061 = vmatpush1.msra.mxu0 %v2839
    %3062 = vmatprep.subr.mxu0 %v2842
    %3063 = vmatpush1.msra.mxu0 %v2841
    %3064 = vmatprep.subr.mxu0 %v2844
    %3065 = vmatpush1.msra.mxu0 %v2843
    %3066 = vmatprep.subr.mxu0 %v2846
    %3067 = vmatpush1.msra.mxu0 %v2845
    %3068 = vmatprep.subr.mxu0 %v2848
    %3069 = vmatpush1.msra.mxu0 %v2847
    %3070 = vmatprep.subr.mxu0 %v2850
    %3071 = vmatpush1.msra.mxu0 %v2849
    %3072 = vmatprep.subr.mxu0 %v2852
    %3073 = vmatpush1.msra.mxu0 %v2851
    %3074 = vmatprep.subr.mxu0 %v2854
    %3075 = vmatpush1.msra.mxu0 %v2853
    %3076 = vmatprep.subr.mxu0 0.0
    %3077 = vmatpush1.msra.mxu0 0.0
    %3078 = vmatprep.subr.mxu0 0.0
    %3079 = vmatpush1.msra.mxu0 0.0
    %3080 = vmatprep.subr.mxu0 0.0
    %3081 = vmatpush1.msra.mxu0 0.0
    %3082 = vmatprep.subr.mxu0 0.0
    %3083 = vmatpush1.msra.mxu0 0.0
    %3084 = vmatprep.subr.mxu0 0.0
    %3085 = vmatpush1.msra.mxu0 0.0
    %3086 = vmatprep.subr.mxu0 0.0
    %3087 = vmatpush1.msra.mxu0 0.0
    %3088 = vmatprep.subr.mxu0 0.0
    %3089 = vmatpush1.msra.mxu0 0.0
    %3090 = vmatprep.subr.mxu0 0.0
    %3091 = vmatpush1.msra.mxu0 0.0
    %3092 = vmatprep.subr.mxu0 0.0
    %3093 = vmatpush1.msra.mxu0 0.0
    %3094 = vmatprep.subr.mxu0 0.0
    %3095 = vmatpush1.msra.mxu0 0.0
    %3096 = vmatprep.subr.mxu0 0.0
    %3097 = vmatpush1.msra.mxu0 0.0
    %3098 = vmatprep.subr.mxu0 0.0
    %3099 = vmatpush1.msra.mxu0 0.0
    %3100 = vmatprep.subr.mxu0 0.0
    %3101 = vmatpush1.msra.mxu0 0.0
    %3102 = vmatprep.subr.mxu0 0.0
    %3103 = vmatpush1.msra.mxu0 0.0
    %3104 = vmatprep.subr.mxu0 0.0
    %3105 = vmatpush1.msra.mxu0 0.0
    %3106 = vmatprep.subr.mxu0 0.0
    %3107 = vmatpush1.msra.mxu0 0.0
    %3108 = vmatprep.subr.mxu0 0.0
    %3109 = vmatpush1.msra.mxu0 0.0
    %3110 = vmatprep.subr.mxu0 0.0
    %3111 = vmatpush1.msra.mxu0 0.0
    %3112 = vmatprep.subr.mxu0 0.0
    %3113 = vmatpush1.msra.mxu0 0.0
    %3114 = vmatprep.subr.mxu0 0.0
    %3115 = vmatpush1.msra.mxu0 0.0
    %3116 = vmatprep.mubr.f32.mxu0 0.0
    %3117 = vmatmul.mubr.f32.gmra.mrb[0].mxu0 %v3029
    %v3118 = vpop.f32.mrb[0].mxu0
    %v3119 = vadd.f32 0.0, %v3118
    %v3120 = vpop.f32.mrb[0].mxu0
    %v3121 = vadd.f32 0.0, %v3120
    %3122 = vmatprep.mubr.f32.mxu0 0.0
    %3123 = vmatmul.mubr.f32.gmra.mrb[0].mxu0 %v3032
    %v3124 = vpop.f32.mrb[0].mxu0
    %v3125 = vadd.f32 0.0, %v3124
    %v3126 = vpop.f32.mrb[0].mxu0
    %v3127 = vadd.f32 0.0, %v3126
    %3128 = vmatprep.mubr.f32.mxu0 0.0
    %3129 = vmatmul.mubr.f32.gmra.mrb[0].mxu0 %v3035
    %v3130 = vpop.f32.mrb[0].mxu0
    %v3131 = vadd.f32 0.0, %v3130
    %v3132 = vpop.f32.mrb[0].mxu0
    %v3133 = vadd.f32 0.0, %v3132
    %3134 = vmatprep.mubr.f32.mxu0 0.0
    %3135 = vmatmul.mubr.f32.gmra.mrb[0].mxu0 %v3038
    %v3136 = vpop.f32.mrb[0].mxu0
    %v3137 = vadd.f32 0.0, %v3136
    %v3138 = vpop.f32.mrb[0].mxu0
    %v3139 = vadd.f32 0.0, %v3138
    %3140 = vmatprep.mubr.f32.mxu0 0.0
    %3141 = vmatmul.mubr.f32.gmra.mrb[0].mxu0 %v3041
    %v3142 = vpop.f32.mrb[0].mxu0
    %v3143 = vadd.f32 0.0, %v3142
    %v3144 = vpop.f32.mrb[0].mxu0
    %v3145 = vadd.f32 0.0, %v3144
    %3146 = vmatprep.mubr.f32.mxu0 0.0
    %3147 = vmatmul.mubr.f32.gmra.mrb[0].mxu0 %v3044
    %v3148 = vpop.f32.mrb[0].mxu0
    %v3149 = vadd.f32 0.0, %v3148
    %v3150 = vpop.f32.mrb[0].mxu0
    %v3151 = vadd.f32 0.0, %v3150
    %3152 = vmatprep.mubr.f32.mxu0 0.0
    %3153 = vmatmul.mubr.f32.gmra.mrb[0].mxu0 %v3047
    %v3154 = vpop.f32.mrb[0].mxu0
    %v3155 = vadd.f32 0.0, %v3154
    %v3156 = vpop.f32.mrb[0].mxu0
    %v3157 = vadd.f32 0.0, %v3156
    %3158 = vmatprep.mubr.f32.mxu0 0.0
    %3159 = vmatmul.mubr.f32.gmra.mrb[0].mxu0 %v3050
    %v3160 = vpop.f32.mrb[0].mxu0
    %v3161 = vadd.f32 0.0, %v3160
    %v3162 = vpop.f32.mrb[0].mxu0
    %v3163 = vadd.f32 0.0, %v3162
    %3164 = vdwg.mxu0
    %s3165 = scalar_lea.vmem [#allocation10], 144
    %v3166 = vld [vmem:[%s3165] sm:$0xff]
    %v3167 = vld [vmem:[%s3165 + $0x8] sm:$0xff]
    %v3168 = vld [vmem:[%s3165 + $0x10] sm:$0xff]
    %v3169 = vld [vmem:[%s3165 + $0x18] sm:$0xff]
    %v3170 = vld [vmem:[%s3165 + $0x20] sm:$0xff]
    %v3171 = vld [vmem:[%s3165 + $0x28] sm:$0xff]
    %v3172 = vld [vmem:[%s3165 + $0x30] sm:$0xff]
    %v3173 = vld [vmem:[%s3165 + $0x38] sm:$0xff]
    %v3174 = vld [vmem:[%s3165 + $0x40] sm:$0xff]
    %v3175 = vld [vmem:[%s3165 + $0x48] sm:$0xff]
    %v3176 = vld [vmem:[%s3165 + $0x50] sm:$0xff]
    %v3177 = vld [vmem:[%s3165 + $0x58] sm:$0xff]
    %v3178 = vld [vmem:[%s3165 + $0x60] sm:$0xff]
    %v3179 = vld [vmem:[%s3165 + $0x68] sm:$0xff]
    %v3180 = vld [vmem:[%s3165 + $0x70] sm:$0xff]
    %v3181 = vld [vmem:[%s3165 + $0x78] sm:$0xff]
    %v3182 = vld [vmem:[%s3165 + $0x80] sm:$0xff]
    %v3183 = vld [vmem:[%s3165 + $0x88] sm:$0xff]
    %v3185 = vsel %vm2106, %v3121, 0
    %v3188 = vsel %vm2106, %v3127, 0
    %v3191 = vsel %vm2106, %v3133, 0
    %v3194 = vsel %vm2106, %v3139, 0
    %v3197 = vsel %vm2106, %v3145, 0
    %v3200 = vsel %vm2106, %v3151, 0
    %v3203 = vsel %vm2106, %v3157, 0
    %v3206 = vsel %vm2106, %v3163, 0
    %3208 = vmatprep.subr.mxu0 0.0
    %3209 = vmatpush1.msra.mxu0 %v3166
    %3210 = vmatprep.subr.mxu0 0.0
    %3211 = vmatpush1.msra.mxu0 %v3167
    %3212 = vmatprep.subr.mxu0 0.0
    %3213 = vmatpush1.msra.mxu0 %v3168
    %3214 = vmatprep.subr.mxu0 0.0
    %3215 = vmatpush1.msra.mxu0 %v3169
    %3216 = vmatprep.subr.mxu0 0.0
    %3217 = vmatpush1.msra.mxu0 %v3170
    %3218 = vmatprep.subr.mxu0 0.0
    %3219 = vmatpush1.msra.mxu0 %v3171
    %3220 = vmatprep.subr.mxu0 0.0
    %3221 = vmatpush1.msra.mxu0 %v3172
    %3222 = vmatprep.subr.mxu0 0.0
    %3223 = vmatpush1.msra.mxu0 %v3173
    %3224 = vmatprep.subr.mxu0 0.0
    %3225 = vmatpush1.msra.mxu0 %v3174
    %3226 = vmatprep.subr.mxu0 0.0
    %3227 = vmatpush1.msra.mxu0 %v3175
    %3228 = vmatprep.subr.mxu0 0.0
    %3229 = vmatpush1.msra.mxu0 %v3176
    %3230 = vmatprep.subr.mxu0 0.0
    %3231 = vmatpush1.msra.mxu0 %v3177
    %3232 = vmatprep.subr.mxu0 0.0
    %3233 = vmatpush1.msra.mxu0 %v3178
    %3234 = vmatprep.subr.mxu0 0.0
    %3235 = vmatpush1.msra.mxu0 %v3179
    %3236 = vmatprep.subr.mxu0 0.0
    %3237 = vmatpush1.msra.mxu0 %v3180
    %3238 = vmatprep.subr.mxu0 0.0
    %3239 = vmatpush1.msra.mxu0 %v3181
    %3240 = vmatprep.subr.mxu0 0.0
    %3241 = vmatpush1.msra.mxu0 %v3182
    %3242 = vmatprep.subr.mxu0 0.0
    %3243 = vmatpush1.msra.mxu0 %v3183
    %3244 = vmatprep.subr.mxu0 0.0
    %3245 = vmatpush1.msra.mxu0 0.0
    %3246 = vmatprep.subr.mxu0 0.0
    %3247 = vmatpush1.msra.mxu0 0.0
    %3248 = vmatprep.subr.mxu0 0.0
    %3249 = vmatpush1.msra.mxu0 0.0
    %3250 = vmatprep.subr.mxu0 0.0
    %3251 = vmatpush1.msra.mxu0 0.0
    %3252 = vmatprep.subr.mxu0 0.0
    %3253 = vmatpush1.msra.mxu0 0.0
    %3254 = vmatprep.subr.mxu0 0.0
    %3255 = vmatpush1.msra.mxu0 0.0
    %3256 = vmatprep.subr.mxu0 0.0
    %3257 = vmatpush1.msra.mxu0 0.0
    %3258 = vmatprep.subr.mxu0 0.0
    %3259 = vmatpush1.msra.mxu0 0.0
    %3260 = vmatprep.subr.mxu0 0.0
    %3261 = vmatpush1.msra.mxu0 0.0
    %3262 = vmatprep.subr.mxu0 0.0
    %3263 = vmatpush1.msra.mxu0 0.0
    %3264 = vmatprep.subr.mxu0 0.0
    %3265 = vmatpush1.msra.mxu0 0.0
    %3266 = vmatprep.subr.mxu0 0.0
    %3267 = vmatpush1.msra.mxu0 0.0
    %3268 = vmatprep.subr.mxu0 0.0
    %3269 = vmatpush1.msra.mxu0 0.0
    %3270 = vmatprep.subr.mxu0 0.0
    %3271 = vmatpush1.msra.mxu0 0.0
    %3272 = vmatprep.mubr.f32.mxu0 %v3185
    %3273 = vmatmul.mubr.f32.gmra.mrb[0].mxu0 %v3119
    %v3274 = vpop.f32.mrb[0].mxu0
    %v3275 = vadd.f32 0.0, %v3274
    %v3276 = vpop.f32.mrb[0].mxu0
    %3277 = vmatprep.mubr.f32.mxu0 %v3188
    %3278 = vmatmul.mubr.f32.gmra.mrb[0].mxu0 %v3125
    %v3279 = vpop.f32.mrb[0].mxu0
    %v3280 = vadd.f32 0.0, %v3279
    %v3281 = vpop.f32.mrb[0].mxu0
    %3282 = vmatprep.mubr.f32.mxu0 %v3191
    %3283 = vmatmul.mubr.f32.gmra.mrb[0].mxu0 %v3131
    %v3284 = vpop.f32.mrb[0].mxu0
    %v3285 = vadd.f32 0.0, %v3284
    %v3286 = vpop.f32.mrb[0].mxu0
    %3287 = vmatprep.mubr.f32.mxu0 %v3194
    %3288 = vmatmul.mubr.f32.gmra.mrb[0].mxu0 %v3137
    %v3289 = vpop.f32.mrb[0].mxu0
    %v3290 = vadd.f32 0.0, %v3289
    %v3291 = vpop.f32.mrb[0].mxu0
    %3292 = vmatprep.mubr.f32.mxu0 %v3197
    %3293 = vmatmul.mubr.f32.gmra.mrb[0].mxu0 %v3143
    %v3294 = vpop.f32.mrb[0].mxu0
    %v3295 = vadd.f32 0.0, %v3294
    %v3296 = vpop.f32.mrb[0].mxu0
    %3297 = vmatprep.mubr.f32.mxu0 %v3200
    %3298 = vmatmul.mubr.f32.gmra.mrb[0].mxu0 %v3149
    %v3299 = vpop.f32.mrb[0].mxu0
    %v3300 = vadd.f32 0.0, %v3299
    %v3301 = vpop.f32.mrb[0].mxu0
    %3302 = vmatprep.mubr.f32.mxu0 %v3203
    %3303 = vmatmul.mubr.f32.gmra.mrb[0].mxu0 %v3155
    %v3304 = vpop.f32.mrb[0].mxu0
    %v3305 = vadd.f32 0.0, %v3304
    %v3306 = vpop.f32.mrb[0].mxu0
    %3307 = vmatprep.mubr.f32.mxu0 %v3206
    %3308 = vmatmul.mubr.f32.gmra.mrb[0].mxu0 %v3161
    %v3309 = vpop.f32.mrb[0].mxu0
    %v3310 = vadd.f32 0.0, %v3309
    %v3311 = vpop.f32.mrb[0].mxu0
    %3312 = vdwg.mxu0
    %v3314 = vsel %vm2106, %v2957, 0
    %v3317 = vsel %vm2106, %v2963, 0
    %v3320 = vsel %vm2106, %v2969, 0
    %v3323 = vsel %vm2106, %v2975, 0
    %v3326 = vsel %vm2106, %v2981, 0
    %v3329 = vsel %vm2106, %v2987, 0
    %v3332 = vsel %vm2106, %v2993, 0
    %v3335 = vsel %vm2106, %v2999, 0
    %3337 = vmatprep.subr.mxu0 0.0
    %3338 = vmatpush1.msra.mxu0 %v3001
    %3339 = vmatprep.subr.mxu0 0.0
    %3340 = vmatpush1.msra.mxu0 %v3002
    %3341 = vmatprep.subr.mxu0 0.0
    %3342 = vmatpush1.msra.mxu0 %v3003
    %3343 = vmatprep.subr.mxu0 0.0
    %3344 = vmatpush1.msra.mxu0 %v3004
    %3345 = vmatprep.subr.mxu0 0.0
    %3346 = vmatpush1.msra.mxu0 %v3005
    %3347 = vmatprep.subr.mxu0 0.0
    %3348 = vmatpush1.msra.mxu0 %v3006
    %3349 = vmatprep.subr.mxu0 0.0
    %3350 = vmatpush1.msra.mxu0 %v3007
    %3351 = vmatprep.subr.mxu0 0.0
    %3352 = vmatpush1.msra.mxu0 %v3008
    %3353 = vmatprep.subr.mxu0 0.0
    %3354 = vmatpush1.msra.mxu0 %v3009
    %3355 = vmatprep.subr.mxu0 0.0
    %3356 = vmatpush1.msra.mxu0 %v3010
    %3357 = vmatprep.subr.mxu0 0.0
    %3358 = vmatpush1.msra.mxu0 %v3011
    %3359 = vmatprep.subr.mxu0 0.0
    %3360 = vmatpush1.msra.mxu0 %v3012
    %3361 = vmatprep.subr.mxu0 0.0
    %3362 = vmatpush1.msra.mxu0 %v3013
    %3363 = vmatprep.subr.mxu0 0.0
    %3364 = vmatpush1.msra.mxu0 %v3014
    %3365 = vmatprep.subr.mxu0 0.0
    %3366 = vmatpush1.msra.mxu0 %v3015
    %3367 = vmatprep.subr.mxu0 0.0
    %3368 = vmatpush1.msra.mxu0 %v3016
    %3369 = vmatprep.subr.mxu0 0.0
    %3370 = vmatpush1.msra.mxu0 %v3017
    %3371 = vmatprep.subr.mxu0 0.0
    %3372 = vmatpush1.msra.mxu0 %v3018
    %3373 = vmatprep.subr.mxu0 0.0
    %3374 = vmatpush1.msra.mxu0 0.0
    %3375 = vmatprep.subr.mxu0 0.0
    %3376 = vmatpush1.msra.mxu0 0.0
    %3377 = vmatprep.subr.mxu0 0.0
    %3378 = vmatpush1.msra.mxu0 0.0
    %3379 = vmatprep.subr.mxu0 0.0
    %3380 = vmatpush1.msra.mxu0 0.0
    %3381 = vmatprep.subr.mxu0 0.0
    %3382 = vmatpush1.msra.mxu0 0.0
    %3383 = vmatprep.subr.mxu0 0.0
    %3384 = vmatpush1.msra.mxu0 0.0
    %3385 = vmatprep.subr.mxu0 0.0
    %3386 = vmatpush1.msra.mxu0 0.0
    %3387 = vmatprep.subr.mxu0 0.0
    %3388 = vmatpush1.msra.mxu0 0.0
    %3389 = vmatprep.subr.mxu0 0.0
    %3390 = vmatpush1.msra.mxu0 0.0
    %3391 = vmatprep.subr.mxu0 0.0
    %3392 = vmatpush1.msra.mxu0 0.0
    %3393 = vmatprep.subr.mxu0 0.0
    %3394 = vmatpush1.msra.mxu0 0.0
    %3395 = vmatprep.subr.mxu0 0.0
    %3396 = vmatpush1.msra.mxu0 0.0
    %3397 = vmatprep.subr.mxu0 0.0
    %3398 = vmatpush1.msra.mxu0 0.0
    %3399 = vmatprep.subr.mxu0 0.0
    %3400 = vmatpush1.msra.mxu0 0.0
    %3401 = vmatprep.mubr.f32.mxu0 %v3314
    %3402 = vmatmul.mubr.f32.gmra.mrb[0].mxu0 %v2955
    %v3403 = vpop.f32.mrb[0].mxu0
    %v3404 = vadd.f32 %v3275, %v3403
    %v3405 = vpop.f32.mrb[0].mxu0
    %3406 = vmatprep.mubr.f32.mxu0 %v3317
    %3407 = vmatmul.mubr.f32.gmra.mrb[0].mxu0 %v2961
    %v3408 = vpop.f32.mrb[0].mxu0
    %v3409 = vadd.f32 %v3280, %v3408
    %v3410 = vpop.f32.mrb[0].mxu0
    %3411 = vmatprep.mubr.f32.mxu0 %v3320
    %3412 = vmatmul.mubr.f32.gmra.mrb[0].mxu0 %v2967
    %v3413 = vpop.f32.mrb[0].mxu0
    %v3414 = vadd.f32 %v3285, %v3413
    %v3415 = vpop.f32.mrb[0].mxu0
    %3416 = vmatprep.mubr.f32.mxu0 %v3323
    %3417 = vmatmul.mubr.f32.gmra.mrb[0].mxu0 %v2973
    %v3418 = vpop.f32.mrb[0].mxu0
    %v3419 = vadd.f32 %v3290, %v3418
    %v3420 = vpop.f32.mrb[0].mxu0
    %3421 = vmatprep.mubr.f32.mxu0 %v3326
    %3422 = vmatmul.mubr.f32.gmra.mrb[0].mxu0 %v2979
    %v3423 = vpop.f32.mrb[0].mxu0
    %v3424 = vadd.f32 %v3295, %v3423
    %v3425 = vpop.f32.mrb[0].mxu0
    %3426 = vmatprep.mubr.f32.mxu0 %v3329
    %3427 = vmatmul.mubr.f32.gmra.mrb[0].mxu0 %v2985
    %v3428 = vpop.f32.mrb[0].mxu0
    %v3429 = vadd.f32 %v3300, %v3428
    %v3430 = vpop.f32.mrb[0].mxu0
    %3431 = vmatprep.mubr.f32.mxu0 %v3332
    %3432 = vmatmul.mubr.f32.gmra.mrb[0].mxu0 %v2991
    %v3433 = vpop.f32.mrb[0].mxu0
    %v3434 = vadd.f32 %v3305, %v3433
    %v3435 = vpop.f32.mrb[0].mxu0
    %3436 = vmatprep.mubr.f32.mxu0 %v3335
    %3437 = vmatmul.mubr.f32.gmra.mrb[0].mxu0 %v2997
    %v3438 = vpop.f32.mrb[0].mxu0
    %v3439 = vadd.f32 %v3310, %v3438
    %v3440 = vpop.f32.mrb[0].mxu0
    %3441 = vdwg.mxu0
    %s3442 = scalar_lea.vmem [#allocation8], 128
    %v3443 = vld [vmem:[%s3442] sm:$0xff]
    %v3444 = vld [vmem:[%s3442 + $0x8] sm:$0xff]
    %v3445 = vld [vmem:[%s3442 + $0x10] sm:$0xff]
    %v3446 = vld [vmem:[%s3442 + $0x18] sm:$0xff]
    %v3447 = vld [vmem:[%s3442 + $0x20] sm:$0xff]
    %v3448 = vld [vmem:[%s3442 + $0x28] sm:$0xff]
    %v3449 = vld [vmem:[%s3442 + $0x30] sm:$0xff]
    %v3450 = vld [vmem:[%s3442 + $0x38] sm:$0xff]
    %v3452 = vsel %vm2863, %v3443, 0
    %v3455 = vsel %vm2863, %v3444, 0
    %v3458 = vsel %vm2863, %v3445, 0
    %v3461 = vsel %vm2863, %v3446, 0
    %v3464 = vsel %vm2863, %v3447, 0
    %v3467 = vsel %vm2863, %v3448, 0
    %v3470 = vsel %vm2863, %v3449, 0
    %v3473 = vsel %vm2863, %v3450, 0
    %3475 = vmatprep.subr.mxu0 %v2832
    %3476 = vmatpush1.msra.mxu0 %v2831
    %3477 = vmatprep.subr.mxu0 %v2834
    %3478 = vmatpush1.msra.mxu0 %v2833
    %3479 = vmatprep.subr.mxu0 %v2836
    %3480 = vmatpush1.msra.mxu0 %v2835
    %3481 = vmatprep.subr.mxu0 %v2838
    %3482 = vmatpush1.msra.mxu0 %v2837
    %3483 = vmatprep.subr.mxu0 %v2840
    %3484 = vmatpush1.msra.mxu0 %v2839
    %3485 = vmatprep.subr.mxu0 %v2842
    %3486 = vmatpush1.msra.mxu0 %v2841
    %3487 = vmatprep.subr.mxu0 %v2844
    %3488 = vmatpush1.msra.mxu0 %v2843
    %3489 = vmatprep.subr.mxu0 %v2846
    %3490 = vmatpush1.msra.mxu0 %v2845
    %3491 = vmatprep.subr.mxu0 %v2848
    %3492 = vmatpush1.msra.mxu0 %v2847
    %3493 = vmatprep.subr.mxu0 %v2850
    %3494 = vmatpush1.msra.mxu0 %v2849
    %3495 = vmatprep.subr.mxu0 %v2852
    %3496 = vmatpush1.msra.mxu0 %v2851
    %3497 = vmatprep.subr.mxu0 %v2854
    %3498 = vmatpush1.msra.mxu0 %v2853
    %3499 = vmatprep.subr.mxu0 0.0
    %3500 = vmatpush1.msra.mxu0 0.0
    %3501 = vmatprep.subr.mxu0 0.0
    %3502 = vmatpush1.msra.mxu0 0.0
    %3503 = vmatprep.subr.mxu0 0.0
    %3504 = vmatpush1.msra.mxu0 0.0
    %3505 = vmatprep.subr.mxu0 0.0
    %3506 = vmatpush1.msra.mxu0 0.0
    %3507 = vmatprep.subr.mxu0 0.0
    %3508 = vmatpush1.msra.mxu0 0.0
    %3509 = vmatprep.subr.mxu0 0.0
    %3510 = vmatpush1.msra.mxu0 0.0
    %3511 = vmatprep.subr.mxu0 0.0
    %3512 = vmatpush1.msra.mxu0 0.0
    %3513 = vmatprep.subr.mxu0 0.0
    %3514 = vmatpush1.msra.mxu0 0.0
    %3515 = vmatprep.subr.mxu0 0.0
    %3516 = vmatpush1.msra.mxu0 0.0
    %3517 = vmatprep.subr.mxu0 0.0
    %3518 = vmatpush1.msra.mxu0 0.0
    %3519 = vmatprep.subr.mxu0 0.0
    %3520 = vmatpush1.msra.mxu0 0.0
    %3521 = vmatprep.subr.mxu0 0.0
    %3522 = vmatpush1.msra.mxu0 0.0
    %3523 = vmatprep.subr.mxu0 0.0
    %3524 = vmatpush1.msra.mxu0 0.0
    %3525 = vmatprep.subr.mxu0 0.0
    %3526 = vmatpush1.msra.mxu0 0.0
    %3527 = vmatprep.subr.mxu0 0.0
    %3528 = vmatpush1.msra.mxu0 0.0
    %3529 = vmatprep.subr.mxu0 0.0
    %3530 = vmatpush1.msra.mxu0 0.0
    %3531 = vmatprep.subr.mxu0 0.0
    %3532 = vmatpush1.msra.mxu0 0.0
    %3533 = vmatprep.subr.mxu0 0.0
    %3534 = vmatpush1.msra.mxu0 0.0
    %3535 = vmatprep.subr.mxu0 0.0
    %3536 = vmatpush1.msra.mxu0 0.0
    %3537 = vmatprep.subr.mxu0 0.0
    %3538 = vmatpush1.msra.mxu0 0.0
    %3539 = vmatprep.mubr.f32.mxu0 0.0
    %3540 = vmatmul.mubr.f32.gmra.mrb[0].mxu0 %v3452
    %v3541 = vpop.f32.mrb[0].mxu0
    %v3542 = vadd.f32 0.0, %v3541
    %v3543 = vpop.f32.mrb[0].mxu0
    %v3544 = vadd.f32 0.0, %v3543
    %3545 = vmatprep.mubr.f32.mxu0 0.0
    %3546 = vmatmul.mubr.f32.gmra.mrb[0].mxu0 %v3455
    %v3547 = vpop.f32.mrb[0].mxu0
    %v3548 = vadd.f32 0.0, %v3547
    %v3549 = vpop.f32.mrb[0].mxu0
    %v3550 = vadd.f32 0.0, %v3549
    %3551 = vmatprep.mubr.f32.mxu0 0.0
    %3552 = vmatmul.mubr.f32.gmra.mrb[0].mxu0 %v3458
    %v3553 = vpop.f32.mrb[0].mxu0
    %v3554 = vadd.f32 0.0, %v3553
    %v3555 = vpop.f32.mrb[0].mxu0
    %v3556 = vadd.f32 0.0, %v3555
    %3557 = vmatprep.mubr.f32.mxu0 0.0
    %3558 = vmatmul.mubr.f32.gmra.mrb[0].mxu0 %v3461
    %v3559 = vpop.f32.mrb[0].mxu0
    %v3560 = vadd.f32 0.0, %v3559
    %v3561 = vpop.f32.mrb[0].mxu0
    %v3562 = vadd.f32 0.0, %v3561
    %3563 = vmatprep.mubr.f32.mxu0 0.0
    %3564 = vmatmul.mubr.f32.gmra.mrb[0].mxu0 %v3464
    %v3565 = vpop.f32.mrb[0].mxu0
    %v3566 = vadd.f32 0.0, %v3565
    %v3567 = vpop.f32.mrb[0].mxu0
    %v3568 = vadd.f32 0.0, %v3567
    %3569 = vmatprep.mubr.f32.mxu0 0.0
    %3570 = vmatmul.mubr.f32.gmra.mrb[0].mxu0 %v3467
    %v3571 = vpop.f32.mrb[0].mxu0
    %v3572 = vadd.f32 0.0, %v3571
    %v3573 = vpop.f32.mrb[0].mxu0
    %v3574 = vadd.f32 0.0, %v3573
    %3575 = vmatprep.mubr.f32.mxu0 0.0
    %3576 = vmatmul.mubr.f32.gmra.mrb[0].mxu0 %v3470
    %v3577 = vpop.f32.mrb[0].mxu0
    %v3578 = vadd.f32 0.0, %v3577
    %v3579 = vpop.f32.mrb[0].mxu0
    %v3580 = vadd.f32 0.0, %v3579
    %3581 = vmatprep.mubr.f32.mxu0 0.0
    %3582 = vmatmul.mubr.f32.gmra.mrb[0].mxu0 %v3473
    %v3583 = vpop.f32.mrb[0].mxu0
    %v3584 = vadd.f32 0.0, %v3583
    %v3585 = vpop.f32.mrb[0].mxu0
    %v3586 = vadd.f32 0.0, %v3585
    %3587 = vdwg.mxu0
    %s3588 = scalar_lea.vmem [#allocation10], 288
    %v3589 = vld [vmem:[%s3588] sm:$0xff]
    %v3590 = vld [vmem:[%s3588 + $0x8] sm:$0xff]
    %v3591 = vld [vmem:[%s3588 + $0x10] sm:$0xff]
    %v3592 = vld [vmem:[%s3588 + $0x18] sm:$0xff]
    %v3593 = vld [vmem:[%s3588 + $0x20] sm:$0xff]
    %v3594 = vld [vmem:[%s3588 + $0x28] sm:$0xff]
    %v3595 = vld [vmem:[%s3588 + $0x30] sm:$0xff]
    %v3596 = vld [vmem:[%s3588 + $0x38] sm:$0xff]
    %v3597 = vld [vmem:[%s3588 + $0x40] sm:$0xff]
    %v3598 = vld [vmem:[%s3588 + $0x48] sm:$0xff]
    %v3599 = vld [vmem:[%s3588 + $0x50] sm:$0xff]
    %v3600 = vld [vmem:[%s3588 + $0x58] sm:$0xff]
    %v3601 = vld [vmem:[%s3588 + $0x60] sm:$0xff]
    %v3602 = vld [vmem:[%s3588 + $0x68] sm:$0xff]
    %v3603 = vld [vmem:[%s3588 + $0x70] sm:$0xff]
    %v3604 = vld [vmem:[%s3588 + $0x78] sm:$0xff]
    %v3605 = vld [vmem:[%s3588 + $0x80] sm:$0xff]
    %v3606 = vld [vmem:[%s3588 + $0x88] sm:$0xff]
    %v3608 = vsel %vm2106, %v3544, 0
    %v3611 = vsel %vm2106, %v3550, 0
    %v3614 = vsel %vm2106, %v3556, 0
    %v3617 = vsel %vm2106, %v3562, 0
    %v3620 = vsel %vm2106, %v3568, 0
    %v3623 = vsel %vm2106, %v3574, 0
    %v3626 = vsel %vm2106, %v3580, 0
    %v3629 = vsel %vm2106, %v3586, 0
    %3631 = vmatprep.subr.mxu0 0.0
    %3632 = vmatpush1.msra.mxu0 %v3589
    %3633 = vmatprep.subr.mxu0 0.0
    %3634 = vmatpush1.msra.mxu0 %v3590
    %3635 = vmatprep.subr.mxu0 0.0
    %3636 = vmatpush1.msra.mxu0 %v3591
    %3637 = vmatprep.subr.mxu0 0.0
    %3638 = vmatpush1.msra.mxu0 %v3592
    %3639 = vmatprep.subr.mxu0 0.0
    %3640 = vmatpush1.msra.mxu0 %v3593
    %3641 = vmatprep.subr.mxu0 0.0
    %3642 = vmatpush1.msra.mxu0 %v3594
    %3643 = vmatprep.subr.mxu0 0.0
    %3644 = vmatpush1.msra.mxu0 %v3595
    %3645 = vmatprep.subr.mxu0 0.0
    %3646 = vmatpush1.msra.mxu0 %v3596
    %3647 = vmatprep.subr.mxu0 0.0
    %3648 = vmatpush1.msra.mxu0 %v3597
    %3649 = vmatprep.subr.mxu0 0.0
    %3650 = vmatpush1.msra.mxu0 %v3598
    %3651 = vmatprep.subr.mxu0 0.0
    %3652 = vmatpush1.msra.mxu0 %v3599
    %3653 = vmatprep.subr.mxu0 0.0
    %3654 = vmatpush1.msra.mxu0 %v3600
    %3655 = vmatprep.subr.mxu0 0.0
    %3656 = vmatpush1.msra.mxu0 %v3601
    %3657 = vmatprep.subr.mxu0 0.0
    %3658 = vmatpush1.msra.mxu0 %v3602
    %3659 = vmatprep.subr.mxu0 0.0
    %3660 = vmatpush1.msra.mxu0 %v3603
    %3661 = vmatprep.subr.mxu0 0.0
    %3662 = vmatpush1.msra.mxu0 %v3604
    %3663 = vmatprep.subr.mxu0 0.0
    %3664 = vmatpush1.msra.mxu0 %v3605
    %3665 = vmatprep.subr.mxu0 0.0
    %3666 = vmatpush1.msra.mxu0 %v3606
    %3667 = vmatprep.subr.mxu0 0.0
    %3668 = vmatpush1.msra.mxu0 0.0
    %3669 = vmatprep.subr.mxu0 0.0
    %3670 = vmatpush1.msra.mxu0 0.0
    %3671 = vmatprep.subr.mxu0 0.0
    %3672 = vmatpush1.msra.mxu0 0.0
    %3673 = vmatprep.subr.mxu0 0.0
    %3674 = vmatpush1.msra.mxu0 0.0
    %3675 = vmatprep.subr.mxu0 0.0
    %3676 = vmatpush1.msra.mxu0 0.0
    %3677 = vmatprep.subr.mxu0 0.0
    %3678 = vmatpush1.msra.mxu0 0.0
    %3679 = vmatprep.subr.mxu0 0.0
    %3680 = vmatpush1.msra.mxu0 0.0
    %3681 = vmatprep.subr.mxu0 0.0
    %3682 = vmatpush1.msra.mxu0 0.0
    %3683 = vmatprep.subr.mxu0 0.0
    %3684 = vmatpush1.msra.mxu0 0.0
    %3685 = vmatprep.subr.mxu0 0.0
    %3686 = vmatpush1.msra.mxu0 0.0
    %3687 = vmatprep.subr.mxu0 0.0
    %3688 = vmatpush1.msra.mxu0 0.0
    %3689 = vmatprep.subr.mxu0 0.0
    %3690 = vmatpush1.msra.mxu0 0.0
    %3691 = vmatprep.subr.mxu0 0.0
    %3692 = vmatpush1.msra.mxu0 0.0
    %3693 = vmatprep.subr.mxu0 0.0
    %3694 = vmatpush1.msra.mxu0 0.0
    %3695 = vmatprep.mubr.f32.mxu0 %v3608
    %3696 = vmatmul.mubr.f32.gmra.mrb[0].mxu0 %v3542
    %v3697 = vpop.f32.mrb[0].mxu0
    %v3698 = vadd.f32 0.0, %v3697
    %v3699 = vpop.f32.mrb[0].mxu0
    %3700 = vmatprep.mubr.f32.mxu0 %v3611
    %3701 = vmatmul.mubr.f32.gmra.mrb[0].mxu0 %v3548
    %v3702 = vpop.f32.mrb[0].mxu0
    %v3703 = vadd.f32 0.0, %v3702
    %v3704 = vpop.f32.mrb[0].mxu0
    %3705 = vmatprep.mubr.f32.mxu0 %v3614
    %3706 = vmatmul.mubr.f32.gmra.mrb[0].mxu0 %v3554
    %v3707 = vpop.f32.mrb[0].mxu0
    %v3708 = vadd.f32 0.0, %v3707
    %v3709 = vpop.f32.mrb[0].mxu0
    %3710 = vmatprep.mubr.f32.mxu0 %v3617
    %3711 = vmatmul.mubr.f32.gmra.mrb[0].mxu0 %v3560
    %v3712 = vpop.f32.mrb[0].mxu0
    %v3713 = vadd.f32 0.0, %v3712
    %v3714 = vpop.f32.mrb[0].mxu0
    %3715 = vmatprep.mubr.f32.mxu0 %v3620
    %3716 = vmatmul.mubr.f32.gmra.mrb[0].mxu0 %v3566
    %v3717 = vpop.f32.mrb[0].mxu0
    %v3718 = vadd.f32 0.0, %v3717
    %v3719 = vpop.f32.mrb[0].mxu0
    %3720 = vmatprep.mubr.f32.mxu0 %v3623
    %3721 = vmatmul.mubr.f32.gmra.mrb[0].mxu0 %v3572
    %v3722 = vpop.f32.mrb[0].mxu0
    %v3723 = vadd.f32 0.0, %v3722
    %v3724 = vpop.f32.mrb[0].mxu0
    %3725 = vmatprep.mubr.f32.mxu0 %v3626
    %3726 = vmatmul.mubr.f32.gmra.mrb[0].mxu0 %v3578
    %v3727 = vpop.f32.mrb[0].mxu0
    %v3728 = vadd.f32 0.0, %v3727
    %v3729 = vpop.f32.mrb[0].mxu0
    %3730 = vmatprep.mubr.f32.mxu0 %v3629
    %3731 = vmatmul.mubr.f32.gmra.mrb[0].mxu0 %v3584
    %v3732 = vpop.f32.mrb[0].mxu0
    %v3733 = vadd.f32 0.0, %v3732
    %v3734 = vpop.f32.mrb[0].mxu0
    %3735 = vdwg.mxu0
    %v3736 = vadd.f32 %v3404, %v3698
    %v3737 = vadd.f32 %v3409, %v3703
    %v3738 = vadd.f32 %v3414, %v3708
    %v3739 = vadd.f32 %v3419, %v3713
    %v3740 = vadd.f32 %v3424, %v3718
    %v3741 = vadd.f32 %v3429, %v3723
    %v3742 = vadd.f32 %v3434, %v3728
    %v3743 = vadd.f32 %v3439, %v3733
    %s3744 = scalar_lea.vmem [#allocation8], 192
    %v3745 = vld [vmem:[%s3744] sm:$0xff]
    %v3746 = vld [vmem:[%s3744 + $0x8] sm:$0xff]
    %v3747 = vld [vmem:[%s3744 + $0x10] sm:$0xff]
    %v3748 = vld [vmem:[%s3744 + $0x18] sm:$0xff]
    %v3749 = vld [vmem:[%s3744 + $0x20] sm:$0xff]
    %v3750 = vld [vmem:[%s3744 + $0x28] sm:$0xff]
    %v3751 = vld [vmem:[%s3744 + $0x30] sm:$0xff]
    %v3752 = vld [vmem:[%s3744 + $0x38] sm:$0xff]
    %v3754 = vsel %vm2863, %v3745, 0
    %v3757 = vsel %vm2863, %v3746, 0
    %v3760 = vsel %vm2863, %v3747, 0
    %v3763 = vsel %vm2863, %v3748, 0
    %v3766 = vsel %vm2863, %v3749, 0
    %v3769 = vsel %vm2863, %v3750, 0
    %v3772 = vsel %vm2863, %v3751, 0
    %v3775 = vsel %vm2863, %v3752, 0
    %3777 = vmatprep.subr.mxu0 %v2832
    %3778 = vmatpush1.msra.mxu0 %v2831
    %3779 = vmatprep.subr.mxu0 %v2834
    %3780 = vmatpush1.msra.mxu0 %v2833
    %3781 = vmatprep.subr.mxu0 %v2836
    %3782 = vmatpush1.msra.mxu0 %v2835
    %3783 = vmatprep.subr.mxu0 %v2838
    %3784 = vmatpush1.msra.mxu0 %v2837
    %3785 = vmatprep.subr.mxu0 %v2840
    %3786 = vmatpush1.msra.mxu0 %v2839
    %3787 = vmatprep.subr.mxu0 %v2842
    %3788 = vmatpush1.msra.mxu0 %v2841
    %3789 = vmatprep.subr.mxu0 %v2844
    %3790 = vmatpush1.msra.mxu0 %v2843
    %3791 = vmatprep.subr.mxu0 %v2846
    %3792 = vmatpush1.msra.mxu0 %v2845
    %3793 = vmatprep.subr.mxu0 %v2848
    %3794 = vmatpush1.msra.mxu0 %v2847
    %3795 = vmatprep.subr.mxu0 %v2850
    %3796 = vmatpush1.msra.mxu0 %v2849
    %3797 = vmatprep.subr.mxu0 %v2852
    %3798 = vmatpush1.msra.mxu0 %v2851
    %3799 = vmatprep.subr.mxu0 %v2854
    %3800 = vmatpush1.msra.mxu0 %v2853
    %3801 = vmatprep.subr.mxu0 0.0
    %3802 = vmatpush1.msra.mxu0 0.0
    %3803 = vmatprep.subr.mxu0 0.0
    %3804 = vmatpush1.msra.mxu0 0.0
    %3805 = vmatprep.subr.mxu0 0.0
    %3806 = vmatpush1.msra.mxu0 0.0
    %3807 = vmatprep.subr.mxu0 0.0
    %3808 = vmatpush1.msra.mxu0 0.0
    %3809 = vmatprep.subr.mxu0 0.0
    %3810 = vmatpush1.msra.mxu0 0.0
    %3811 = vmatprep.subr.mxu0 0.0
    %3812 = vmatpush1.msra.mxu0 0.0
    %3813 = vmatprep.subr.mxu0 0.0
    %3814 = vmatpush1.msra.mxu0 0.0
    %3815 = vmatprep.subr.mxu0 0.0
    %3816 = vmatpush1.msra.mxu0 0.0
    %3817 = vmatprep.subr.mxu0 0.0
    %3818 = vmatpush1.msra.mxu0 0.0
    %3819 = vmatprep.subr.mxu0 0.0
    %3820 = vmatpush1.msra.mxu0 0.0
    %3821 = vmatprep.subr.mxu0 0.0
    %3822 = vmatpush1.msra.mxu0 0.0
    %3823 = vmatprep.subr.mxu0 0.0
    %3824 = vmatpush1.msra.mxu0 0.0
    %3825 = vmatprep.subr.mxu0 0.0
    %3826 = vmatpush1.msra.mxu0 0.0
    %3827 = vmatprep.subr.mxu0 0.0
    %3828 = vmatpush1.msra.mxu0 0.0
    %3829 = vmatprep.subr.mxu0 0.0
    %3830 = vmatpush1.msra.mxu0 0.0
    %3831 = vmatprep.subr.mxu0 0.0
    %3832 = vmatpush1.msra.mxu0 0.0
    %3833 = vmatprep.subr.mxu0 0.0
    %3834 = vmatpush1.msra.mxu0 0.0
    %3835 = vmatprep.subr.mxu0 0.0
    %3836 = vmatpush1.msra.mxu0 0.0
    %3837 = vmatprep.subr.mxu0 0.0
    %3838 = vmatpush1.msra.mxu0 0.0
    %3839 = vmatprep.subr.mxu0 0.0
    %3840 = vmatpush1.msra.mxu0 0.0
    %3841 = vmatprep.mubr.f32.mxu0 0.0
    %3842 = vmatmul.mubr.f32.gmra.mrb[0].mxu0 %v3754
    %v3843 = vpop.f32.mrb[0].mxu0
    %v3844 = vadd.f32 0.0, %v3843
    %v3845 = vpop.f32.mrb[0].mxu0
    %v3846 = vadd.f32 0.0, %v3845
    %3847 = vmatprep.mubr.f32.mxu0 0.0
    %3848 = vmatmul.mubr.f32.gmra.mrb[0].mxu0 %v3757
    %v3849 = vpop.f32.mrb[0].mxu0
    %v3850 = vadd.f32 0.0, %v3849
    %v3851 = vpop.f32.mrb[0].mxu0
    %v3852 = vadd.f32 0.0, %v3851
    %3853 = vmatprep.mubr.f32.mxu0 0.0
    %3854 = vmatmul.mubr.f32.gmra.mrb[0].mxu0 %v3760
    %v3855 = vpop.f32.mrb[0].mxu0
    %v3856 = vadd.f32 0.0, %v3855
    %v3857 = vpop.f32.mrb[0].mxu0
    %v3858 = vadd.f32 0.0, %v3857
    %3859 = vmatprep.mubr.f32.mxu0 0.0
    %3860 = vmatmul.mubr.f32.gmra.mrb[0].mxu0 %v3763
    %v3861 = vpop.f32.mrb[0].mxu0
    %v3862 = vadd.f32 0.0, %v3861
    %v3863 = vpop.f32.mrb[0].mxu0
    %v3864 = vadd.f32 0.0, %v3863
    %3865 = vmatprep.mubr.f32.mxu0 0.0
    %3866 = vmatmul.mubr.f32.gmra.mrb[0].mxu0 %v3766
    %v3867 = vpop.f32.mrb[0].mxu0
    %v3868 = vadd.f32 0.0, %v3867
    %v3869 = vpop.f32.mrb[0].mxu0
    %v3870 = vadd.f32 0.0, %v3869
    %3871 = vmatprep.mubr.f32.mxu0 0.0
    %3872 = vmatmul.mubr.f32.gmra.mrb[0].mxu0 %v3769
    %v3873 = vpop.f32.mrb[0].mxu0
    %v3874 = vadd.f32 0.0, %v3873
    %v3875 = vpop.f32.mrb[0].mxu0
    %v3876 = vadd.f32 0.0, %v3875
    %3877 = vmatprep.mubr.f32.mxu0 0.0
    %3878 = vmatmul.mubr.f32.gmra.mrb[0].mxu0 %v3772
    %v3879 = vpop.f32.mrb[0].mxu0
    %v3880 = vadd.f32 0.0, %v3879
    %v3881 = vpop.f32.mrb[0].mxu0
    %v3882 = vadd.f32 0.0, %v3881
    %3883 = vmatprep.mubr.f32.mxu0 0.0
    %3884 = vmatmul.mubr.f32.gmra.mrb[0].mxu0 %v3775
    %v3885 = vpop.f32.mrb[0].mxu0
    %v3886 = vadd.f32 0.0, %v3885
    %v3887 = vpop.f32.mrb[0].mxu0
    %v3888 = vadd.f32 0.0, %v3887
    %3889 = vdwg.mxu0
    %s3890 = scalar_lea.vmem [#allocation10], 432
    %v3891 = vld [vmem:[%s3890] sm:$0xff]
    %v3892 = vld [vmem:[%s3890 + $0x8] sm:$0xff]
    %v3893 = vld [vmem:[%s3890 + $0x10] sm:$0xff]
    %v3894 = vld [vmem:[%s3890 + $0x18] sm:$0xff]
    %v3895 = vld [vmem:[%s3890 + $0x20] sm:$0xff]
    %v3896 = vld [vmem:[%s3890 + $0x28] sm:$0xff]
    %v3897 = vld [vmem:[%s3890 + $0x30] sm:$0xff]
    %v3898 = vld [vmem:[%s3890 + $0x38] sm:$0xff]
    %v3899 = vld [vmem:[%s3890 + $0x40] sm:$0xff]
    %v3900 = vld [vmem:[%s3890 + $0x48] sm:$0xff]
    %v3901 = vld [vmem:[%s3890 + $0x50] sm:$0xff]
    %v3902 = vld [vmem:[%s3890 + $0x58] sm:$0xff]
    %v3903 = vld [vmem:[%s3890 + $0x60] sm:$0xff]
    %v3904 = vld [vmem:[%s3890 + $0x68] sm:$0xff]
    %v3905 = vld [vmem:[%s3890 + $0x70] sm:$0xff]
    %v3906 = vld [vmem:[%s3890 + $0x78] sm:$0xff]
    %v3907 = vld [vmem:[%s3890 + $0x80] sm:$0xff]
    %v3908 = vld [vmem:[%s3890 + $0x88] sm:$0xff]
    %v3910 = vsel %vm2106, %v3846, 0
    %v3913 = vsel %vm2106, %v3852, 0
    %v3916 = vsel %vm2106, %v3858, 0
    %v3919 = vsel %vm2106, %v3864, 0
    %v3922 = vsel %vm2106, %v3870, 0
    %v3925 = vsel %vm2106, %v3876, 0
    %v3928 = vsel %vm2106, %v3882, 0
    %v3931 = vsel %vm2106, %v3888, 0
    %3933 = vmatprep.subr.mxu0 0.0
    %3934 = vmatpush1.msra.mxu0 %v3891
    %3935 = vmatprep.subr.mxu0 0.0
    %3936 = vmatpush1.msra.mxu0 %v3892
    %3937 = vmatprep.subr.mxu0 0.0
    %3938 = vmatpush1.msra.mxu0 %v3893
    %3939 = vmatprep.subr.mxu0 0.0
    %3940 = vmatpush1.msra.mxu0 %v3894
    %3941 = vmatprep.subr.mxu0 0.0
    %3942 = vmatpush1.msra.mxu0 %v3895
    %3943 = vmatprep.subr.mxu0 0.0
    %3944 = vmatpush1.msra.mxu0 %v3896
    %3945 = vmatprep.subr.mxu0 0.0
    %3946 = vmatpush1.msra.mxu0 %v3897
    %3947 = vmatprep.subr.mxu0 0.0
    %3948 = vmatpush1.msra.mxu0 %v3898
    %3949 = vmatprep.subr.mxu0 0.0
    %3950 = vmatpush1.msra.mxu0 %v3899
    %3951 = vmatprep.subr.mxu0 0.0
    %3952 = vmatpush1.msra.mxu0 %v3900
    %3953 = vmatprep.subr.mxu0 0.0
    %3954 = vmatpush1.msra.mxu0 %v3901
    %3955 = vmatprep.subr.mxu0 0.0
    %3956 = vmatpush1.msra.mxu0 %v3902
    %3957 = vmatprep.subr.mxu0 0.0
    %3958 = vmatpush1.msra.mxu0 %v3903
    %3959 = vmatprep.subr.mxu0 0.0
    %3960 = vmatpush1.msra.mxu0 %v3904
    %3961 = vmatprep.subr.mxu0 0.0
    %3962 = vmatpush1.msra.mxu0 %v3905
    %3963 = vmatprep.subr.mxu0 0.0
    %3964 = vmatpush1.msra.mxu0 %v3906
    %3965 = vmatprep.subr.mxu0 0.0
    %3966 = vmatpush1.msra.mxu0 %v3907
    %3967 = vmatprep.subr.mxu0 0.0
    %3968 = vmatpush1.msra.mxu0 %v3908
    %3969 = vmatprep.subr.mxu0 0.0
    %3970 = vmatpush1.msra.mxu0 0.0
    %3971 = vmatprep.subr.mxu0 0.0
    %3972 = vmatpush1.msra.mxu0 0.0
    %3973 = vmatprep.subr.mxu0 0.0
    %3974 = vmatpush1.msra.mxu0 0.0
    %3975 = vmatprep.subr.mxu0 0.0
    %3976 = vmatpush1.msra.mxu0 0.0
    %3977 = vmatprep.subr.mxu0 0.0
    %3978 = vmatpush1.msra.mxu0 0.0
    %3979 = vmatprep.subr.mxu0 0.0
    %3980 = vmatpush1.msra.mxu0 0.0
    %3981 = vmatprep.subr.mxu0 0.0
    %3982 = vmatpush1.msra.mxu0 0.0
    %3983 = vmatprep.subr.mxu0 0.0
    %3984 = vmatpush1.msra.mxu0 0.0
    %3985 = vmatprep.subr.mxu0 0.0
    %3986 = vmatpush1.msra.mxu0 0.0
    %3987 = vmatprep.subr.mxu0 0.0
    %3988 = vmatpush1.msra.mxu0 0.0
    %3989 = vmatprep.subr.mxu0 0.0
    %3990 = vmatpush1.msra.mxu0 0.0
    %3991 = vmatprep.subr.mxu0 0.0
    %3992 = vmatpush1.msra.mxu0 0.0
    %3993 = vmatprep.subr.mxu0 0.0
    %3994 = vmatpush1.msra.mxu0 0.0
    %3995 = vmatprep.subr.mxu0 0.0
    %3996 = vmatpush1.msra.mxu0 0.0
    %3997 = vmatprep.mubr.f32.mxu0 %v3910
    %3998 = vmatmul.mubr.f32.gmra.mrb[0].mxu0 %v3844
    %v3999 = vpop.f32.mrb[0].mxu0
    %v4000 = vadd.f32 0.0, %v3999
    %v4001 = vpop.f32.mrb[0].mxu0
    %4002 = vmatprep.mubr.f32.mxu0 %v3913
    %4003 = vmatmul.mubr.f32.gmra.mrb[0].mxu0 %v3850
    %v4004 = vpop.f32.mrb[0].mxu0
    %v4005 = vadd.f32 0.0, %v4004
    %v4006 = vpop.f32.mrb[0].mxu0
    %4007 = vmatprep.mubr.f32.mxu0 %v3916
    %4008 = vmatmul.mubr.f32.gmra.mrb[0].mxu0 %v3856
    %v4009 = vpop.f32.mrb[0].mxu0
    %v4010 = vadd.f32 0.0, %v4009
    %v4011 = vpop.f32.mrb[0].mxu0
    %4012 = vmatprep.mubr.f32.mxu0 %v3919
    %4013 = vmatmul.mubr.f32.gmra.mrb[0].mxu0 %v3862
    %v4014 = vpop.f32.mrb[0].mxu0
    %v4015 = vadd.f32 0.0, %v4014
    %v4016 = vpop.f32.mrb[0].mxu0
    %4017 = vmatprep.mubr.f32.mxu0 %v3922
    %4018 = vmatmul.mubr.f32.gmra.mrb[0].mxu0 %v3868
    %v4019 = vpop.f32.mrb[0].mxu0
    %v4020 = vadd.f32 0.0, %v4019
    %v4021 = vpop.f32.mrb[0].mxu0
    %4022 = vmatprep.mubr.f32.mxu0 %v3925
    %4023 = vmatmul.mubr.f32.gmra.mrb[0].mxu0 %v3874
    %v4024 = vpop.f32.mrb[0].mxu0
    %v4025 = vadd.f32 0.0, %v4024
    %v4026 = vpop.f32.mrb[0].mxu0
    %4027 = vmatprep.mubr.f32.mxu0 %v3928
    %4028 = vmatmul.mubr.f32.gmra.mrb[0].mxu0 %v3880
    %v4029 = vpop.f32.mrb[0].mxu0
    %v4030 = vadd.f32 0.0, %v4029
    %v4031 = vpop.f32.mrb[0].mxu0
    %4032 = vmatprep.mubr.f32.mxu0 %v3931
    %4033 = vmatmul.mubr.f32.gmra.mrb[0].mxu0 %v3886
    %v4034 = vpop.f32.mrb[0].mxu0
    %v4035 = vadd.f32 0.0, %v4034
    %v4036 = vpop.f32.mrb[0].mxu0
    %4037 = vdwg.mxu0
    %v4038 = vadd.f32 %v3736, %v4000
    %v4039 = vadd.f32 %v3737, %v4005
    %v4040 = vadd.f32 %v3738, %v4010
    %v4041 = vadd.f32 %v3739, %v4015
    %v4042 = vadd.f32 %v3740, %v4020
    %v4043 = vadd.f32 %v3741, %v4025
    %v4044 = vadd.f32 %v3742, %v4030
    %v4045 = vadd.f32 %v3743, %v4035
    %s4046 = scalar_lea.vmem [#allocation8], 256
    %v4047 = vld [vmem:[%s4046] sm:$0xff]
    %v4048 = vld [vmem:[%s4046 + $0x8] sm:$0xff]
    %v4049 = vld [vmem:[%s4046 + $0x10] sm:$0xff]
    %v4050 = vld [vmem:[%s4046 + $0x18] sm:$0xff]
    %v4051 = vld [vmem:[%s4046 + $0x20] sm:$0xff]
    %v4052 = vld [vmem:[%s4046 + $0x28] sm:$0xff]
    %v4053 = vld [vmem:[%s4046 + $0x30] sm:$0xff]
    %v4054 = vld [vmem:[%s4046 + $0x38] sm:$0xff]
    %v4056 = vsel %vm2863, %v4047, 0
    %v4059 = vsel %vm2863, %v4048, 0
    %v4062 = vsel %vm2863, %v4049, 0
    %v4065 = vsel %vm2863, %v4050, 0
    %v4068 = vsel %vm2863, %v4051, 0
    %v4071 = vsel %vm2863, %v4052, 0
    %v4074 = vsel %vm2863, %v4053, 0
    %v4077 = vsel %vm2863, %v4054, 0
    %4079 = vmatprep.subr.mxu0 %v2832
    %4080 = vmatpush1.msra.mxu0 %v2831
    %4081 = vmatprep.subr.mxu0 %v2834
    %4082 = vmatpush1.msra.mxu0 %v2833
    %4083 = vmatprep.subr.mxu0 %v2836
    %4084 = vmatpush1.msra.mxu0 %v2835
    %4085 = vmatprep.subr.mxu0 %v2838
    %4086 = vmatpush1.msra.mxu0 %v2837
    %4087 = vmatprep.subr.mxu0 %v2840
    %4088 = vmatpush1.msra.mxu0 %v2839
    %4089 = vmatprep.subr.mxu0 %v2842
    %4090 = vmatpush1.msra.mxu0 %v2841
    %4091 = vmatprep.subr.mxu0 %v2844
    %4092 = vmatpush1.msra.mxu0 %v2843
    %4093 = vmatprep.subr.mxu0 %v2846
    %4094 = vmatpush1.msra.mxu0 %v2845
    %4095 = vmatprep.subr.mxu0 %v2848
    %4096 = vmatpush1.msra.mxu0 %v2847
    %4097 = vmatprep.subr.mxu0 %v2850
    %4098 = vmatpush1.msra.mxu0 %v2849
    %4099 = vmatprep.subr.mxu0 %v2852
    %4100 = vmatpush1.msra.mxu0 %v2851
    %4101 = vmatprep.subr.mxu0 %v2854
    %4102 = vmatpush1.msra.mxu0 %v2853
    %4103 = vmatprep.subr.mxu0 0.0
    %4104 = vmatpush1.msra.mxu0 0.0
    %4105 = vmatprep.subr.mxu0 0.0
    %4106 = vmatpush1.msra.mxu0 0.0
    %4107 = vmatprep.subr.mxu0 0.0
    %4108 = vmatpush1.msra.mxu0 0.0
    %4109 = vmatprep.subr.mxu0 0.0
    %4110 = vmatpush1.msra.mxu0 0.0
    %4111 = vmatprep.subr.mxu0 0.0
    %4112 = vmatpush1.msra.mxu0 0.0
    %4113 = vmatprep.subr.mxu0 0.0
    %4114 = vmatpush1.msra.mxu0 0.0
    %4115 = vmatprep.subr.mxu0 0.0
    %4116 = vmatpush1.msra.mxu0 0.0
    %4117 = vmatprep.subr.mxu0 0.0
    %4118 = vmatpush1.msra.mxu0 0.0
    %4119 = vmatprep.subr.mxu0 0.0
    %4120 = vmatpush1.msra.mxu0 0.0
    %4121 = vmatprep.subr.mxu0 0.0
    %4122 = vmatpush1.msra.mxu0 0.0
    %4123 = vmatprep.subr.mxu0 0.0
    %4124 = vmatpush1.msra.mxu0 0.0
    %4125 = vmatprep.subr.mxu0 0.0
    %4126 = vmatpush1.msra.mxu0 0.0
    %4127 = vmatprep.subr.mxu0 0.0
    %4128 = vmatpush1.msra.mxu0 0.0
    %4129 = vmatprep.subr.mxu0 0.0
    %4130 = vmatpush1.msra.mxu0 0.0
    %4131 = vmatprep.subr.mxu0 0.0
    %4132 = vmatpush1.msra.mxu0 0.0
    %4133 = vmatprep.subr.mxu0 0.0
    %4134 = vmatpush1.msra.mxu0 0.0
    %4135 = vmatprep.subr.mxu0 0.0
    %4136 = vmatpush1.msra.mxu0 0.0
    %4137 = vmatprep.subr.mxu0 0.0
    %4138 = vmatpush1.msra.mxu0 0.0
    %4139 = vmatprep.subr.mxu0 0.0
    %4140 = vmatpush1.msra.mxu0 0.0
    %4141 = vmatprep.subr.mxu0 0.0
    %4142 = vmatpush1.msra.mxu0 0.0
    %4143 = vmatprep.mubr.f32.mxu0 0.0
    %4144 = vmatmul.mubr.f32.gmra.mrb[0].mxu0 %v4056
    %v4145 = vpop.f32.mrb[0].mxu0
    %v4146 = vadd.f32 0.0, %v4145
    %v4147 = vpop.f32.mrb[0].mxu0
    %v4148 = vadd.f32 0.0, %v4147
    %4149 = vmatprep.mubr.f32.mxu0 0.0
    %4150 = vmatmul.mubr.f32.gmra.mrb[0].mxu0 %v4059
    %v4151 = vpop.f32.mrb[0].mxu0
    %v4152 = vadd.f32 0.0, %v4151
    %v4153 = vpop.f32.mrb[0].mxu0
    %v4154 = vadd.f32 0.0, %v4153
    %4155 = vmatprep.mubr.f32.mxu0 0.0
    %4156 = vmatmul.mubr.f32.gmra.mrb[0].mxu0 %v4062
    %v4157 = vpop.f32.mrb[0].mxu0
    %v4158 = vadd.f32 0.0, %v4157
    %v4159 = vpop.f32.mrb[0].mxu0
    %v4160 = vadd.f32 0.0, %v4159
    %4161 = vmatprep.mubr.f32.mxu0 0.0
    %4162 = vmatmul.mubr.f32.gmra.mrb[0].mxu0 %v4065
    %v4163 = vpop.f32.mrb[0].mxu0
    %v4164 = vadd.f32 0.0, %v4163
    %v4165 = vpop.f32.mrb[0].mxu0
    %v4166 = vadd.f32 0.0, %v4165
    %4167 = vmatprep.mubr.f32.mxu0 0.0
    %4168 = vmatmul.mubr.f32.gmra.mrb[0].mxu0 %v4068
    %v4169 = vpop.f32.mrb[0].mxu0
    %v4170 = vadd.f32 0.0, %v4169
    %v4171 = vpop.f32.mrb[0].mxu0
    %v4172 = vadd.f32 0.0, %v4171
    %4173 = vmatprep.mubr.f32.mxu0 0.0
    %4174 = vmatmul.mubr.f32.gmra.mrb[0].mxu0 %v4071
    %v4175 = vpop.f32.mrb[0].mxu0
    %v4176 = vadd.f32 0.0, %v4175
    %v4177 = vpop.f32.mrb[0].mxu0
    %v4178 = vadd.f32 0.0, %v4177
    %4179 = vmatprep.mubr.f32.mxu0 0.0
    %4180 = vmatmul.mubr.f32.gmra.mrb[0].mxu0 %v4074
    %v4181 = vpop.f32.mrb[0].mxu0
    %v4182 = vadd.f32 0.0, %v4181
    %v4183 = vpop.f32.mrb[0].mxu0
    %v4184 = vadd.f32 0.0, %v4183
    %4185 = vmatprep.mubr.f32.mxu0 0.0
    %4186 = vmatmul.mubr.f32.gmra.mrb[0].mxu0 %v4077
    %v4187 = vpop.f32.mrb[0].mxu0
    %v4188 = vadd.f32 0.0, %v4187
    %v4189 = vpop.f32.mrb[0].mxu0
    %v4190 = vadd.f32 0.0, %v4189
    %4191 = vdwg.mxu0
    %s4192 = scalar_lea.vmem [#allocation10], 576
    %v4193 = vld [vmem:[%s4192] sm:$0xff]
    %v4194 = vld [vmem:[%s4192 + $0x8] sm:$0xff]
    %v4195 = vld [vmem:[%s4192 + $0x10] sm:$0xff]
    %v4196 = vld [vmem:[%s4192 + $0x18] sm:$0xff]
    %v4197 = vld [vmem:[%s4192 + $0x20] sm:$0xff]
    %v4198 = vld [vmem:[%s4192 + $0x28] sm:$0xff]
    %v4199 = vld [vmem:[%s4192 + $0x30] sm:$0xff]
    %v4200 = vld [vmem:[%s4192 + $0x38] sm:$0xff]
    %v4201 = vld [vmem:[%s4192 + $0x40] sm:$0xff]
    %v4202 = vld [vmem:[%s4192 + $0x48] sm:$0xff]
    %v4203 = vld [vmem:[%s4192 + $0x50] sm:$0xff]
    %v4204 = vld [vmem:[%s4192 + $0x58] sm:$0xff]
    %v4205 = vld [vmem:[%s4192 + $0x60] sm:$0xff]
    %v4206 = vld [vmem:[%s4192 + $0x68] sm:$0xff]
    %v4207 = vld [vmem:[%s4192 + $0x70] sm:$0xff]
    %v4208 = vld [vmem:[%s4192 + $0x78] sm:$0xff]
    %v4209 = vld [vmem:[%s4192 + $0x80] sm:$0xff]
    %v4210 = vld [vmem:[%s4192 + $0x88] sm:$0xff]
    %v4212 = vsel %vm2106, %v4148, 0
    %v4215 = vsel %vm2106, %v4154, 0
    %v4218 = vsel %vm2106, %v4160, 0
    %v4221 = vsel %vm2106, %v4166, 0
    %v4224 = vsel %vm2106, %v4172, 0
    %v4227 = vsel %vm2106, %v4178, 0
    %v4230 = vsel %vm2106, %v4184, 0
    %v4233 = vsel %vm2106, %v4190, 0
    %4235 = vmatprep.subr.mxu0 0.0
    %4236 = vmatpush1.msra.mxu0 %v4193
    %4237 = vmatprep.subr.mxu0 0.0
    %4238 = vmatpush1.msra.mxu0 %v4194
    %4239 = vmatprep.subr.mxu0 0.0
    %4240 = vmatpush1.msra.mxu0 %v4195
    %4241 = vmatprep.subr.mxu0 0.0
    %4242 = vmatpush1.msra.mxu0 %v4196
    %4243 = vmatprep.subr.mxu0 0.0
    %4244 = vmatpush1.msra.mxu0 %v4197
    %4245 = vmatprep.subr.mxu0 0.0
    %4246 = vmatpush1.msra.mxu0 %v4198
    %4247 = vmatprep.subr.mxu0 0.0
    %4248 = vmatpush1.msra.mxu0 %v4199
    %4249 = vmatprep.subr.mxu0 0.0
    %4250 = vmatpush1.msra.mxu0 %v4200
    %4251 = vmatprep.subr.mxu0 0.0
    %4252 = vmatpush1.msra.mxu0 %v4201
    %4253 = vmatprep.subr.mxu0 0.0
    %4254 = vmatpush1.msra.mxu0 %v4202
    %4255 = vmatprep.subr.mxu0 0.0
    %4256 = vmatpush1.msra.mxu0 %v4203
    %4257 = vmatprep.subr.mxu0 0.0
    %4258 = vmatpush1.msra.mxu0 %v4204
    %4259 = vmatprep.subr.mxu0 0.0
    %4260 = vmatpush1.msra.mxu0 %v4205
    %4261 = vmatprep.subr.mxu0 0.0
    %4262 = vmatpush1.msra.mxu0 %v4206
    %4263 = vmatprep.subr.mxu0 0.0
    %4264 = vmatpush1.msra.mxu0 %v4207
    %4265 = vmatprep.subr.mxu0 0.0
    %4266 = vmatpush1.msra.mxu0 %v4208
    %4267 = vmatprep.subr.mxu0 0.0
    %4268 = vmatpush1.msra.mxu0 %v4209
    %4269 = vmatprep.subr.mxu0 0.0
    %4270 = vmatpush1.msra.mxu0 %v4210
    %4271 = vmatprep.subr.mxu0 0.0
    %4272 = vmatpush1.msra.mxu0 0.0
    %4273 = vmatprep.subr.mxu0 0.0
    %4274 = vmatpush1.msra.mxu0 0.0
    %4275 = vmatprep.subr.mxu0 0.0
    %4276 = vmatpush1.msra.mxu0 0.0
    %4277 = vmatprep.subr.mxu0 0.0
    %4278 = vmatpush1.msra.mxu0 0.0
    %4279 = vmatprep.subr.mxu0 0.0
    %4280 = vmatpush1.msra.mxu0 0.0
    %4281 = vmatprep.subr.mxu0 0.0
    %4282 = vmatpush1.msra.mxu0 0.0
    %4283 = vmatprep.subr.mxu0 0.0
    %4284 = vmatpush1.msra.mxu0 0.0
    %4285 = vmatprep.subr.mxu0 0.0
    %4286 = vmatpush1.msra.mxu0 0.0
    %4287 = vmatprep.subr.mxu0 0.0
    %4288 = vmatpush1.msra.mxu0 0.0
    %4289 = vmatprep.subr.mxu0 0.0
    %4290 = vmatpush1.msra.mxu0 0.0
    %4291 = vmatprep.subr.mxu0 0.0
    %4292 = vmatpush1.msra.mxu0 0.0
    %4293 = vmatprep.subr.mxu0 0.0
    %4294 = vmatpush1.msra.mxu0 0.0
    %4295 = vmatprep.subr.mxu0 0.0
    %4296 = vmatpush1.msra.mxu0 0.0
    %4297 = vmatprep.subr.mxu0 0.0
    %4298 = vmatpush1.msra.mxu0 0.0
    %4299 = vmatprep.mubr.f32.mxu0 %v4212
    %4300 = vmatmul.mubr.f32.gmra.mrb[0].mxu0 %v4146
    %v4301 = vpop.f32.mrb[0].mxu0
    %v4302 = vadd.f32 0.0, %v4301
    %v4303 = vpop.f32.mrb[0].mxu0
    %4304 = vmatprep.mubr.f32.mxu0 %v4215
    %4305 = vmatmul.mubr.f32.gmra.mrb[0].mxu0 %v4152
    %v4306 = vpop.f32.mrb[0].mxu0
    %v4307 = vadd.f32 0.0, %v4306
    %v4308 = vpop.f32.mrb[0].mxu0
    %4309 = vmatprep.mubr.f32.mxu0 %v4218
    %4310 = vmatmul.mubr.f32.gmra.mrb[0].mxu0 %v4158
    %v4311 = vpop.f32.mrb[0].mxu0
    %v4312 = vadd.f32 0.0, %v4311
    %v4313 = vpop.f32.mrb[0].mxu0
    %4314 = vmatprep.mubr.f32.mxu0 %v4221
    %4315 = vmatmul.mubr.f32.gmra.mrb[0].mxu0 %v4164
    %v4316 = vpop.f32.mrb[0].mxu0
    %v4317 = vadd.f32 0.0, %v4316
    %v4318 = vpop.f32.mrb[0].mxu0
    %4319 = vmatprep.mubr.f32.mxu0 %v4224
    %4320 = vmatmul.mubr.f32.gmra.mrb[0].mxu0 %v4170
    %v4321 = vpop.f32.mrb[0].mxu0
    %v4322 = vadd.f32 0.0, %v4321
    %v4323 = vpop.f32.mrb[0].mxu0
    %4324 = vmatprep.mubr.f32.mxu0 %v4227
    %4325 = vmatmul.mubr.f32.gmra.mrb[0].mxu0 %v4176
    %v4326 = vpop.f32.mrb[0].mxu0
    %v4327 = vadd.f32 0.0, %v4326
    %v4328 = vpop.f32.mrb[0].mxu0
    %4329 = vmatprep.mubr.f32.mxu0 %v4230
    %4330 = vmatmul.mubr.f32.gmra.mrb[0].mxu0 %v4182
    %v4331 = vpop.f32.mrb[0].mxu0
    %v4332 = vadd.f32 0.0, %v4331
    %v4333 = vpop.f32.mrb[0].mxu0
    %4334 = vmatprep.mubr.f32.mxu0 %v4233
    %4335 = vmatmul.mubr.f32.gmra.mrb[0].mxu0 %v4188
    %v4336 = vpop.f32.mrb[0].mxu0
    %v4337 = vadd.f32 0.0, %v4336
    %v4338 = vpop.f32.mrb[0].mxu0
    %4339 = vdwg.mxu0
    %v4340 = vadd.f32 %v4038, %v4302
    %v4341 = vadd.f32 %v4039, %v4307
    %v4342 = vadd.f32 %v4040, %v4312
    %v4343 = vadd.f32 %v4041, %v4317
    %v4344 = vadd.f32 %v4042, %v4322
    %v4345 = vadd.f32 %v4043, %v4327
    %v4346 = vadd.f32 %v4044, %v4332
    %v4347 = vadd.f32 %v4045, %v4337
    %v4348 = vld [vmem:[%s8] sm:$0x1]
    %v4350 = vlaneseq
    %v4351 = vshrl.u32 %v4350, 7
    %v4352 = vsub.s32 0, %v4351
    %v4353 = vrot.slane %v4348, %v4352
    %v4355 = vadd.f32 %v4340, %v4353
    %v4356 = vadd.f32 %v4341, %v4353
    %v4357 = vadd.f32 %v4342, %v4353
    %v4358 = vadd.f32 %v4343, %v4353
    %v4359 = vadd.f32 %v4344, %v4353
    %v4360 = vadd.f32 %v4345, %v4353
    %v4361 = vadd.f32 %v4346, %v4353
    %v4362 = vadd.f32 %v4347, %v4353
    %v4363 = vmax.f32 %v4355, 0.0
    %v4364 = vmax.f32 %v4356, 0.0
    %v4365 = vmax.f32 %v4357, 0.0
    %v4366 = vmax.f32 %v4358, 0.0
    %v4367 = vmax.f32 %v4359, 0.0
    %v4368 = vmax.f32 %v4360, 0.0
    %v4369 = vmax.f32 %v4361, 0.0
    %v4370 = vmax.f32 %v4362, 0.0
    %v4371 = vld [vmem:[#allocation11] sm:$0xff]
    %v4372 = vld [vmem:[#allocation11 + $0x8] sm:$0xff]
    %v4373 = vld [vmem:[#allocation11 + $0x10] sm:$0xff]
    %v4374 = vld [vmem:[#allocation11 + $0x18] sm:$0xff]
    %v4375 = vld [vmem:[#allocation11 + $0x20] sm:$0xff]
    %v4376 = vld [vmem:[#allocation11 + $0x28] sm:$0xff]
    %v4377 = vld [vmem:[#allocation11 + $0x30] sm:$0xff]
    %v4378 = vld [vmem:[#allocation11 + $0x38] sm:$0xff]
    %v4379 = vld [vmem:[#allocation11 + $0x40] sm:$0xff]
    %v4380 = vld [vmem:[#allocation11 + $0x48] sm:$0xff]
    %v4381 = vld [vmem:[#allocation11 + $0x50] sm:$0xff]
    %v4382 = vld [vmem:[#allocation11 + $0x58] sm:$0xff]
    %v4384 = vsel %vm2863, %v4363, 0
    %v4387 = vsel %vm2863, %v4364, 0
    %v4390 = vsel %vm2863, %v4365, 0
    %v4393 = vsel %vm2863, %v4366, 0
    %v4396 = vsel %vm2863, %v4367, 0
    %v4399 = vsel %vm2863, %v4368, 0
    %v4402 = vsel %vm2863, %v4369, 0
    %v4405 = vsel %vm2863, %v4370, 0
    %4407 = vmatprep.subr.mxu0 0.0
    %4408 = vmatpush1.msra.mxu0 %v4371
    %4409 = vmatprep.subr.mxu0 0.0
    %4410 = vmatpush1.msra.mxu0 %v4372
    %4411 = vmatprep.subr.mxu0 0.0
    %4412 = vmatpush1.msra.mxu0 %v4373
    %4413 = vmatprep.subr.mxu0 0.0
    %4414 = vmatpush1.msra.mxu0 %v4374
    %4415 = vmatprep.subr.mxu0 0.0
    %4416 = vmatpush1.msra.mxu0 %v4375
    %4417 = vmatprep.subr.mxu0 0.0
    %4418 = vmatpush1.msra.mxu0 %v4376
    %4419 = vmatprep.subr.mxu0 0.0
    %4420 = vmatpush1.msra.mxu0 %v4377
    %4421 = vmatprep.subr.mxu0 0.0
    %4422 = vmatpush1.msra.mxu0 %v4378
    %4423 = vmatprep.subr.mxu0 0.0
    %4424 = vmatpush1.msra.mxu0 %v4379
    %4425 = vmatprep.subr.mxu0 0.0
    %4426 = vmatpush1.msra.mxu0 %v4380
    %4427 = vmatprep.subr.mxu0 0.0
    %4428 = vmatpush1.msra.mxu0 %v4381
    %4429 = vmatprep.subr.mxu0 0.0
    %4430 = vmatpush1.msra.mxu0 %v4382
    %4431 = vmatprep.subr.mxu0 0.0
    %4432 = vmatpush1.msra.mxu0 0.0
    %4433 = vmatprep.subr.mxu0 0.0
    %4434 = vmatpush1.msra.mxu0 0.0
    %4435 = vmatprep.subr.mxu0 0.0
    %4436 = vmatpush1.msra.mxu0 0.0
    %4437 = vmatprep.subr.mxu0 0.0
    %4438 = vmatpush1.msra.mxu0 0.0
    %4439 = vmatprep.subr.mxu0 0.0
    %4440 = vmatpush1.msra.mxu0 0.0
    %4441 = vmatprep.subr.mxu0 0.0
    %4442 = vmatpush1.msra.mxu0 0.0
    %4443 = vmatprep.subr.mxu0 0.0
    %4444 = vmatpush1.msra.mxu0 0.0
    %4445 = vmatprep.subr.mxu0 0.0
    %4446 = vmatpush1.msra.mxu0 0.0
    %4447 = vmatprep.subr.mxu0 0.0
    %4448 = vmatpush1.msra.mxu0 0.0
    %4449 = vmatprep.subr.mxu0 0.0
    %4450 = vmatpush1.msra.mxu0 0.0
    %4451 = vmatprep.subr.mxu0 0.0
    %4452 = vmatpush1.msra.mxu0 0.0
    %4453 = vmatprep.subr.mxu0 0.0
    %4454 = vmatpush1.msra.mxu0 0.0
    %4455 = vmatprep.subr.mxu0 0.0
    %4456 = vmatpush1.msra.mxu0 0.0
    %4457 = vmatprep.subr.mxu0 0.0
    %4458 = vmatpush1.msra.mxu0 0.0
    %4459 = vmatprep.subr.mxu0 0.0
    %4460 = vmatpush1.msra.mxu0 0.0
    %4461 = vmatprep.subr.mxu0 0.0
    %4462 = vmatpush1.msra.mxu0 0.0
    %4463 = vmatprep.subr.mxu0 0.0
    %4464 = vmatpush1.msra.mxu0 0.0
    %4465 = vmatprep.subr.mxu0 0.0
    %4466 = vmatpush1.msra.mxu0 0.0
    %4467 = vmatprep.subr.mxu0 0.0
    %4468 = vmatpush1.msra.mxu0 0.0
    %4469 = vmatprep.subr.mxu0 0.0
    %4470 = vmatpush1.msra.mxu0 0.0
    %4471 = vmatprep.mubr.f32.mxu0 0.0
    %4472 = vmatmul.mubr.f32.gmra.mrb[0].mxu0 %v4384
    %v4473 = vpop.f32.mrb[0].mxu0
    %v4474 = vadd.f32 0.0, %v4473
    %v4475 = vpop.f32.mrb[0].mxu0
    %4476 = vmatprep.mubr.f32.mxu0 0.0
    %4477 = vmatmul.mubr.f32.gmra.mrb[0].mxu0 %v4387
    %v4478 = vpop.f32.mrb[0].mxu0
    %v4479 = vadd.f32 0.0, %v4478
    %v4480 = vpop.f32.mrb[0].mxu0
    %4481 = vmatprep.mubr.f32.mxu0 0.0
    %4482 = vmatmul.mubr.f32.gmra.mrb[0].mxu0 %v4390
    %v4483 = vpop.f32.mrb[0].mxu0
    %v4484 = vadd.f32 0.0, %v4483
    %v4485 = vpop.f32.mrb[0].mxu0
    %4486 = vmatprep.mubr.f32.mxu0 0.0
    %4487 = vmatmul.mubr.f32.gmra.mrb[0].mxu0 %v4393
    %v4488 = vpop.f32.mrb[0].mxu0
    %v4489 = vadd.f32 0.0, %v4488
    %v4490 = vpop.f32.mrb[0].mxu0
    %4491 = vmatprep.mubr.f32.mxu0 0.0
    %4492 = vmatmul.mubr.f32.gmra.mrb[0].mxu0 %v4396
    %v4493 = vpop.f32.mrb[0].mxu0
    %v4494 = vadd.f32 0.0, %v4493
    %v4495 = vpop.f32.mrb[0].mxu0
    %4496 = vmatprep.mubr.f32.mxu0 0.0
    %4497 = vmatmul.mubr.f32.gmra.mrb[0].mxu0 %v4399
    %v4498 = vpop.f32.mrb[0].mxu0
    %v4499 = vadd.f32 0.0, %v4498
    %v4500 = vpop.f32.mrb[0].mxu0
    %4501 = vmatprep.mubr.f32.mxu0 0.0
    %4502 = vmatmul.mubr.f32.gmra.mrb[0].mxu0 %v4402
    %v4503 = vpop.f32.mrb[0].mxu0
    %v4504 = vadd.f32 0.0, %v4503
    %v4505 = vpop.f32.mrb[0].mxu0
    %4506 = vmatprep.mubr.f32.mxu0 0.0
    %4507 = vmatmul.mubr.f32.gmra.mrb[0].mxu0 %v4405
    %v4508 = vpop.f32.mrb[0].mxu0
    %v4509 = vadd.f32 0.0, %v4508
    %v4510 = vpop.f32.mrb[0].mxu0
    %4511 = vdwg.mxu0
    %v4512 = vmax.f32 %v4363, %v4474
    %v4513 = vmax.f32 %v4364, %v4479
    %v4514 = vmax.f32 %v4365, %v4484
    %v4515 = vmax.f32 %v4366, %v4489
    %v4516 = vmax.f32 %v4367, %v4494
    %v4517 = vmax.f32 %v4368, %v4499
    %v4518 = vmax.f32 %v4369, %v4504
    %v4519 = vmax.f32 %v4370, %v4509
    %v4520 = vld [vmem:[#allocation13] sm:$0xff]
    %v4522 = vsel %vm2460, %v4520, 0
    %4524 = vmatprep.subr.mxu0 0.0
    %4525 = vmatpush1.msra.mxu0 %v4512
    %4526 = vmatprep.subr.mxu0 0.0
    %4527 = vmatpush1.msra.mxu0 %v4513
    %4528 = vmatprep.subr.mxu0 0.0
    %4529 = vmatpush1.msra.mxu0 %v4514
    %4530 = vmatprep.subr.mxu0 0.0
    %4531 = vmatpush1.msra.mxu0 %v4515
    %4532 = vmatprep.subr.mxu0 0.0
    %4533 = vmatpush1.msra.mxu0 %v4516
    %4534 = vmatprep.subr.mxu0 0.0
    %4535 = vmatpush1.msra.mxu0 %v4517
    %4536 = vmatprep.subr.mxu0 0.0
    %4537 = vmatpush1.msra.mxu0 %v4518
    %4538 = vmatprep.subr.mxu0 0.0
    %4539 = vmatpush1.msra.mxu0 %v4519
    %4540 = vmatprep.subr.mxu0 0.0
    %4541 = vmatpush1.msra.mxu0 0.0
    %4542 = vmatprep.subr.mxu0 0.0
    %4543 = vmatpush1.msra.mxu0 0.0
    %4544 = vmatprep.subr.mxu0 0.0
    %4545 = vmatpush1.msra.mxu0 0.0
    %4546 = vmatprep.subr.mxu0 0.0
    %4547 = vmatpush1.msra.mxu0 0.0
    %4548 = vmatprep.subr.mxu0 0.0
    %4549 = vmatpush1.msra.mxu0 0.0
    %4550 = vmatprep.subr.mxu0 0.0
    %4551 = vmatpush1.msra.mxu0 0.0
    %4552 = vmatprep.subr.mxu0 0.0
    %4553 = vmatpush1.msra.mxu0 0.0
    %4554 = vmatprep.subr.mxu0 0.0
    %4555 = vmatpush1.msra.mxu0 0.0
    %4556 = vmatprep.subr.mxu0 0.0
    %4557 = vmatpush1.msra.mxu0 0.0
    %4558 = vmatprep.subr.mxu0 0.0
    %4559 = vmatpush1.msra.mxu0 0.0
    %4560 = vmatprep.subr.mxu0 0.0
    %4561 = vmatpush1.msra.mxu0 0.0
    %4562 = vmatprep.subr.mxu0 0.0
    %4563 = vmatpush1.msra.mxu0 0.0
    %4564 = vmatprep.subr.mxu0 0.0
    %4565 = vmatpush1.msra.mxu0 0.0
    %4566 = vmatprep.subr.mxu0 0.0
    %4567 = vmatpush1.msra.mxu0 0.0
    %4568 = vmatprep.subr.mxu0 0.0
    %4569 = vmatpush1.msra.mxu0 0.0
    %4570 = vmatprep.subr.mxu0 0.0
    %4571 = vmatpush1.msra.mxu0 0.0
    %4572 = vmatprep.subr.mxu0 0.0
    %4573 = vmatpush1.msra.mxu0 0.0
    %4574 = vmatprep.subr.mxu0 0.0
    %4575 = vmatpush1.msra.mxu0 0.0
    %4576 = vmatprep.subr.mxu0 0.0
    %4577 = vmatpush1.msra.mxu0 0.0
    %4578 = vmatprep.subr.mxu0 0.0
    %4579 = vmatpush1.msra.mxu0 0.0
    %4580 = vmatprep.subr.mxu0 0.0
    %4581 = vmatpush1.msra.mxu0 0.0
    %4582 = vmatprep.subr.mxu0 0.0
    %4583 = vmatpush1.msra.mxu0 0.0
    %4584 = vmatprep.subr.mxu0 0.0
    %4585 = vmatpush1.msra.mxu0 0.0
    %4586 = vmatprep.subr.mxu0 0.0
    %4587 = vmatpush1.msra.mxu0 0.0
    %4588 = vmatprep.mubr.f32.mxu0 0.0
    %4589 = vmatmul.mubr.f32.gmra.mrb[0].mxu0 %v4522
    %v4590 = vpop.f32.mrb[0].mxu0
    %v4591 = vadd.f32 0.0, %v4590
    %v4592 = vpop.f32.mrb[0].mxu0
    %4593 = vdwg.mxu0
    %s4594 = scalar_lea.vmem [#allocation13], 8
    %v4595 = vld [vmem:[%s4594] sm:$0xff]
    %v4597 = vsel %vm2460, %v4595, 0
    %4599 = vmatprep.subr.mxu0 0.0
    %4600 = vmatpush1.msra.mxu0 %v4512
    %4601 = vmatprep.subr.mxu0 0.0
    %4602 = vmatpush1.msra.mxu0 %v4513
    %4603 = vmatprep.subr.mxu0 0.0
    %4604 = vmatpush1.msra.mxu0 %v4514
    %4605 = vmatprep.subr.mxu0 0.0
    %4606 = vmatpush1.msra.mxu0 %v4515
    %4607 = vmatprep.subr.mxu0 0.0
    %4608 = vmatpush1.msra.mxu0 %v4516
    %4609 = vmatprep.subr.mxu0 0.0
    %4610 = vmatpush1.msra.mxu0 %v4517
    %4611 = vmatprep.subr.mxu0 0.0
    %4612 = vmatpush1.msra.mxu0 %v4518
    %4613 = vmatprep.subr.mxu0 0.0
    %4614 = vmatpush1.msra.mxu0 %v4519
    %4615 = vmatprep.subr.mxu0 0.0
    %4616 = vmatpush1.msra.mxu0 0.0
    %4617 = vmatprep.subr.mxu0 0.0
    %4618 = vmatpush1.msra.mxu0 0.0
    %4619 = vmatprep.subr.mxu0 0.0
    %4620 = vmatpush1.msra.mxu0 0.0
    %4621 = vmatprep.subr.mxu0 0.0
    %4622 = vmatpush1.msra.mxu0 0.0
    %4623 = vmatprep.subr.mxu0 0.0
    %4624 = vmatpush1.msra.mxu0 0.0
    %4625 = vmatprep.subr.mxu0 0.0
    %4626 = vmatpush1.msra.mxu0 0.0
    %4627 = vmatprep.subr.mxu0 0.0
    %4628 = vmatpush1.msra.mxu0 0.0
    %4629 = vmatprep.subr.mxu0 0.0
    %4630 = vmatpush1.msra.mxu0 0.0
    %4631 = vmatprep.subr.mxu0 0.0
    %4632 = vmatpush1.msra.mxu0 0.0
    %4633 = vmatprep.subr.mxu0 0.0
    %4634 = vmatpush1.msra.mxu0 0.0
    %4635 = vmatprep.subr.mxu0 0.0
    %4636 = vmatpush1.msra.mxu0 0.0
    %4637 = vmatprep.subr.mxu0 0.0
    %4638 = vmatpush1.msra.mxu0 0.0
    %4639 = vmatprep.subr.mxu0 0.0
    %4640 = vmatpush1.msra.mxu0 0.0
    %4641 = vmatprep.subr.mxu0 0.0
    %4642 = vmatpush1.msra.mxu0 0.0
    %4643 = vmatprep.subr.mxu0 0.0
    %4644 = vmatpush1.msra.mxu0 0.0
    %4645 = vmatprep.subr.mxu0 0.0
    %4646 = vmatpush1.msra.mxu0 0.0
    %4647 = vmatprep.subr.mxu0 0.0
    %4648 = vmatpush1.msra.mxu0 0.0
    %4649 = vmatprep.subr.mxu0 0.0
    %4650 = vmatpush1.msra.mxu0 0.0
    %4651 = vmatprep.subr.mxu0 0.0
    %4652 = vmatpush1.msra.mxu0 0.0
    %4653 = vmatprep.subr.mxu0 0.0
    %4654 = vmatpush1.msra.mxu0 0.0
    %4655 = vmatprep.subr.mxu0 0.0
    %4656 = vmatpush1.msra.mxu0 0.0
    %4657 = vmatprep.subr.mxu0 0.0
    %4658 = vmatpush1.msra.mxu0 0.0
    %4659 = vmatprep.subr.mxu0 0.0
    %4660 = vmatpush1.msra.mxu0 0.0
    %4661 = vmatprep.subr.mxu0 0.0
    %4662 = vmatpush1.msra.mxu0 0.0
    %4663 = vmatprep.mubr.f32.mxu0 0.0
    %4664 = vmatmul.mubr.f32.gmra.mrb[0].mxu0 %v4597
    %v4665 = vpop.f32.mrb[0].mxu0
    %v4666 = vadd.f32 0.0, %v4665
    %v4667 = vpop.f32.mrb[0].mxu0
    %4668 = vdwg.mxu0
    %v4669 = vmax.f32 %v4591, %v4666
    %v4670 = vld [vmem:[%s11] sm:$0xff]
    %v4671 = vld [vmem:[%s11 + $0x8] sm:$0xff]
    %v4672 = vld [vmem:[%s11 + $0x10] sm:$0xff]
    %v4673 = vld [vmem:[%s11 + $0x18] sm:$0xff]
    %v4674 = vld [vmem:[%s11 + $0x20] sm:$0xff]
    %v4675 = vld [vmem:[%s11 + $0x28] sm:$0xff]
    %v4676 = vld [vmem:[%s11 + $0x30] sm:$0xff]
    %v4677 = vld [vmem:[%s11 + $0x38] sm:$0xff]
    %v4678 = vld [vmem:[%s11 + $0x40] sm:$0xff]
    %v4679 = vld [vmem:[%s11 + $0x48] sm:$0xff]
    %v4680 = vld [vmem:[%s11 + $0x50] sm:$0xff]
    %v4681 = vld [vmem:[%s11 + $0x58] sm:$0xff]
    %s4682 = scalar_lea.vmem [#allocation13], 16
    %v4683 = vld [vmem:[%s4682] sm:$0xff]
    %v4685 = vsel %vm2460, %v4683, 0
    %4687 = vmatprep.subr.mxu0 0.0
    %4688 = vmatpush1.msra.mxu0 %v4512
    %4689 = vmatprep.subr.mxu0 0.0
    %4690 = vmatpush1.msra.mxu0 %v4513
    %4691 = vmatprep.subr.mxu0 0.0
    %4692 = vmatpush1.msra.mxu0 %v4514
    %4693 = vmatprep.subr.mxu0 0.0
    %4694 = vmatpush1.msra.mxu0 %v4515
    %4695 = vmatprep.subr.mxu0 0.0
    %4696 = vmatpush1.msra.mxu0 %v4516
    %4697 = vmatprep.subr.mxu0 0.0
    %4698 = vmatpush1.msra.mxu0 %v4517
    %4699 = vmatprep.subr.mxu0 0.0
    %4700 = vmatpush1.msra.mxu0 %v4518
    %4701 = vmatprep.subr.mxu0 0.0
    %4702 = vmatpush1.msra.mxu0 %v4519
    %4703 = vmatprep.subr.mxu0 0.0
    %4704 = vmatpush1.msra.mxu0 0.0
    %4705 = vmatprep.subr.mxu0 0.0
    %4706 = vmatpush1.msra.mxu0 0.0
    %4707 = vmatprep.subr.mxu0 0.0
    %4708 = vmatpush1.msra.mxu0 0.0
    %4709 = vmatprep.subr.mxu0 0.0
    %4710 = vmatpush1.msra.mxu0 0.0
    %4711 = vmatprep.subr.mxu0 0.0
    %4712 = vmatpush1.msra.mxu0 0.0
    %4713 = vmatprep.subr.mxu0 0.0
    %4714 = vmatpush1.msra.mxu0 0.0
    %4715 = vmatprep.subr.mxu0 0.0
    %4716 = vmatpush1.msra.mxu0 0.0
    %4717 = vmatprep.subr.mxu0 0.0
    %4718 = vmatpush1.msra.mxu0 0.0
    %4719 = vmatprep.subr.mxu0 0.0
    %4720 = vmatpush1.msra.mxu0 0.0
    %4721 = vmatprep.subr.mxu0 0.0
    %4722 = vmatpush1.msra.mxu0 0.0
    %4723 = vmatprep.subr.mxu0 0.0
    %4724 = vmatpush1.msra.mxu0 0.0
    %4725 = vmatprep.subr.mxu0 0.0
    %4726 = vmatpush1.msra.mxu0 0.0
    %4727 = vmatprep.subr.mxu0 0.0
    %4728 = vmatpush1.msra.mxu0 0.0
    %4729 = vmatprep.subr.mxu0 0.0
    %4730 = vmatpush1.msra.mxu0 0.0
    %4731 = vmatprep.subr.mxu0 0.0
    %4732 = vmatpush1.msra.mxu0 0.0
    %4733 = vmatprep.subr.mxu0 0.0
    %4734 = vmatpush1.msra.mxu0 0.0
    %4735 = vmatprep.subr.mxu0 0.0
    %4736 = vmatpush1.msra.mxu0 0.0
    %4737 = vmatprep.subr.mxu0 0.0
    %4738 = vmatpush1.msra.mxu0 0.0
    %4739 = vmatprep.subr.mxu0 0.0
    %4740 = vmatpush1.msra.mxu0 0.0
    %4741 = vmatprep.subr.mxu0 0.0
    %4742 = vmatpush1.msra.mxu0 0.0
    %4743 = vmatprep.subr.mxu0 0.0
    %4744 = vmatpush1.msra.mxu0 0.0
    %4745 = vmatprep.subr.mxu0 0.0
    %4746 = vmatpush1.msra.mxu0 0.0
    %4747 = vmatprep.subr.mxu0 0.0
    %4748 = vmatpush1.msra.mxu0 0.0
    %4749 = vmatprep.subr.mxu0 0.0
    %4750 = vmatpush1.msra.mxu0 0.0
    %4751 = vmatprep.mubr.f32.mxu0 0.0
    %4752 = vmatmul.mubr.f32.gmra.mrb[0].mxu0 %v4685
    %v4753 = vpop.f32.mrb[0].mxu0
    %v4754 = vadd.f32 0.0, %v4753
    %v4755 = vpop.f32.mrb[0].mxu0
    %4756 = vdwg.mxu0
    %s4757 = scalar_lea.vmem [#allocation13], 24
    %v4758 = vld [vmem:[%s4757] sm:$0xff]
    %v4760 = vsel %vm2460, %v4758, 0
    %4762 = vmatprep.subr.mxu0 0.0
    %4763 = vmatpush1.msra.mxu0 %v4512
    %4764 = vmatprep.subr.mxu0 0.0
    %4765 = vmatpush1.msra.mxu0 %v4513
    %4766 = vmatprep.subr.mxu0 0.0
    %4767 = vmatpush1.msra.mxu0 %v4514
    %4768 = vmatprep.subr.mxu0 0.0
    %4769 = vmatpush1.msra.mxu0 %v4515
    %4770 = vmatprep.subr.mxu0 0.0
    %4771 = vmatpush1.msra.mxu0 %v4516
    %4772 = vmatprep.subr.mxu0 0.0
    %4773 = vmatpush1.msra.mxu0 %v4517
    %4774 = vmatprep.subr.mxu0 0.0
    %4775 = vmatpush1.msra.mxu0 %v4518
    %4776 = vmatprep.subr.mxu0 0.0
    %4777 = vmatpush1.msra.mxu0 %v4519
    %4778 = vmatprep.subr.mxu0 0.0
    %4779 = vmatpush1.msra.mxu0 0.0
    %4780 = vmatprep.subr.mxu0 0.0
    %4781 = vmatpush1.msra.mxu0 0.0
    %4782 = vmatprep.subr.mxu0 0.0
    %4783 = vmatpush1.msra.mxu0 0.0
    %4784 = vmatprep.subr.mxu0 0.0
    %4785 = vmatpush1.msra.mxu0 0.0
    %4786 = vmatprep.subr.mxu0 0.0
    %4787 = vmatpush1.msra.mxu0 0.0
    %4788 = vmatprep.subr.mxu0 0.0
    %4789 = vmatpush1.msra.mxu0 0.0
    %4790 = vmatprep.subr.mxu0 0.0
    %4791 = vmatpush1.msra.mxu0 0.0
    %4792 = vmatprep.subr.mxu0 0.0
    %4793 = vmatpush1.msra.mxu0 0.0
    %4794 = vmatprep.subr.mxu0 0.0
    %4795 = vmatpush1.msra.mxu0 0.0
    %4796 = vmatprep.subr.mxu0 0.0
    %4797 = vmatpush1.msra.mxu0 0.0
    %4798 = vmatprep.subr.mxu0 0.0
    %4799 = vmatpush1.msra.mxu0 0.0
    %4800 = vmatprep.subr.mxu0 0.0
    %4801 = vmatpush1.msra.mxu0 0.0
    %4802 = vmatprep.subr.mxu0 0.0
    %4803 = vmatpush1.msra.mxu0 0.0
    %4804 = vmatprep.subr.mxu0 0.0
    %4805 = vmatpush1.msra.mxu0 0.0
    %4806 = vmatprep.subr.mxu0 0.0
    %4807 = vmatpush1.msra.mxu0 0.0
    %4808 = vmatprep.subr.mxu0 0.0
    %4809 = vmatpush1.msra.mxu0 0.0
    %4810 = vmatprep.subr.mxu0 0.0
    %4811 = vmatpush1.msra.mxu0 0.0
    %4812 = vmatprep.subr.mxu0 0.0
    %4813 = vmatpush1.msra.mxu0 0.0
    %4814 = vmatprep.subr.mxu0 0.0
    %4815 = vmatpush1.msra.mxu0 0.0
    %4816 = vmatprep.subr.mxu0 0.0
    %4817 = vmatpush1.msra.mxu0 0.0
    %4818 = vmatprep.subr.mxu0 0.0
    %4819 = vmatpush1.msra.mxu0 0.0
    %4820 = vmatprep.subr.mxu0 0.0
    %4821 = vmatpush1.msra.mxu0 0.0
    %4822 = vmatprep.subr.mxu0 0.0
    %4823 = vmatpush1.msra.mxu0 0.0
    %4824 = vmatprep.subr.mxu0 0.0
    %4825 = vmatpush1.msra.mxu0 0.0
    %4826 = vmatprep.mubr.f32.mxu0 0.0
    %4827 = vmatmul.mubr.f32.gmra.mrb[0].mxu0 %v4760
    %v4828 = vpop.f32.mrb[0].mxu0
    %v4829 = vadd.f32 0.0, %v4828
    %v4830 = vpop.f32.mrb[0].mxu0
    %4831 = vdwg.mxu0
    %v4832 = vmax.f32 %v4754, %v4829
    %s4833 = scalar_lea.vmem %s11, 96
    %v4834 = vld [vmem:[%s4833] sm:$0xff]
    %v4835 = vld [vmem:[%s4833 + $0x8] sm:$0xff]
    %v4836 = vld [vmem:[%s4833 + $0x10] sm:$0xff]
    %v4837 = vld [vmem:[%s4833 + $0x18] sm:$0xff]
    %v4838 = vld [vmem:[%s4833 + $0x20] sm:$0xff]
    %v4839 = vld [vmem:[%s4833 + $0x28] sm:$0xff]
    %v4840 = vld [vmem:[%s4833 + $0x30] sm:$0xff]
    %v4841 = vld [vmem:[%s4833 + $0x38] sm:$0xff]
    %v4842 = vld [vmem:[%s4833 + $0x40] sm:$0xff]
    %v4843 = vld [vmem:[%s4833 + $0x48] sm:$0xff]
    %v4844 = vld [vmem:[%s4833 + $0x50] sm:$0xff]
    %v4845 = vld [vmem:[%s4833 + $0x58] sm:$0xff]
    %v4847 = vsel %vm2863, %v4832, 0
    %4849 = vmatprep.subr.mxu0 0.0
    %4850 = vmatpush1.msra.mxu0 %v4834
    %4851 = vmatprep.subr.mxu0 0.0
    %4852 = vmatpush1.msra.mxu0 %v4835
    %4853 = vmatprep.subr.mxu0 0.0
    %4854 = vmatpush1.msra.mxu0 %v4836
    %4855 = vmatprep.subr.mxu0 0.0
    %4856 = vmatpush1.msra.mxu0 %v4837
    %4857 = vmatprep.subr.mxu0 0.0
    %4858 = vmatpush1.msra.mxu0 %v4838
    %4859 = vmatprep.subr.mxu0 0.0
    %4860 = vmatpush1.msra.mxu0 %v4839
    %4861 = vmatprep.subr.mxu0 0.0
    %4862 = vmatpush1.msra.mxu0 %v4840
    %4863 = vmatprep.subr.mxu0 0.0
    %4864 = vmatpush1.msra.mxu0 %v4841
    %4865 = vmatprep.subr.mxu0 0.0
    %4866 = vmatpush1.msra.mxu0 %v4842
    %4867 = vmatprep.subr.mxu0 0.0
    %4868 = vmatpush1.msra.mxu0 %v4843
    %4869 = vmatprep.subr.mxu0 0.0
    %4870 = vmatpush1.msra.mxu0 %v4844
    %4871 = vmatprep.subr.mxu0 0.0
    %4872 = vmatpush1.msra.mxu0 %v4845
    %4873 = vmatprep.subr.mxu0 0.0
    %4874 = vmatpush1.msra.mxu0 0.0
    %4875 = vmatprep.subr.mxu0 0.0
    %4876 = vmatpush1.msra.mxu0 0.0
    %4877 = vmatprep.subr.mxu0 0.0
    %4878 = vmatpush1.msra.mxu0 0.0
    %4879 = vmatprep.subr.mxu0 0.0
    %4880 = vmatpush1.msra.mxu0 0.0
    %4881 = vmatprep.subr.mxu0 0.0
    %4882 = vmatpush1.msra.mxu0 0.0
    %4883 = vmatprep.subr.mxu0 0.0
    %4884 = vmatpush1.msra.mxu0 0.0
    %4885 = vmatprep.subr.mxu0 0.0
    %4886 = vmatpush1.msra.mxu0 0.0
    %4887 = vmatprep.subr.mxu0 0.0
    %4888 = vmatpush1.msra.mxu0 0.0
    %4889 = vmatprep.subr.mxu0 0.0
    %4890 = vmatpush1.msra.mxu0 0.0
    %4891 = vmatprep.subr.mxu0 0.0
    %4892 = vmatpush1.msra.mxu0 0.0
    %4893 = vmatprep.subr.mxu0 0.0
    %4894 = vmatpush1.msra.mxu0 0.0
    %4895 = vmatprep.subr.mxu0 0.0
    %4896 = vmatpush1.msra.mxu0 0.0
    %4897 = vmatprep.subr.mxu0 0.0
    %4898 = vmatpush1.msra.mxu0 0.0
    %4899 = vmatprep.subr.mxu0 0.0
    %4900 = vmatpush1.msra.mxu0 0.0
    %4901 = vmatprep.subr.mxu0 0.0
    %4902 = vmatpush1.msra.mxu0 0.0
    %4903 = vmatprep.subr.mxu0 0.0
    %4904 = vmatpush1.msra.mxu0 0.0
    %4905 = vmatprep.subr.mxu0 0.0
    %4906 = vmatpush1.msra.mxu0 0.0
    %4907 = vmatprep.subr.mxu0 0.0
    %4908 = vmatpush1.msra.mxu0 0.0
    %4909 = vmatprep.subr.mxu0 0.0
    %4910 = vmatpush1.msra.mxu0 0.0
    %4911 = vmatprep.subr.mxu0 0.0
    %4912 = vmatpush1.msra.mxu0 0.0
    %4913 = vmatprep.mubr.f32.mxu0 0.0
    %4914 = vmatmul.mubr.f32.gmra.mrb[0].mxu0 %v4847
    %v4915 = vpop.f32.mrb[0].mxu0
    %v4916 = vadd.f32 0.0, %v4915
    %v4917 = vpop.f32.mrb[0].mxu0
    %4918 = vdwg.mxu0
    %v4920 = vsel %vm2863, %v4669, 0
    %4922 = vmatprep.subr.mxu0 0.0
    %4923 = vmatpush1.msra.mxu0 %v4670
    %4924 = vmatprep.subr.mxu0 0.0
    %4925 = vmatpush1.msra.mxu0 %v4671
    %4926 = vmatprep.subr.mxu0 0.0
    %4927 = vmatpush1.msra.mxu0 %v4672
    %4928 = vmatprep.subr.mxu0 0.0
    %4929 = vmatpush1.msra.mxu0 %v4673
    %4930 = vmatprep.subr.mxu0 0.0
    %4931 = vmatpush1.msra.mxu0 %v4674
    %4932 = vmatprep.subr.mxu0 0.0
    %4933 = vmatpush1.msra.mxu0 %v4675
    %4934 = vmatprep.subr.mxu0 0.0
    %4935 = vmatpush1.msra.mxu0 %v4676
    %4936 = vmatprep.subr.mxu0 0.0
    %4937 = vmatpush1.msra.mxu0 %v4677
    %4938 = vmatprep.subr.mxu0 0.0
    %4939 = vmatpush1.msra.mxu0 %v4678
    %4940 = vmatprep.subr.mxu0 0.0
    %4941 = vmatpush1.msra.mxu0 %v4679
    %4942 = vmatprep.subr.mxu0 0.0
    %4943 = vmatpush1.msra.mxu0 %v4680
    %4944 = vmatprep.subr.mxu0 0.0
    %4945 = vmatpush1.msra.mxu0 %v4681
    %4946 = vmatprep.subr.mxu0 0.0
    %4947 = vmatpush1.msra.mxu0 0.0
    %4948 = vmatprep.subr.mxu0 0.0
    %4949 = vmatpush1.msra.mxu0 0.0
    %4950 = vmatprep.subr.mxu0 0.0
    %4951 = vmatpush1.msra.mxu0 0.0
    %4952 = vmatprep.subr.mxu0 0.0
    %4953 = vmatpush1.msra.mxu0 0.0
    %4954 = vmatprep.subr.mxu0 0.0
    %4955 = vmatpush1.msra.mxu0 0.0
    %4956 = vmatprep.subr.mxu0 0.0
    %4957 = vmatpush1.msra.mxu0 0.0
    %4958 = vmatprep.subr.mxu0 0.0
    %4959 = vmatpush1.msra.mxu0 0.0
    %4960 = vmatprep.subr.mxu0 0.0
    %4961 = vmatpush1.msra.mxu0 0.0
    %4962 = vmatprep.subr.mxu0 0.0
    %4963 = vmatpush1.msra.mxu0 0.0
    %4964 = vmatprep.subr.mxu0 0.0
    %4965 = vmatpush1.msra.mxu0 0.0
    %4966 = vmatprep.subr.mxu0 0.0
    %4967 = vmatpush1.msra.mxu0 0.0
    %4968 = vmatprep.subr.mxu0 0.0
    %4969 = vmatpush1.msra.mxu0 0.0
    %4970 = vmatprep.subr.mxu0 0.0
    %4971 = vmatpush1.msra.mxu0 0.0
    %4972 = vmatprep.subr.mxu0 0.0
    %4973 = vmatpush1.msra.mxu0 0.0
    %4974 = vmatprep.subr.mxu0 0.0
    %4975 = vmatpush1.msra.mxu0 0.0
    %4976 = vmatprep.subr.mxu0 0.0
    %4977 = vmatpush1.msra.mxu0 0.0
    %4978 = vmatprep.subr.mxu0 0.0
    %4979 = vmatpush1.msra.mxu0 0.0
    %4980 = vmatprep.subr.mxu0 0.0
    %4981 = vmatpush1.msra.mxu0 0.0
    %4982 = vmatprep.subr.mxu0 0.0
    %4983 = vmatpush1.msra.mxu0 0.0
    %4984 = vmatprep.subr.mxu0 0.0
    %4985 = vmatpush1.msra.mxu0 0.0
    %4986 = vmatprep.mubr.f32.mxu0 0.0
    %4987 = vmatmul.mubr.f32.gmra.mrb[0].mxu0 %v4920
    %v4988 = vpop.f32.mrb[0].mxu0
    %v4989 = vadd.f32 %v4916, %v4988
    %v4990 = vpop.f32.mrb[0].mxu0
    %4991 = vdwg.mxu0
    %s4992 = scalar_lea.vmem [#allocation13], 32
    %v4993 = vld [vmem:[%s4992] sm:$0xff]
    %v4995 = vsel %vm2460, %v4993, 0
    %4997 = vmatprep.subr.mxu0 0.0
    %4998 = vmatpush1.msra.mxu0 %v4512
    %4999 = vmatprep.subr.mxu0 0.0
    %5000 = vmatpush1.msra.mxu0 %v4513
    %5001 = vmatprep.subr.mxu0 0.0
    %5002 = vmatpush1.msra.mxu0 %v4514
    %5003 = vmatprep.subr.mxu0 0.0
    %5004 = vmatpush1.msra.mxu0 %v4515
    %5005 = vmatprep.subr.mxu0 0.0
    %5006 = vmatpush1.msra.mxu0 %v4516
    %5007 = vmatprep.subr.mxu0 0.0
    %5008 = vmatpush1.msra.mxu0 %v4517
    %5009 = vmatprep.subr.mxu0 0.0
    %5010 = vmatpush1.msra.mxu0 %v4518
    %5011 = vmatprep.subr.mxu0 0.0
    %5012 = vmatpush1.msra.mxu0 %v4519
    %5013 = vmatprep.subr.mxu0 0.0
    %5014 = vmatpush1.msra.mxu0 0.0
    %5015 = vmatprep.subr.mxu0 0.0
    %5016 = vmatpush1.msra.mxu0 0.0
    %5017 = vmatprep.subr.mxu0 0.0
    %5018 = vmatpush1.msra.mxu0 0.0
    %5019 = vmatprep.subr.mxu0 0.0
    %5020 = vmatpush1.msra.mxu0 0.0
    %5021 = vmatprep.subr.mxu0 0.0
    %5022 = vmatpush1.msra.mxu0 0.0
    %5023 = vmatprep.subr.mxu0 0.0
    %5024 = vmatpush1.msra.mxu0 0.0
    %5025 = vmatprep.subr.mxu0 0.0
    %5026 = vmatpush1.msra.mxu0 0.0
    %5027 = vmatprep.subr.mxu0 0.0
    %5028 = vmatpush1.msra.mxu0 0.0
    %5029 = vmatprep.subr.mxu0 0.0
    %5030 = vmatpush1.msra.mxu0 0.0
    %5031 = vmatprep.subr.mxu0 0.0
    %5032 = vmatpush1.msra.mxu0 0.0
    %5033 = vmatprep.subr.mxu0 0.0
    %5034 = vmatpush1.msra.mxu0 0.0
    %5035 = vmatprep.subr.mxu0 0.0
    %5036 = vmatpush1.msra.mxu0 0.0
    %5037 = vmatprep.subr.mxu0 0.0
    %5038 = vmatpush1.msra.mxu0 0.0
    %5039 = vmatprep.subr.mxu0 0.0
    %5040 = vmatpush1.msra.mxu0 0.0
    %5041 = vmatprep.subr.mxu0 0.0
    %5042 = vmatpush1.msra.mxu0 0.0
    %5043 = vmatprep.subr.mxu0 0.0
    %5044 = vmatpush1.msra.mxu0 0.0
    %5045 = vmatprep.subr.mxu0 0.0
    %5046 = vmatpush1.msra.mxu0 0.0
    %5047 = vmatprep.subr.mxu0 0.0
    %5048 = vmatpush1.msra.mxu0 0.0
    %5049 = vmatprep.subr.mxu0 0.0
    %5050 = vmatpush1.msra.mxu0 0.0
    %5051 = vmatprep.subr.mxu0 0.0
    %5052 = vmatpush1.msra.mxu0 0.0
    %5053 = vmatprep.subr.mxu0 0.0
    %5054 = vmatpush1.msra.mxu0 0.0
    %5055 = vmatprep.subr.mxu0 0.0
    %5056 = vmatpush1.msra.mxu0 0.0
    %5057 = vmatprep.subr.mxu0 0.0
    %5058 = vmatpush1.msra.mxu0 0.0
    %5059 = vmatprep.subr.mxu0 0.0
    %5060 = vmatpush1.msra.mxu0 0.0
    %5061 = vmatprep.mubr.f32.mxu0 0.0
    %5062 = vmatmul.mubr.f32.gmra.mrb[0].mxu0 %v4995
    %v5063 = vpop.f32.mrb[0].mxu0
    %v5064 = vadd.f32 0.0, %v5063
    %v5065 = vpop.f32.mrb[0].mxu0
    %5066 = vdwg.mxu0
    %s5067 = scalar_lea.vmem [#allocation13], 40
    %v5068 = vld [vmem:[%s5067] sm:$0xff]
    %v5070 = vsel %vm2460, %v5068, 0
    %5072 = vmatprep.subr.mxu0 0.0
    %5073 = vmatpush1.msra.mxu0 %v4512
    %5074 = vmatprep.subr.mxu0 0.0
    %5075 = vmatpush1.msra.mxu0 %v4513
    %5076 = vmatprep.subr.mxu0 0.0
    %5077 = vmatpush1.msra.mxu0 %v4514
    %5078 = vmatprep.subr.mxu0 0.0
    %5079 = vmatpush1.msra.mxu0 %v4515
    %5080 = vmatprep.subr.mxu0 0.0
    %5081 = vmatpush1.msra.mxu0 %v4516
    %5082 = vmatprep.subr.mxu0 0.0
    %5083 = vmatpush1.msra.mxu0 %v4517
    %5084 = vmatprep.subr.mxu0 0.0
    %5085 = vmatpush1.msra.mxu0 %v4518
    %5086 = vmatprep.subr.mxu0 0.0
    %5087 = vmatpush1.msra.mxu0 %v4519
    %5088 = vmatprep.subr.mxu0 0.0
    %5089 = vmatpush1.msra.mxu0 0.0
    %5090 = vmatprep.subr.mxu0 0.0
    %5091 = vmatpush1.msra.mxu0 0.0
    %5092 = vmatprep.subr.mxu0 0.0
    %5093 = vmatpush1.msra.mxu0 0.0
    %5094 = vmatprep.subr.mxu0 0.0
    %5095 = vmatpush1.msra.mxu0 0.0
    %5096 = vmatprep.subr.mxu0 0.0
    %5097 = vmatpush1.msra.mxu0 0.0
    %5098 = vmatprep.subr.mxu0 0.0
    %5099 = vmatpush1.msra.mxu0 0.0
    %5100 = vmatprep.subr.mxu0 0.0
    %5101 = vmatpush1.msra.mxu0 0.0
    %5102 = vmatprep.subr.mxu0 0.0
    %5103 = vmatpush1.msra.mxu0 0.0
    %5104 = vmatprep.subr.mxu0 0.0
    %5105 = vmatpush1.msra.mxu0 0.0
    %5106 = vmatprep.subr.mxu0 0.0
    %5107 = vmatpush1.msra.mxu0 0.0
    %5108 = vmatprep.subr.mxu0 0.0
    %5109 = vmatpush1.msra.mxu0 0.0
    %5110 = vmatprep.subr.mxu0 0.0
    %5111 = vmatpush1.msra.mxu0 0.0
    %5112 = vmatprep.subr.mxu0 0.0
    %5113 = vmatpush1.msra.mxu0 0.0
    %5114 = vmatprep.subr.mxu0 0.0
    %5115 = vmatpush1.msra.mxu0 0.0
    %5116 = vmatprep.subr.mxu0 0.0
    %5117 = vmatpush1.msra.mxu0 0.0
    %5118 = vmatprep.subr.mxu0 0.0
    %5119 = vmatpush1.msra.mxu0 0.0
    %5120 = vmatprep.subr.mxu0 0.0
    %5121 = vmatpush1.msra.mxu0 0.0
    %5122 = vmatprep.subr.mxu0 0.0
    %5123 = vmatpush1.msra.mxu0 0.0
    %5124 = vmatprep.subr.mxu0 0.0
    %5125 = vmatpush1.msra.mxu0 0.0
    %5126 = vmatprep.subr.mxu0 0.0
    %5127 = vmatpush1.msra.mxu0 0.0
    %5128 = vmatprep.subr.mxu0 0.0
    %5129 = vmatpush1.msra.mxu0 0.0
    %5130 = vmatprep.subr.mxu0 0.0
    %5131 = vmatpush1.msra.mxu0 0.0
    %5132 = vmatprep.subr.mxu0 0.0
    %5133 = vmatpush1.msra.mxu0 0.0
    %5134 = vmatprep.subr.mxu0 0.0
    %5135 = vmatpush1.msra.mxu0 0.0
    %5136 = vmatprep.mubr.f32.mxu0 0.0
    %5137 = vmatmul.mubr.f32.gmra.mrb[0].mxu0 %v5070
    %v5138 = vpop.f32.mrb[0].mxu0
    %v5139 = vadd.f32 0.0, %v5138
    %v5140 = vpop.f32.mrb[0].mxu0
    %5141 = vdwg.mxu0
    %v5142 = vmax.f32 %v5064, %v5139
    %s5143 = scalar_lea.vmem %s11, 192
    %v5144 = vld [vmem:[%s5143] sm:$0xff]
    %v5145 = vld [vmem:[%s5143 + $0x8] sm:$0xff]
    %v5146 = vld [vmem:[%s5143 + $0x10] sm:$0xff]
    %v5147 = vld [vmem:[%s5143 + $0x18] sm:$0xff]
    %v5148 = vld [vmem:[%s5143 + $0x20] sm:$0xff]
    %v5149 = vld [vmem:[%s5143 + $0x28] sm:$0xff]
    %v5150 = vld [vmem:[%s5143 + $0x30] sm:$0xff]
    %v5151 = vld [vmem:[%s5143 + $0x38] sm:$0xff]
    %v5152 = vld [vmem:[%s5143 + $0x40] sm:$0xff]
    %v5153 = vld [vmem:[%s5143 + $0x48] sm:$0xff]
    %v5154 = vld [vmem:[%s5143 + $0x50] sm:$0xff]
    %v5155 = vld [vmem:[%s5143 + $0x58] sm:$0xff]
    %v5157 = vsel %vm2863, %v5142, 0
    %5159 = vmatprep.subr.mxu0 0.0
    %5160 = vmatpush1.msra.mxu0 %v5144
    %5161 = vmatprep.subr.mxu0 0.0
    %5162 = vmatpush1.msra.mxu0 %v5145
    %5163 = vmatprep.subr.mxu0 0.0
    %5164 = vmatpush1.msra.mxu0 %v5146
    %5165 = vmatprep.subr.mxu0 0.0
    %5166 = vmatpush1.msra.mxu0 %v5147
    %5167 = vmatprep.subr.mxu0 0.0
    %5168 = vmatpush1.msra.mxu0 %v5148
    %5169 = vmatprep.subr.mxu0 0.0
    %5170 = vmatpush1.msra.mxu0 %v5149
    %5171 = vmatprep.subr.mxu0 0.0
    %5172 = vmatpush1.msra.mxu0 %v5150
    %5173 = vmatprep.subr.mxu0 0.0
    %5174 = vmatpush1.msra.mxu0 %v5151
    %5175 = vmatprep.subr.mxu0 0.0
    %5176 = vmatpush1.msra.mxu0 %v5152
    %5177 = vmatprep.subr.mxu0 0.0
    %5178 = vmatpush1.msra.mxu0 %v5153
    %5179 = vmatprep.subr.mxu0 0.0
    %5180 = vmatpush1.msra.mxu0 %v5154
    %5181 = vmatprep.subr.mxu0 0.0
    %5182 = vmatpush1.msra.mxu0 %v5155
    %5183 = vmatprep.subr.mxu0 0.0
    %5184 = vmatpush1.msra.mxu0 0.0
    %5185 = vmatprep.subr.mxu0 0.0
    %5186 = vmatpush1.msra.mxu0 0.0
    %5187 = vmatprep.subr.mxu0 0.0
    %5188 = vmatpush1.msra.mxu0 0.0
    %5189 = vmatprep.subr.mxu0 0.0
    %5190 = vmatpush1.msra.mxu0 0.0
    %5191 = vmatprep.subr.mxu0 0.0
    %5192 = vmatpush1.msra.mxu0 0.0
    %5193 = vmatprep.subr.mxu0 0.0
    %5194 = vmatpush1.msra.mxu0 0.0
    %5195 = vmatprep.subr.mxu0 0.0
    %5196 = vmatpush1.msra.mxu0 0.0
    %5197 = vmatprep.subr.mxu0 0.0
    %5198 = vmatpush1.msra.mxu0 0.0
    %5199 = vmatprep.subr.mxu0 0.0
    %5200 = vmatpush1.msra.mxu0 0.0
    %5201 = vmatprep.subr.mxu0 0.0
    %5202 = vmatpush1.msra.mxu0 0.0
    %5203 = vmatprep.subr.mxu0 0.0
    %5204 = vmatpush1.msra.mxu0 0.0
    %5205 = vmatprep.subr.mxu0 0.0
    %5206 = vmatpush1.msra.mxu0 0.0
    %5207 = vmatprep.subr.mxu0 0.0
    %5208 = vmatpush1.msra.mxu0 0.0
    %5209 = vmatprep.subr.mxu0 0.0
    %5210 = vmatpush1.msra.mxu0 0.0
    %5211 = vmatprep.subr.mxu0 0.0
    %5212 = vmatpush1.msra.mxu0 0.0
    %5213 = vmatprep.subr.mxu0 0.0
    %5214 = vmatpush1.msra.mxu0 0.0
    %5215 = vmatprep.subr.mxu0 0.0
    %5216 = vmatpush1.msra.mxu0 0.0
    %5217 = vmatprep.subr.mxu0 0.0
    %5218 = vmatpush1.msra.mxu0 0.0
    %5219 = vmatprep.subr.mxu0 0.0
    %5220 = vmatpush1.msra.mxu0 0.0
    %5221 = vmatprep.subr.mxu0 0.0
    %5222 = vmatpush1.msra.mxu0 0.0
    %5223 = vmatprep.mubr.f32.mxu0 0.0
    %5224 = vmatmul.mubr.f32.gmra.mrb[0].mxu0 %v5157
    %v5225 = vpop.f32.mrb[0].mxu0
    %v5226 = vadd.f32 0.0, %v5225
    %v5227 = vpop.f32.mrb[0].mxu0
    %5228 = vdwg.mxu0
    %v5229 = vadd.f32 %v4989, %v5226
    %s5230 = scalar_lea.vmem [#allocation13], 48
    %v5231 = vld [vmem:[%s5230] sm:$0xff]
    %v5233 = vsel %vm2460, %v5231, 0
    %5235 = vmatprep.subr.mxu0 0.0
    %5236 = vmatpush1.msra.mxu0 %v4512
    %5237 = vmatprep.subr.mxu0 0.0
    %5238 = vmatpush1.msra.mxu0 %v4513
    %5239 = vmatprep.subr.mxu0 0.0
    %5240 = vmatpush1.msra.mxu0 %v4514
    %5241 = vmatprep.subr.mxu0 0.0
    %5242 = vmatpush1.msra.mxu0 %v4515
    %5243 = vmatprep.subr.mxu0 0.0
    %5244 = vmatpush1.msra.mxu0 %v4516
    %5245 = vmatprep.subr.mxu0 0.0
    %5246 = vmatpush1.msra.mxu0 %v4517
    %5247 = vmatprep.subr.mxu0 0.0
    %5248 = vmatpush1.msra.mxu0 %v4518
    %5249 = vmatprep.subr.mxu0 0.0
    %5250 = vmatpush1.msra.mxu0 %v4519
    %5251 = vmatprep.subr.mxu0 0.0
    %5252 = vmatpush1.msra.mxu0 0.0
    %5253 = vmatprep.subr.mxu0 0.0
    %5254 = vmatpush1.msra.mxu0 0.0
    %5255 = vmatprep.subr.mxu0 0.0
    %5256 = vmatpush1.msra.mxu0 0.0
    %5257 = vmatprep.subr.mxu0 0.0
    %5258 = vmatpush1.msra.mxu0 0.0
    %5259 = vmatprep.subr.mxu0 0.0
    %5260 = vmatpush1.msra.mxu0 0.0
    %5261 = vmatprep.subr.mxu0 0.0
    %5262 = vmatpush1.msra.mxu0 0.0
    %5263 = vmatprep.subr.mxu0 0.0
    %5264 = vmatpush1.msra.mxu0 0.0
    %5265 = vmatprep.subr.mxu0 0.0
    %5266 = vmatpush1.msra.mxu0 0.0
    %5267 = vmatprep.subr.mxu0 0.0
    %5268 = vmatpush1.msra.mxu0 0.0
    %5269 = vmatprep.subr.mxu0 0.0
    %5270 = vmatpush1.msra.mxu0 0.0
    %5271 = vmatprep.subr.mxu0 0.0
    %5272 = vmatpush1.msra.mxu0 0.0
    %5273 = vmatprep.subr.mxu0 0.0
    %5274 = vmatpush1.msra.mxu0 0.0
    %5275 = vmatprep.subr.mxu0 0.0
    %5276 = vmatpush1.msra.mxu0 0.0
    %5277 = vmatprep.subr.mxu0 0.0
    %5278 = vmatpush1.msra.mxu0 0.0
    %5279 = vmatprep.subr.mxu0 0.0
    %5280 = vmatpush1.msra.mxu0 0.0
    %5281 = vmatprep.subr.mxu0 0.0
    %5282 = vmatpush1.msra.mxu0 0.0
    %5283 = vmatprep.subr.mxu0 0.0
    %5284 = vmatpush1.msra.mxu0 0.0
    %5285 = vmatprep.subr.mxu0 0.0
    %5286 = vmatpush1.msra.mxu0 0.0
    %5287 = vmatprep.subr.mxu0 0.0
    %5288 = vmatpush1.msra.mxu0 0.0
    %5289 = vmatprep.subr.mxu0 0.0
    %5290 = vmatpush1.msra.mxu0 0.0
    %5291 = vmatprep.subr.mxu0 0.0
    %5292 = vmatpush1.msra.mxu0 0.0
    %5293 = vmatprep.subr.mxu0 0.0
    %5294 = vmatpush1.msra.mxu0 0.0
    %5295 = vmatprep.subr.mxu0 0.0
    %5296 = vmatpush1.msra.mxu0 0.0
    %5297 = vmatprep.subr.mxu0 0.0
    %5298 = vmatpush1.msra.mxu0 0.0
    %5299 = vmatprep.mubr.f32.mxu0 0.0
    %5300 = vmatmul.mubr.f32.gmra.mrb[0].mxu0 %v5233
    %v5301 = vpop.f32.mrb[0].mxu0
    %v5302 = vadd.f32 0.0, %v5301
    %v5303 = vpop.f32.mrb[0].mxu0
    %5304 = vdwg.mxu0
    %s5305 = scalar_lea.vmem [#allocation13], 56
    %v5306 = vld [vmem:[%s5305] sm:$0xff]
    %v5308 = vsel %vm2460, %v5306, 0
    %5310 = vmatprep.subr.mxu0 0.0
    %5311 = vmatpush1.msra.mxu0 %v4512
    %5312 = vmatprep.subr.mxu0 0.0
    %5313 = vmatpush1.msra.mxu0 %v4513
    %5314 = vmatprep.subr.mxu0 0.0
    %5315 = vmatpush1.msra.mxu0 %v4514
    %5316 = vmatprep.subr.mxu0 0.0
    %5317 = vmatpush1.msra.mxu0 %v4515
    %5318 = vmatprep.subr.mxu0 0.0
    %5319 = vmatpush1.msra.mxu0 %v4516
    %5320 = vmatprep.subr.mxu0 0.0
    %5321 = vmatpush1.msra.mxu0 %v4517
    %5322 = vmatprep.subr.mxu0 0.0
    %5323 = vmatpush1.msra.mxu0 %v4518
    %5324 = vmatprep.subr.mxu0 0.0
    %5325 = vmatpush1.msra.mxu0 %v4519
    %5326 = vmatprep.subr.mxu0 0.0
    %5327 = vmatpush1.msra.mxu0 0.0
    %5328 = vmatprep.subr.mxu0 0.0
    %5329 = vmatpush1.msra.mxu0 0.0
    %5330 = vmatprep.subr.mxu0 0.0
    %5331 = vmatpush1.msra.mxu0 0.0
    %5332 = vmatprep.subr.mxu0 0.0
    %5333 = vmatpush1.msra.mxu0 0.0
    %5334 = vmatprep.subr.mxu0 0.0
    %5335 = vmatpush1.msra.mxu0 0.0
    %5336 = vmatprep.subr.mxu0 0.0
    %5337 = vmatpush1.msra.mxu0 0.0
    %5338 = vmatprep.subr.mxu0 0.0
    %5339 = vmatpush1.msra.mxu0 0.0
    %5340 = vmatprep.subr.mxu0 0.0
    %5341 = vmatpush1.msra.mxu0 0.0
    %5342 = vmatprep.subr.mxu0 0.0
    %5343 = vmatpush1.msra.mxu0 0.0
    %5344 = vmatprep.subr.mxu0 0.0
    %5345 = vmatpush1.msra.mxu0 0.0
    %5346 = vmatprep.subr.mxu0 0.0
    %5347 = vmatpush1.msra.mxu0 0.0
    %5348 = vmatprep.subr.mxu0 0.0
    %5349 = vmatpush1.msra.mxu0 0.0
    %5350 = vmatprep.subr.mxu0 0.0
    %5351 = vmatpush1.msra.mxu0 0.0
    %5352 = vmatprep.subr.mxu0 0.0
    %5353 = vmatpush1.msra.mxu0 0.0
    %5354 = vmatprep.subr.mxu0 0.0
    %5355 = vmatpush1.msra.mxu0 0.0
    %5356 = vmatprep.subr.mxu0 0.0
    %5357 = vmatpush1.msra.mxu0 0.0
    %5358 = vmatprep.subr.mxu0 0.0
    %5359 = vmatpush1.msra.mxu0 0.0
    %5360 = vmatprep.subr.mxu0 0.0
    %5361 = vmatpush1.msra.mxu0 0.0
    %5362 = vmatprep.subr.mxu0 0.0
    %5363 = vmatpush1.msra.mxu0 0.0
    %5364 = vmatprep.subr.mxu0 0.0
    %5365 = vmatpush1.msra.mxu0 0.0
    %5366 = vmatprep.subr.mxu0 0.0
    %5367 = vmatpush1.msra.mxu0 0.0
    %5368 = vmatprep.subr.mxu0 0.0
    %5369 = vmatpush1.msra.mxu0 0.0
    %5370 = vmatprep.subr.mxu0 0.0
    %5371 = vmatpush1.msra.mxu0 0.0
    %5372 = vmatprep.subr.mxu0 0.0
    %5373 = vmatpush1.msra.mxu0 0.0
    %5374 = vmatprep.mubr.f32.mxu0 0.0
    %5375 = vmatmul.mubr.f32.gmra.mrb[0].mxu0 %v5308
    %v5376 = vpop.f32.mrb[0].mxu0
    %v5377 = vadd.f32 0.0, %v5376
    %v5378 = vpop.f32.mrb[0].mxu0
    %5379 = vdwg.mxu0
    %v5380 = vmax.f32 %v5302, %v5377
    %s5381 = scalar_lea.vmem %s11, 288
    %v5382 = vld [vmem:[%s5381] sm:$0xff]
    %v5383 = vld [vmem:[%s5381 + $0x8] sm:$0xff]
    %v5384 = vld [vmem:[%s5381 + $0x10] sm:$0xff]
    %v5385 = vld [vmem:[%s5381 + $0x18] sm:$0xff]
    %v5386 = vld [vmem:[%s5381 + $0x20] sm:$0xff]
    %v5387 = vld [vmem:[%s5381 + $0x28] sm:$0xff]
    %v5388 = vld [vmem:[%s5381 + $0x30] sm:$0xff]
    %v5389 = vld [vmem:[%s5381 + $0x38] sm:$0xff]
    %v5390 = vld [vmem:[%s5381 + $0x40] sm:$0xff]
    %v5391 = vld [vmem:[%s5381 + $0x48] sm:$0xff]
    %v5392 = vld [vmem:[%s5381 + $0x50] sm:$0xff]
    %v5393 = vld [vmem:[%s5381 + $0x58] sm:$0xff]
    %v5395 = vsel %vm2863, %v5380, 0
    %5397 = vmatprep.subr.mxu0 0.0
    %5398 = vmatpush1.msra.mxu0 %v5382
    %5399 = vmatprep.subr.mxu0 0.0
    %5400 = vmatpush1.msra.mxu0 %v5383
    %5401 = vmatprep.subr.mxu0 0.0
    %5402 = vmatpush1.msra.mxu0 %v5384
    %5403 = vmatprep.subr.mxu0 0.0
    %5404 = vmatpush1.msra.mxu0 %v5385
    %5405 = vmatprep.subr.mxu0 0.0
    %5406 = vmatpush1.msra.mxu0 %v5386
    %5407 = vmatprep.subr.mxu0 0.0
    %5408 = vmatpush1.msra.mxu0 %v5387
    %5409 = vmatprep.subr.mxu0 0.0
    %5410 = vmatpush1.msra.mxu0 %v5388
    %5411 = vmatprep.subr.mxu0 0.0
    %5412 = vmatpush1.msra.mxu0 %v5389
    %5413 = vmatprep.subr.mxu0 0.0
    %5414 = vmatpush1.msra.mxu0 %v5390
    %5415 = vmatprep.subr.mxu0 0.0
    %5416 = vmatpush1.msra.mxu0 %v5391
    %5417 = vmatprep.subr.mxu0 0.0
    %5418 = vmatpush1.msra.mxu0 %v5392
    %5419 = vmatprep.subr.mxu0 0.0
    %5420 = vmatpush1.msra.mxu0 %v5393
    %5421 = vmatprep.subr.mxu0 0.0
    %5422 = vmatpush1.msra.mxu0 0.0
    %5423 = vmatprep.subr.mxu0 0.0
    %5424 = vmatpush1.msra.mxu0 0.0
    %5425 = vmatprep.subr.mxu0 0.0
    %5426 = vmatpush1.msra.mxu0 0.0
    %5427 = vmatprep.subr.mxu0 0.0
    %5428 = vmatpush1.msra.mxu0 0.0
    %5429 = vmatprep.subr.mxu0 0.0
    %5430 = vmatpush1.msra.mxu0 0.0
    %5431 = vmatprep.subr.mxu0 0.0
    %5432 = vmatpush1.msra.mxu0 0.0
    %5433 = vmatprep.subr.mxu0 0.0
    %5434 = vmatpush1.msra.mxu0 0.0
    %5435 = vmatprep.subr.mxu0 0.0
    %5436 = vmatpush1.msra.mxu0 0.0
    %5437 = vmatprep.subr.mxu0 0.0
    %5438 = vmatpush1.msra.mxu0 0.0
    %5439 = vmatprep.subr.mxu0 0.0
    %5440 = vmatpush1.msra.mxu0 0.0
    %5441 = vmatprep.subr.mxu0 0.0
    %5442 = vmatpush1.msra.mxu0 0.0
    %5443 = vmatprep.subr.mxu0 0.0
    %5444 = vmatpush1.msra.mxu0 0.0
    %5445 = vmatprep.subr.mxu0 0.0
    %5446 = vmatpush1.msra.mxu0 0.0
    %5447 = vmatprep.subr.mxu0 0.0
    %5448 = vmatpush1.msra.mxu0 0.0
    %5449 = vmatprep.subr.mxu0 0.0
    %5450 = vmatpush1.msra.mxu0 0.0
    %5451 = vmatprep.subr.mxu0 0.0
    %5452 = vmatpush1.msra.mxu0 0.0
    %5453 = vmatprep.subr.mxu0 0.0
    %5454 = vmatpush1.msra.mxu0 0.0
    %5455 = vmatprep.subr.mxu0 0.0
    %5456 = vmatpush1.msra.mxu0 0.0
    %5457 = vmatprep.subr.mxu0 0.0
    %5458 = vmatpush1.msra.mxu0 0.0
    %5459 = vmatprep.subr.mxu0 0.0
    %5460 = vmatpush1.msra.mxu0 0.0
    %5461 = vmatprep.mubr.f32.mxu0 0.0
    %5462 = vmatmul.mubr.f32.gmra.mrb[0].mxu0 %v5395
    %v5463 = vpop.f32.mrb[0].mxu0
    %v5464 = vadd.f32 0.0, %v5463
    %v5465 = vpop.f32.mrb[0].mxu0
    %5466 = vdwg.mxu0
    %v5467 = vadd.f32 %v5229, %v5464
    %v5468 = vld [vmem:[%s12] sm:$0x1]
    %v5470 = vlaneseq
    %v5471 = vshrl.u32 %v5470, 7
    %v5472 = vsub.s32 0, %v5471
    %v5473 = vrot.slane %v5468, %v5472
    %v5475 = vadd.f32 %v5467, %v5473
    %v5476 = vmax.f32 %v5475, 0.0
    %v5477 = vld [vmem:[%s13] sm:$0xff]
    %v5478 = vld [vmem:[%s13 + $0x8] sm:$0xff]
    %v5479 = vld [vmem:[%s13 + $0x10] sm:$0xff]
    %v5480 = vld [vmem:[%s13 + $0x18] sm:$0xff]
    %v5481 = vld [vmem:[%s13 + $0x20] sm:$0xff]
    %v5482 = vld [vmem:[%s13 + $0x28] sm:$0xff]
    %v5483 = vld [vmem:[%s13 + $0x30] sm:$0xff]
    %v5484 = vld [vmem:[%s13 + $0x38] sm:$0xff]
    %v5485 = vld [vmem:[%s13 + $0x40] sm:$0xff]
    %v5486 = vld [vmem:[%s13 + $0x48] sm:$0xff]
    %v5487 = vld [vmem:[%s13 + $0x50] sm:$0xff]
    %v5488 = vld [vmem:[%s13 + $0x58] sm:$0xff]
    %v5489 = vld [vmem:[%s13 + $0x60] sm:$0xff]
    %v5490 = vld [vmem:[%s13 + $0x68] sm:$0xff]
    %v5491 = vld [vmem:[%s13 + $0x70] sm:$0xff]
    %v5492 = vld [vmem:[%s13 + $0x78] sm:$0xff]
    %v5493 = vld [vmem:[%s14] sm:$0x1]
    %v5495 = vlaneseq
    %v5496 = vshrl.u32 %v5495, 7
    %v5497 = vsub.s32 0, %v5496
    %v5498 = vrot.slane %v5493, %v5497
    %5500 = vmatprep.subr.mxu0 0.0
    %5501 = vmatpush1.msra.mxu0 %v5477
    %5502 = vmatprep.subr.mxu0 0.0
    %5503 = vmatpush1.msra.mxu0 %v5478
    %5504 = vmatprep.subr.mxu0 0.0
    %5505 = vmatpush1.msra.mxu0 %v5479
    %5506 = vmatprep.subr.mxu0 0.0
    %5507 = vmatpush1.msra.mxu0 %v5480
    %5508 = vmatprep.subr.mxu0 0.0
    %5509 = vmatpush1.msra.mxu0 %v5481
    %5510 = vmatprep.subr.mxu0 0.0
    %5511 = vmatpush1.msra.mxu0 %v5482
    %5512 = vmatprep.subr.mxu0 0.0
    %5513 = vmatpush1.msra.mxu0 %v5483
    %5514 = vmatprep.subr.mxu0 0.0
    %5515 = vmatpush1.msra.mxu0 %v5484
    %5516 = vmatprep.subr.mxu0 0.0
    %5517 = vmatpush1.msra.mxu0 %v5485
    %5518 = vmatprep.subr.mxu0 0.0
    %5519 = vmatpush1.msra.mxu0 %v5486
    %5520 = vmatprep.subr.mxu0 0.0
    %5521 = vmatpush1.msra.mxu0 %v5487
    %5522 = vmatprep.subr.mxu0 0.0
    %5523 = vmatpush1.msra.mxu0 %v5488
    %5524 = vmatprep.subr.mxu0 0.0
    %5525 = vmatpush1.msra.mxu0 %v5489
    %5526 = vmatprep.subr.mxu0 0.0
    %5527 = vmatpush1.msra.mxu0 %v5490
    %5528 = vmatprep.subr.mxu0 0.0
    %5529 = vmatpush1.msra.mxu0 %v5491
    %5530 = vmatprep.subr.mxu0 0.0
    %5531 = vmatpush1.msra.mxu0 %v5492
    %5532 = vmatprep.subr.mxu0 0.0
    %5533 = vmatpush1.msra.mxu0 0.0
    %5534 = vmatprep.subr.mxu0 0.0
    %5535 = vmatpush1.msra.mxu0 0.0
    %5536 = vmatprep.subr.mxu0 0.0
    %5537 = vmatpush1.msra.mxu0 0.0
    %5538 = vmatprep.subr.mxu0 0.0
    %5539 = vmatpush1.msra.mxu0 0.0
    %5540 = vmatprep.subr.mxu0 0.0
    %5541 = vmatpush1.msra.mxu0 0.0
    %5542 = vmatprep.subr.mxu0 0.0
    %5543 = vmatpush1.msra.mxu0 0.0
    %5544 = vmatprep.subr.mxu0 0.0
    %5545 = vmatpush1.msra.mxu0 0.0
    %5546 = vmatprep.subr.mxu0 0.0
    %5547 = vmatpush1.msra.mxu0 0.0
    %5548 = vmatprep.subr.mxu0 0.0
    %5549 = vmatpush1.msra.mxu0 0.0
    %5550 = vmatprep.subr.mxu0 0.0
    %5551 = vmatpush1.msra.mxu0 0.0
    %5552 = vmatprep.subr.mxu0 0.0
    %5553 = vmatpush1.msra.mxu0 0.0
    %5554 = vmatprep.subr.mxu0 0.0
    %5555 = vmatpush1.msra.mxu0 0.0
    %5556 = vmatprep.subr.mxu0 0.0
    %5557 = vmatpush1.msra.mxu0 0.0
    %5558 = vmatprep.subr.mxu0 0.0
    %5559 = vmatpush1.msra.mxu0 0.0
    %5560 = vmatprep.subr.mxu0 0.0
    %5561 = vmatpush1.msra.mxu0 0.0
    %5562 = vmatprep.subr.mxu0 0.0
    %5563 = vmatpush1.msra.mxu0 0.0
    %5564 = vmatprep.mubr.f32.mxu0 0.0
    %5565 = vmatmul.mubr.f32.gmra.mrb[0].mxu0 %v5476
    %v5566 = vpop.f32.mrb[0].mxu0
    %v5567 = vadd.f32 %v5498, %v5566
    %v5568 = vpop.f32.mrb[0].mxu0
    %5569 = vdwg.mxu0
    %v5570 = vmax.f32 %v5567, 0.0
    %v5571 = vld [vmem:[#allocation14] sm:$0xff]
    %v5572 = vld [vmem:[#allocation14 + $0x8] sm:$0xff]
    %v5573 = vld [vmem:[#allocation14 + $0x10] sm:$0xff]
    %v5574 = vld [vmem:[#allocation14 + $0x18] sm:$0xff]
    %v5575 = vld [vmem:[#allocation14 + $0x20] sm:$0xff]
    %v5576 = vld [vmem:[#allocation14 + $0x28] sm:$0xff]
    %v5577 = vld [vmem:[#allocation14 + $0x30] sm:$0xff]
    %v5578 = vld [vmem:[#allocation14 + $0x38] sm:$0xff]
    %v5579 = vld [vmem:[%s16] sm:$0x1]
    %v5581 = vlaneseq
    %v5582 = vshrl.u32 %v5581, 7
    %v5583 = vsub.s32 0, %v5582
    %v5584 = vrot.slane %v5579, %v5583
    %v5587 = vsel %vm2460, %v5570, 0
    %5589 = vmatprep.subr.mxu0 0.0
    %5590 = vmatpush1.msra.mxu0 %v5571
    %5591 = vmatprep.subr.mxu0 0.0
    %5592 = vmatpush1.msra.mxu0 %v5572
    %5593 = vmatprep.subr.mxu0 0.0
    %5594 = vmatpush1.msra.mxu0 %v5573
    %5595 = vmatprep.subr.mxu0 0.0
    %5596 = vmatpush1.msra.mxu0 %v5574
    %5597 = vmatprep.subr.mxu0 0.0
    %5598 = vmatpush1.msra.mxu0 %v5575
    %5599 = vmatprep.subr.mxu0 0.0
    %5600 = vmatpush1.msra.mxu0 %v5576
    %5601 = vmatprep.subr.mxu0 0.0
    %5602 = vmatpush1.msra.mxu0 %v5577
    %5603 = vmatprep.subr.mxu0 0.0
    %5604 = vmatpush1.msra.mxu0 %v5578
    %5605 = vmatprep.subr.mxu0 0.0
    %5606 = vmatpush1.msra.mxu0 0.0
    %5607 = vmatprep.subr.mxu0 0.0
    %5608 = vmatpush1.msra.mxu0 0.0
    %5609 = vmatprep.subr.mxu0 0.0
    %5610 = vmatpush1.msra.mxu0 0.0
    %5611 = vmatprep.subr.mxu0 0.0
    %5612 = vmatpush1.msra.mxu0 0.0
    %5613 = vmatprep.subr.mxu0 0.0
    %5614 = vmatpush1.msra.mxu0 0.0
    %5615 = vmatprep.subr.mxu0 0.0
    %5616 = vmatpush1.msra.mxu0 0.0
    %5617 = vmatprep.subr.mxu0 0.0
    %5618 = vmatpush1.msra.mxu0 0.0
    %5619 = vmatprep.subr.mxu0 0.0
    %5620 = vmatpush1.msra.mxu0 0.0
    %5621 = vmatprep.subr.mxu0 0.0
    %5622 = vmatpush1.msra.mxu0 0.0
    %5623 = vmatprep.subr.mxu0 0.0
    %5624 = vmatpush1.msra.mxu0 0.0
    %5625 = vmatprep.subr.mxu0 0.0
    %5626 = vmatpush1.msra.mxu0 0.0
    %5627 = vmatprep.subr.mxu0 0.0
    %5628 = vmatpush1.msra.mxu0 0.0
    %5629 = vmatprep.subr.mxu0 0.0
    %5630 = vmatpush1.msra.mxu0 0.0
    %5631 = vmatprep.subr.mxu0 0.0
    %5632 = vmatpush1.msra.mxu0 0.0
    %5633 = vmatprep.subr.mxu0 0.0
    %5634 = vmatpush1.msra.mxu0 0.0
    %5635 = vmatprep.subr.mxu0 0.0
    %5636 = vmatpush1.msra.mxu0 0.0
    %5637 = vmatprep.subr.mxu0 0.0
    %5638 = vmatpush1.msra.mxu0 0.0
    %5639 = vmatprep.subr.mxu0 0.0
    %5640 = vmatpush1.msra.mxu0 0.0
    %5641 = vmatprep.subr.mxu0 0.0
    %5642 = vmatpush1.msra.mxu0 0.0
    %5643 = vmatprep.subr.mxu0 0.0
    %5644 = vmatpush1.msra.mxu0 0.0
    %5645 = vmatprep.subr.mxu0 0.0
    %5646 = vmatpush1.msra.mxu0 0.0
    %5647 = vmatprep.subr.mxu0 0.0
    %5648 = vmatpush1.msra.mxu0 0.0
    %5649 = vmatprep.subr.mxu0 0.0
    %5650 = vmatpush1.msra.mxu0 0.0
    %5651 = vmatprep.subr.mxu0 0.0
    %5652 = vmatpush1.msra.mxu0 0.0
    %5653 = vmatprep.mubr.f32.mxu0 0.0
    %5654 = vmatmul.mubr.f32.gmra.mrb[0].mxu0 %v5587
    %v5655 = vpop.f32.mrb[0].mxu0
    %v5656 = vadd.f32 %v5584, %v5655
    %v5657 = vpop.f32.mrb[0].mxu0
    %5658 = vdwg.mxu0
    %5659 = vst [vmem:[#allocation16] sm:$0xff] %v5656
    // Predicated region
    $region102: #{tpu_custom_call.1} parent=1 // pred_check
      _
    $region103: #{tpu_custom_call.1} parent=1 // pred_check_branch
      %5661 = sbr.rel (0) target = $region105
    $region104: #{tpu_custom_call.1} parent=1 // pred_region
      %s5663 = ssub.s32 128, 128
      %5664 = vsyncadd [#allocation4], %s5663
      %s5666 = sshll.u32 [#allocation16], 4
      %s5667 = int_to_ptr.vmem [resolvable:$true] %s5666
      %5669 = dma.vmem_to_hbm [thread:$0]  %s5667, 128, %s17, [#allocation4]
    $region105: #{tpu_custom_call.1} parent=1 // pred_fallthru
      _
    // Predicated region
    $region106: #{tpu_custom_call.1} parent=1 // pred_check
      _
    $region107: #{tpu_custom_call.1} parent=1 // pred_check_branch
      %5671 = sbr.rel (0) target = $region109
    $region108: #{tpu_custom_call.1} parent=1 // pred_region
      %5672 = dma.done [#allocation4], 128
    $region109: #{tpu_custom_call.1} parent=1 // pred_fallthru
      _
    %5673 = vsyncpa [#allocation3], 1
    %5674 = vsyncpa [#allocation6], 1
    %5675 = vsyncpa [#allocation9], 1
    %5676 = vsyncpa [#allocation12], 1
    %5677 = vsyncpa [#allocation15], 1
    %5678 = vsyncpa [#allocation4], 1

</llo_original>
